<compile_context>
chip_gen: v6e
topology: v6e:2x2x1
jax: 0.10.0
libtpu: 0.0.40
codegen_flags: <defaults>
</compile_context>

<pallas_src>
import math

import jax
import jax.numpy as jnp
from jax.experimental import pallas as pl
from jax.experimental.pallas import tpu as pltpu


# ----------------------------------------------------------------------------
# Single fused kernel: whole (T x L) LSTM recurrence + classifier head.
# ----------------------------------------------------------------------------
def _make_fused_kernel(debug):
    """debug=True additionally emits (y_seq, hT, cT) for verification only."""

    def kernel(x_ref, w_ref, b_ref, wcls_ref, bcls_ref, *rest):
        if debug:
            logits_ref, y_ref, hT_ref, cT_ref, h_sc, c_sc, xh_sc = rest
        else:
            logits_ref, h_sc, c_sc, xh_sc = rest
            y_ref = hT_ref = cT_ref = None

        T, B, C = x_ref.shape
        L = h_sc.shape[0]
        cdt = w_ref.dtype                       # MXU operand dtype (bf16/f32)

        # Model.forward always starts from zero state -> initialize the
        # resident f32 scratch directly (no h0/c0 HBM inputs or DMAs).
        h_sc[...] = jnp.zeros_like(h_sc)
        c_sc[...] = jnp.zeros_like(c_sc)

        def step(t, xsum):
            x_in = x_ref[t]                     # (B, C) f32 input at time t
            xt = x_in
            for l in range(L):                  # static unroll over the stack
                # Fused [xt | h_prev] slab -> ONE K=2C matmul per layer
                # (instead of two K=C matmuls).
                xh_sc[:, :C] = xt
                xh_sc[:, C:] = h_sc[l]
                pre = jnp.dot(xh_sc[...].astype(cdt), w_ref[l],
                              preferred_element_type=jnp.float32)
                pre = pre + b_ref[l]            # (B, 4C) f32

                # torch.split(h, C, dim=1): 3 sigmoid gates + 1 tanh output.
                # One contiguous sigmoid + one tanh push; elementwise math f32.
                sig = jax.nn.sigmoid(pre[:, :3 * C])
                o = jnp.tanh(pre[:, 3 * C:])
                g1 = sig[:, :C]
                g2 = sig[:, C:2 * C]
                g3 = sig[:, 2 * C:]

                c_new = c_sc[l] * g1 + o * g2
                h_new = jnp.tanh(c_new) * g3

                h_sc[l] = h_new
                c_sc[l] = c_new
                xt = h_new                      # feeds the next layer
            if debug:
                y_ref[t] = xt.astype(y_ref.dtype)
            return xsum + x_in                  # running sum for the head

        xsum = jax.lax.fori_loop(0, T, step,
                                 jnp.zeros((B, C), jnp.float32), unroll=True)

        if debug:
            hT_ref[...] = h_sc[...].astype(hT_ref.dtype)
            cT_ref[...] = c_sc[...].astype(cT_ref.dtype)

        # Fused classifier head (the Model's actual output):
        # logits = mean_t(emb(x)) @ Wcls.T + b; lane-padded to 128 columns so
        # the store is dense (padded weight columns are zero; wrapper slices).
        xm = xsum * (1.0 / T)                   # (B, C) f32
        logits = jnp.dot(xm, wcls_ref[...], preferred_element_type=jnp.float32)
        logits_ref[...] = (logits + bcls_ref[...]).astype(logits_ref.dtype)

    return kernel


def fused_forward(x_emb, lstm_w, lstm_b, cls_w, cls_b, *,
                  compute_dtype=jnp.bfloat16, debug=False):
    """Full forward in a single pallas_call over fully VMEM-resident blocks.

    x_emb:     (T, B, C) f32 embedded tokens
    lstm_w[l]: (4C, 2C) PyTorch nn.Linear weight of layer l; lstm_b[l]: (4C,)
    cls_w:     (n_class, C); cls_b: (n_class,)
    Returns (logits (B, n_class) f32, debug_tuple or None).
    """
    T, B, C = x_emb.shape
    L = len(lstm_w)
    n_class = cls_w.shape[0]
    NP = max(128, n_class)                      # lane-dense logits store

    # PyTorch Linear: pre = cat([xt, ht]) @ W.T + b -> stacked (L, 2C, 4C).
    w = jnp.stack([wi.T for wi in lstm_w]).astype(compute_dtype)
    b = jnp.stack([bi.reshape(1, 4 * C) for bi in lstm_b]).astype(jnp.float32)
    wcls = jnp.zeros((C, NP), jnp.float32).at[:, :n_class].set(
        cls_w.T.astype(jnp.float32))
    bcls = jnp.zeros((1, NP), jnp.float32).at[:, :n_class].set(
        cls_b.astype(jnp.float32))

    c2 = lambda i: (0, 0)
    c3 = lambda i: (0, 0, 0)

    out_shape = [jax.ShapeDtypeStruct((B, NP), jnp.float32)]
    out_specs = [pl.BlockSpec((B, NP), c2)]
    if debug:
        out_shape += [jax.ShapeDtypeStruct((T, B, C), jnp.float32),
                      jax.ShapeDtypeStruct((L, B, C), jnp.float32),
                      jax.ShapeDtypeStruct((L, B, C), jnp.float32)]
        out_specs += [pl.BlockSpec((T, B, C), c3),
                      pl.BlockSpec((L, B, C), c3),
                      pl.BlockSpec((L, B, C), c3)]

    # TODO(synk): for large B add a leading batch-tile grid axis marked
    # "parallel" (v7x dual TensorCores); for large C tile the 4C gate dim of
    # the stacked weight and raise vmem_limit_bytes (v7x VMEM is 64 MiB).
    outs = pl.pallas_call(
        _make_fused_kernel(debug),
        out_shape=tuple(out_shape),
        grid_spec=pltpu.PrefetchScalarGridSpec(
            num_scalar_prefetch=0,
            grid=(1,),                                  # one invocation; the
            in_specs=[                                  # time loop is in-kernel
                pl.BlockSpec((T, B, C), c3),            # x (resident)
                pl.BlockSpec((L, 2 * C, 4 * C), c3),    # stacked LSTM weights
                pl.BlockSpec((L, 1, 4 * C), c3),        # stacked biases
                pl.BlockSpec((C, NP), c2),              # classifier weight
                pl.BlockSpec((1, NP), c2),              # classifier bias
            ],
            out_specs=tuple(out_specs),
            scratch_shapes=[
                pltpu.VMEM((L, B, C), jnp.float32),     # h carry
                pltpu.VMEM((L, B, C), jnp.float32),     # c carry
                pltpu.VMEM((B, 2 * C), jnp.float32),    # [xt | h] matmul slab
            ],
        ),
        compiler_params=pltpu.CompilerParams(
            dimension_semantics=("arbitrary",)),
    )(x_emb.astype(jnp.float32), w, b, wcls, bcls)

    logits = outs[0][:, :n_class]
    if debug:
        return logits, (outs[1], outs[2], outs[3])
    return logits, None


# ----------------------------------------------------------------------------
# Model.forward port (bug-for-bug: the RNN output is discarded).
# ----------------------------------------------------------------------------
def model_forward(tokens, params, *, compute_dtype=jnp.bfloat16, debug=False):
    # nn.Embedding gather stays in XLA: data-dependent gather.
    x_emb = jnp.take(params["emb"], tokens, axis=0)         # (T, B, C)
    return fused_forward(x_emb, params["lstm_w"], params["lstm_b"],
                         params["cls_w"], params["cls_b"],
                         compute_dtype=compute_dtype, debug=debug)


# ----------------------------------------------------------------------------
# Pure-JAX references mirroring the PyTorch module (f32).
# ----------------------------------------------------------------------------
def _lstm_cell_ref(xt, ht, ct, w, b):
    x = jnp.concatenate([xt, ht], axis=1)
    h = jnp.dot(x, w.T, precision=jax.lax.Precision.HIGHEST) + b
    g1, g2, g3, o = jnp.split(h, 4, axis=1)
    g1, g2, g3 = jax.nn.sigmoid(g1), jax.nn.sigmoid(g2), jax.nn.sigmoid(g3)
    o = jnp.tanh(o)
    ct1 = ct * g1 + o * g2
    ht1 = jnp.tanh(ct1) * g3
    return ht1, ct1


def lstm_forward_ref(x_emb, h0, c0, weights, biases):
    T = x_emb.shape[0]
    L = len(weights)
    hts = [h0[i] for i in range(L)]
    cts = [c0[i] for i in range(L)]
    outs = []
    for t in range(T):
        xt = x_emb[t]
        for l in range(L):
            xt, ct1 = _lstm_cell_ref(xt, hts[l], cts[l], weights[l], biases[l])
            hts[l], cts[l] = xt, ct1
        outs.append(xt)
    return jnp.stack(outs), jnp.stack(hts), jnp.stack(cts)


def model_forward_ref(tokens, params):
    x_emb = jnp.take(params["emb"], tokens, axis=0)
    xm = jnp.mean(x_emb, axis=0)
    return jnp.dot(xm, params["cls_w"].T,
                   precision=jax.lax.Precision.HIGHEST) + params["cls_b"]


if __name__ == "__main__":
    # Small shapes consistent with the module: n_hidden=64, n_layer=2.
    T, B = 8, 2
    n_word, n_class, n_hidden, n_layer = 100, 4, 64, 2

    key = jax.random.PRNGKey(0)
    k_tok, k_emb, k_cls_w, k_cls_b, key = jax.random.split(key, 5)

    tokens = jax.random.randint(k_tok, (T, B), 0, n_word)
    emb = jax.random.normal(k_emb, (n_word, n_hidden), dtype=jnp.float32)

    # nn.Linear-style init per LSTMCell layer: (4*C, 2*C) weight + (4*C,) bias.
    lstm_w, lstm_b = [], []
    fan_in = 2 * n_hidden
    bound = 1.0 / math.sqrt(fan_in)
    for _ in range(n_layer):
        k_w, k_b, key = jax.random.split(key, 3)
        lstm_w.append(jax.random.uniform(k_w, (4 * n_hidden, fan_in),
                                         minval=-bound, maxval=bound,
                                         dtype=jnp.float32))
        lstm_b.append(jax.random.uniform(k_b, (4 * n_hidden,),
                                         minval=-bound, maxval=bound,
                                         dtype=jnp.float32))

    cbound = 1.0 / math.sqrt(n_hidden)
    cls_w = jax.random.uniform(k_cls_w, (n_class, n_hidden),
                               minval=-cbound, maxval=cbound, dtype=jnp.float32)
    cls_b = jax.random.uniform(k_cls_b, (n_class,),
                               minval=-cbound, maxval=cbound, dtype=jnp.float32)

    params = dict(emb=emb, lstm_w=lstm_w, lstm_b=lstm_b,
                  cls_w=cls_w, cls_b=cls_b)

    # Pure-JAX f32 references.
    x_emb = jnp.take(emb, tokens, axis=0)
    h0 = jnp.zeros((n_layer, B, n_hidden), jnp.float32)
    c0 = jnp.zeros((n_layer, B, n_hidden), jnp.float32)
    y_ref, hT_ref, cT_ref = lstm_forward_ref(x_emb, h0, c0, lstm_w, lstm_b)
    logits_ref = model_forward_ref(tokens, params)

    # 1) f32 MXU path with debug outputs — faithful to the PyTorch module.
    logits32, (y32, hT32, cT32) = model_forward(tokens, params,
                                                compute_dtype=jnp.float32,
                                                debug=True)
    jax.block_until_ready((logits32, y32, hT32, cT32))
    assert jnp.allclose(logits32, logits_ref, atol=5e-3, rtol=5e-3)
    assert jnp.allclose(y32, y_ref, atol=5e-3, rtol=5e-3)
    assert jnp.allclose(hT32, hT_ref, atol=5e-3, rtol=5e-3)
    assert jnp.allclose(cT32, cT_ref, atol=5e-3, rtol=5e-3)

    # 2) bf16 MXU operands (performance path); gate/state math stays f32.
    logits16, (y16, hT16, cT16) = model_forward(tokens, params,
                                                compute_dtype=jnp.bfloat16,
                                                debug=True)
    jax.block_until_ready((logits16, y16, hT16, cT16))
    assert jnp.allclose(logits16, logits_ref, atol=5e-3, rtol=5e-3)  # head f32
    assert jnp.allclose(y16, y_ref, atol=6e-2, rtol=6e-2)
    assert jnp.allclose(hT16, hT_ref, atol=6e-2, rtol=6e-2)
    assert jnp.allclose(cT16, cT_ref, atol=6e-2, rtol=6e-2)

    # 3) Deploy path: no RNN-output stores at all (the module discards them).
    logits_fast, _ = model_forward(tokens, params,
                                   compute_dtype=jnp.bfloat16, debug=False)
    jax.block_until_ready(logits_fast)
    assert jnp.allclose(logits_fast, logits_ref, atol=5e-3, rtol=5e-3)

    print("KERNEL_OK")
</pallas_src>

<mosaic_0001>
module attributes {stable_mosaic.version = 11 : i64} {
  func.func @kernel(%arg0: i32, %arg1: memref<8x2x64xf32, #tpu.memory_space<vmem>>, %arg2: memref<2x128x256xf32, #tpu.memory_space<vmem>>, %arg3: memref<2x1x256xf32, #tpu.memory_space<vmem>>, %arg4: memref<64x128xf32, #tpu.memory_space<vmem>>, %arg5: memref<1x128xf32, #tpu.memory_space<vmem>>, %arg6: memref<2x128xf32, #tpu.memory_space<vmem>>, %arg7: memref<8x2x64xf32, #tpu.memory_space<vmem>>, %arg8: memref<2x2x64xf32, #tpu.memory_space<vmem>>, %arg9: memref<2x2x64xf32, #tpu.memory_space<vmem>>, %arg10: memref<2x2x64xf32, #tpu.memory_space<vmem>>, %arg11: memref<2x2x64xf32, #tpu.memory_space<vmem>>, %arg12: memref<2x128xf32, #tpu.memory_space<vmem>>) attributes {dimension_semantics = [#tpu.dimension_semantics<arbitrary>], iteration_bounds = array<i64: 1>, scalar_prefetch = 0 : i64, scratch_operands = 3 : i64, tpu.core_type = #tpu.core_type<tc>, window_params = [{pipeline_mode = #tpu.pipeline_mode<synchronous>, transform_indices = @transform_0, window_bounds = array<i64: 8, 2, 64>}, {pipeline_mode = #tpu.pipeline_mode<synchronous>, transform_indices = @transform_1, window_bounds = array<i64: 2, 128, 256>}, {pipeline_mode = #tpu.pipeline_mode<synchronous>, transform_indices = @transform_2, window_bounds = array<i64: 2, 1, 256>}, {pipeline_mode = #tpu.pipeline_mode<synchronous>, transform_indices = @transform_3, window_bounds = array<i64: 64, 128>}, {pipeline_mode = #tpu.pipeline_mode<synchronous>, transform_indices = @transform_4, window_bounds = array<i64: 1, 128>}, {pipeline_mode = #tpu.pipeline_mode<synchronous>, transform_indices = @transform_5, window_bounds = array<i64: 2, 128>}, {pipeline_mode = #tpu.pipeline_mode<synchronous>, transform_indices = @transform_6, window_bounds = array<i64: 8, 2, 64>}, {pipeline_mode = #tpu.pipeline_mode<synchronous>, transform_indices = @transform_7, window_bounds = array<i64: 2, 2, 64>}, {pipeline_mode = #tpu.pipeline_mode<synchronous>, transform_indices = @transform_8, window_bounds = array<i64: 2, 2, 64>}]} {
    %cst = arith.constant 0.000000e+00 : f32
    %0 = vector.broadcast %cst : f32 to vector<2x2x64xf32>
    %c0 = arith.constant 0 : index
    %c0_0 = arith.constant 0 : index
    %c0_1 = arith.constant 0 : index
    %1 = vector.load %arg10[%c0, %c0_0, %c0_1] : memref<2x2x64xf32, #tpu.memory_space<vmem>>, vector<2x2x64xf32>
    tpu.vector_store %arg10[%c0, %c0_0, %c0_1], %0 {strides = array<i32>} : memref<2x2x64xf32, #tpu.memory_space<vmem>>, vector<2x2x64xf32>,
    %cst_2 = arith.constant 0.000000e+00 : f32
    %2 = vector.broadcast %cst_2 : f32 to vector<2x2x64xf32>
    %c0_3 = arith.constant 0 : index
    %c0_4 = arith.constant 0 : index
    %c0_5 = arith.constant 0 : index
    %3 = vector.load %arg11[%c0_3, %c0_4, %c0_5] : memref<2x2x64xf32, #tpu.memory_space<vmem>>, vector<2x2x64xf32>
    tpu.vector_store %arg11[%c0_3, %c0_4, %c0_5], %2 {strides = array<i32>} : memref<2x2x64xf32, #tpu.memory_space<vmem>>, vector<2x2x64xf32>,
    %cst_6 = arith.constant 0.000000e+00 : f32
    %4 = vector.broadcast %cst_6 : f32 to vector<2x64xf32>
    %c0_i32 = arith.constant 0 : i32
    %5 = arith.index_cast %c0_i32 : i32 to index
    %c0_7 = arith.constant 0 : index
    %c0_8 = arith.constant 0 : index
    %6 = vector.load %arg1[%5, %c0_7, %c0_8] : memref<8x2x64xf32, #tpu.memory_space<vmem>>, vector<1x2x64xf32>
    %7 = vector.shape_cast %6 : vector<1x2x64xf32> to vector<2x64xf32>
    %c0_9 = arith.constant 0 : index
    %c0_10 = arith.constant 0 : index
    %8 = vector.load %arg12[%c0_9, %c0_10] : memref<2x128xf32, #tpu.memory_space<vmem>>, vector<2x64xf32>
    tpu.vector_store %arg12[%c0_9, %c0_10], %7 {strides = array<i32>} : memref<2x128xf32, #tpu.memory_space<vmem>>, vector<2x64xf32>,
    %c0_11 = arith.constant 0 : index
    %c0_12 = arith.constant 0 : index
    %c0_13 = arith.constant 0 : index
    %9 = vector.load %arg10[%c0_11, %c0_12, %c0_13] : memref<2x2x64xf32, #tpu.memory_space<vmem>>, vector<1x2x64xf32>
    %10 = vector.shape_cast %9 : vector<1x2x64xf32> to vector<2x64xf32>
    %c0_14 = arith.constant 0 : index
    %c64 = arith.constant 64 : index
    %11 = vector.load %arg12[%c0_14, %c64] : memref<2x128xf32, #tpu.memory_space<vmem>>, vector<2x64xf32>
    tpu.vector_store %arg12[%c0_14, %c64], %10 {strides = array<i32>} : memref<2x128xf32, #tpu.memory_space<vmem>>, vector<2x64xf32>,
    %c0_15 = arith.constant 0 : index
    %c0_16 = arith.constant 0 : index
    %12 = vector.load %arg12[%c0_15, %c0_16] : memref<2x128xf32, #tpu.memory_space<vmem>>, vector<2x128xf32>
    %c0_17 = arith.constant 0 : index
    %c0_18 = arith.constant 0 : index
    %c0_19 = arith.constant 0 : index
    %13 = vector.load %arg2[%c0_17, %c0_18, %c0_19] : memref<2x128x256xf32, #tpu.memory_space<vmem>>, vector<1x128x256xf32>
    %14 = vector.shape_cast %13 : vector<1x128x256xf32> to vector<128x256xf32>
    %cst_20 = arith.constant dense<0.000000e+00> : vector<2x256xf32>
    %15 = tpu.matmul %12, %14, %cst_20 {dimension_numbers = #tpu.dot_dimension_numbers<[1], [0], [0], [1], [0, 0, 1, 1], [], []>} : vector<2x128xf32>, vector<128x256xf32>, vector<2x256xf32> -> vector<2x256xf32>
    %c0_21 = arith.constant 0 : index
    %c0_22 = arith.constant 0 : index
    %c0_23 = arith.constant 0 : index
    %16 = vector.load %arg3[%c0_21, %c0_22, %c0_23] : memref<2x1x256xf32, #tpu.memory_space<vmem>>, vector<1x1x256xf32>
    %17 = vector.shape_cast %16 : vector<1x1x256xf32> to vector<1x256xf32>
    %18 = vector.broadcast %17 : vector<1x256xf32> to vector<2x256xf32>
    %19 = arith.addf %15, %18 : vector<2x256xf32>
    %20 = vector.extract_strided_slice %19 {offsets = [0, 0], sizes = [2, 192], strides = [1, 1]} : vector<2x256xf32> to vector<2x192xf32>
    %21 = arith.negf %20 : vector<2x192xf32>
    %22 = math.exp %21 : vector<2x192xf32>
    %cst_24 = arith.constant 1.000000e+00 : f32
    %23 = vector.broadcast %cst_24 : f32 to vector<2x192xf32>
    %24 = arith.addf %23, %22 : vector<2x192xf32>
    %25 = arith.divf %23, %24 : vector<2x192xf32>
    %26 = vector.extract_strided_slice %19 {offsets = [0, 192], sizes = [2, 64], strides = [1, 1]} : vector<2x256xf32> to vector<2x64xf32>
    %27 = math.tanh %26 : vector<2x64xf32>
    %28 = vector.extract_strided_slice %25 {offsets = [0, 0], sizes = [2, 64], strides = [1, 1]} : vector<2x192xf32> to vector<2x64xf32>
    %29 = vector.extract_strided_slice %25 {offsets = [0, 64], sizes = [2, 64], strides = [1, 1]} : vector<2x192xf32> to vector<2x64xf32>
    %30 = vector.extract_strided_slice %25 {offsets = [0, 128], sizes = [2, 64], strides = [1, 1]} : vector<2x192xf32> to vector<2x64xf32>
    %c0_25 = arith.constant 0 : index
    %c0_26 = arith.constant 0 : index
    %c0_27 = arith.constant 0 : index
    %31 = vector.load %arg11[%c0_25, %c0_26, %c0_27] : memref<2x2x64xf32, #tpu.memory_space<vmem>>, vector<1x2x64xf32>
    %32 = vector.shape_cast %31 : vector<1x2x64xf32> to vector<2x64xf32>
    %33 = arith.mulf %32, %28 : vector<2x64xf32>
    %34 = arith.mulf %27, %29 : vector<2x64xf32>
    %35 = arith.addf %33, %34 : vector<2x64xf32>
    %36 = math.tanh %35 : vector<2x64xf32>
    %37 = arith.mulf %36, %30 : vector<2x64xf32>
    %c0_28 = arith.constant 0 : index
    %c0_29 = arith.constant 0 : index
    %c0_30 = arith.constant 0 : index
    %38 = vector.load %arg10[%c0_28, %c0_29, %c0_30] : memref<2x2x64xf32, #tpu.memory_space<vmem>>, vector<1x2x64xf32>
    %39 = vector.shape_cast %38 : vector<1x2x64xf32> to vector<2x64xf32>
    %40 = vector.shape_cast %37 : vector<2x64xf32> to vector<1x2x64xf32>
    tpu.vector_store %arg10[%c0_28, %c0_29, %c0_30], %40 {strides = array<i32>} : memref<2x2x64xf32, #tpu.memory_space<vmem>>, vector<1x2x64xf32>,
    %c0_31 = arith.constant 0 : index
    %c0_32 = arith.constant 0 : index
    %c0_33 = arith.constant 0 : index
    %41 = vector.load %arg11[%c0_31, %c0_32, %c0_33] : memref<2x2x64xf32, #tpu.memory_space<vmem>>, vector<1x2x64xf32>
    %42 = vector.shape_cast %41 : vector<1x2x64xf32> to vector<2x64xf32>
    %43 = vector.shape_cast %35 : vector<2x64xf32> to vector<1x2x64xf32>
    tpu.vector_store %arg11[%c0_31, %c0_32, %c0_33], %43 {strides = array<i32>} : memref<2x2x64xf32, #tpu.memory_space<vmem>>, vector<1x2x64xf32>,
    %c0_34 = arith.constant 0 : index
    %c0_35 = arith.constant 0 : index
    %44 = vector.load %arg12[%c0_34, %c0_35] : memref<2x128xf32, #tpu.memory_space<vmem>>, vector<2x64xf32>
    tpu.vector_store %arg12[%c0_34, %c0_35], %37 {strides = array<i32>} : memref<2x128xf32, #tpu.memory_space<vmem>>, vector<2x64xf32>,
    %c1 = arith.constant 1 : index
    %c0_36 = arith.constant 0 : index
    %c0_37 = arith.constant 0 : index
    %45 = vector.load %arg10[%c1, %c0_36, %c0_37] : memref<2x2x64xf32, #tpu.memory_space<vmem>>, vector<1x2x64xf32>
    %46 = vector.shape_cast %45 : vector<1x2x64xf32> to vector<2x64xf32>
    %c0_38 = arith.constant 0 : index
    %c64_39 = arith.constant 64 : index
    %47 = vector.load %arg12[%c0_38, %c64_39] : memref<2x128xf32, #tpu.memory_space<vmem>>, vector<2x64xf32>
    tpu.vector_store %arg12[%c0_38, %c64_39], %46 {strides = array<i32>} : memref<2x128xf32, #tpu.memory_space<vmem>>, vector<2x64xf32>,
    %c0_40 = arith.constant 0 : index
    %c0_41 = arith.constant 0 : index
    %48 = vector.load %arg12[%c0_40, %c0_41] : memref<2x128xf32, #tpu.memory_space<vmem>>, vector<2x128xf32>
    %c1_42 = arith.constant 1 : index
    %c0_43 = arith.constant 0 : index
    %c0_44 = arith.constant 0 : index
    %49 = vector.load %arg2[%c1_42, %c0_43, %c0_44] : memref<2x128x256xf32, #tpu.memory_space<vmem>>, vector<1x128x256xf32>
    %50 = vector.shape_cast %49 : vector<1x128x256xf32> to vector<128x256xf32>
    %cst_45 = arith.constant dense<0.000000e+00> : vector<2x256xf32>
    %51 = tpu.matmul %48, %50, %cst_45 {dimension_numbers = #tpu.dot_dimension_numbers<[1], [0], [0], [1], [0, 0, 1, 1], [], []>} : vector<2x128xf32>, vector<128x256xf32>, vector<2x256xf32> -> vector<2x256xf32>
    %c1_46 = arith.constant 1 : index
    %c0_47 = arith.constant 0 : index
    %c0_48 = arith.constant 0 : index
    %52 = vector.load %arg3[%c1_46, %c0_47, %c0_48] : memref<2x1x256xf32, #tpu.memory_space<vmem>>, vector<1x1x256xf32>
    %53 = vector.shape_cast %52 : vector<1x1x256xf32> to vector<1x256xf32>
    %54 = vector.broadcast %53 : vector<1x256xf32> to vector<2x256xf32>
    %55 = arith.addf %51, %54 : vector<2x256xf32>
    %56 = vector.extract_strided_slice %55 {offsets = [0, 0], sizes = [2, 192], strides = [1, 1]} : vector<2x256xf32> to vector<2x192xf32>
    %57 = arith.negf %56 : vector<2x192xf32>
    %58 = math.exp %57 : vector<2x192xf32>
    %cst_49 = arith.constant 1.000000e+00 : f32
    %59 = vector.broadcast %cst_49 : f32 to vector<2x192xf32>
    %60 = arith.addf %59, %58 : vector<2x192xf32>
    %61 = arith.divf %59, %60 : vector<2x192xf32>
    %62 = vector.extract_strided_slice %55 {offsets = [0, 192], sizes = [2, 64], strides = [1, 1]} : vector<2x256xf32> to vector<2x64xf32>
    %63 = math.tanh %62 : vector<2x64xf32>
    %64 = vector.extract_strided_slice %61 {offsets = [0, 0], sizes = [2, 64], strides = [1, 1]} : vector<2x192xf32> to vector<2x64xf32>
    %65 = vector.extract_strided_slice %61 {offsets = [0, 64], sizes = [2, 64], strides = [1, 1]} : vector<2x192xf32> to vector<2x64xf32>
    %66 = vector.extract_strided_slice %61 {offsets = [0, 128], sizes = [2, 64], strides = [1, 1]} : vector<2x192xf32> to vector<2x64xf32>
    %c1_50 = arith.constant 1 : index
    %c0_51 = arith.constant 0 : index
    %c0_52 = arith.constant 0 : index
    %67 = vector.load %arg11[%c1_50, %c0_51, %c0_52] : memref<2x2x64xf32, #tpu.memory_space<vmem>>, vector<1x2x64xf32>
    %68 = vector.shape_cast %67 : vector<1x2x64xf32> to vector<2x64xf32>
    %69 = arith.mulf %68, %64 : vector<2x64xf32>
    %70 = arith.mulf %63, %65 : vector<2x64xf32>
    %71 = arith.addf %69, %70 : vector<2x64xf32>
    %72 = math.tanh %71 : vector<2x64xf32>
    %73 = arith.mulf %72, %66 : vector<2x64xf32>
    %c1_53 = arith.constant 1 : index
    %c0_54 = arith.constant 0 : index
    %c0_55 = arith.constant 0 : index
    %74 = vector.load %arg10[%c1_53, %c0_54, %c0_55] : memref<2x2x64xf32, #tpu.memory_space<vmem>>, vector<1x2x64xf32>
    %75 = vector.shape_cast %74 : vector<1x2x64xf32> to vector<2x64xf32>
    %76 = vector.shape_cast %73 : vector<2x64xf32> to vector<1x2x64xf32>
    tpu.vector_store %arg10[%c1_53, %c0_54, %c0_55], %76 {strides = array<i32>} : memref<2x2x64xf32, #tpu.memory_space<vmem>>, vector<1x2x64xf32>,
    %c1_56 = arith.constant 1 : index
    %c0_57 = arith.constant 0 : index
    %c0_58 = arith.constant 0 : index
    %77 = vector.load %arg11[%c1_56, %c0_57, %c0_58] : memref<2x2x64xf32, #tpu.memory_space<vmem>>, vector<1x2x64xf32>
    %78 = vector.shape_cast %77 : vector<1x2x64xf32> to vector<2x64xf32>
    %79 = vector.shape_cast %71 : vector<2x64xf32> to vector<1x2x64xf32>
    tpu.vector_store %arg11[%c1_56, %c0_57, %c0_58], %79 {strides = array<i32>} : memref<2x2x64xf32, #tpu.memory_space<vmem>>, vector<1x2x64xf32>,
    %80 = arith.index_cast %c0_i32 : i32 to index
    %c0_59 = arith.constant 0 : index
    %c0_60 = arith.constant 0 : index
    %81 = vector.load %arg7[%80, %c0_59, %c0_60] : memref<8x2x64xf32, #tpu.memory_space<vmem>>, vector<1x2x64xf32>
    %82 = vector.shape_cast %81 : vector<1x2x64xf32> to vector<2x64xf32>
    %83 = vector.shape_cast %73 : vector<2x64xf32> to vector<1x2x64xf32>
    tpu.vector_store %arg7[%80, %c0_59, %c0_60], %83 {strides = array<i32>} : memref<8x2x64xf32, #tpu.memory_space<vmem>>, vector<1x2x64xf32>,
    %84 = arith.addf %4, %7 : vector<2x64xf32>
    %c1_i32 = arith.constant 1 : i32
    %85 = arith.index_cast %c1_i32 : i32 to index
    %c0_61 = arith.constant 0 : index
    %c0_62 = arith.constant 0 : index
    %86 = vector.load %arg1[%85, %c0_61, %c0_62] : memref<8x2x64xf32, #tpu.memory_space<vmem>>, vector<1x2x64xf32>
    %87 = vector.shape_cast %86 : vector<1x2x64xf32> to vector<2x64xf32>
    %c0_63 = arith.constant 0 : index
    %c0_64 = arith.constant 0 : index
    %88 = vector.load %arg12[%c0_63, %c0_64] : memref<2x128xf32, #tpu.memory_space<vmem>>, vector<2x64xf32>
    tpu.vector_store %arg12[%c0_63, %c0_64], %87 {strides = array<i32>} : memref<2x128xf32, #tpu.memory_space<vmem>>, vector<2x64xf32>,
    %c0_65 = arith.constant 0 : index
    %c0_66 = arith.constant 0 : index
    %c0_67 = arith.constant 0 : index
    %89 = vector.load %arg10[%c0_65, %c0_66, %c0_67] : memref<2x2x64xf32, #tpu.memory_space<vmem>>, vector<1x2x64xf32>
    %90 = vector.shape_cast %89 : vector<1x2x64xf32> to vector<2x64xf32>
    %c0_68 = arith.constant 0 : index
    %c64_69 = arith.constant 64 : index
    %91 = vector.load %arg12[%c0_68, %c64_69] : memref<2x128xf32, #tpu.memory_space<vmem>>, vector<2x64xf32>
    tpu.vector_store %arg12[%c0_68, %c64_69], %90 {strides = array<i32>} : memref<2x128xf32, #tpu.memory_space<vmem>>, vector<2x64xf32>,
    %c0_70 = arith.constant 0 : index
    %c0_71 = arith.constant 0 : index
    %92 = vector.load %arg12[%c0_70, %c0_71] : memref<2x128xf32, #tpu.memory_space<vmem>>, vector<2x128xf32>
    %c0_72 = arith.constant 0 : index
    %c0_73 = arith.constant 0 : index
    %c0_74 = arith.constant 0 : index
    %93 = vector.load %arg2[%c0_72, %c0_73, %c0_74] : memref<2x128x256xf32, #tpu.memory_space<vmem>>, vector<1x128x256xf32>
    %94 = vector.shape_cast %93 : vector<1x128x256xf32> to vector<128x256xf32>
    %cst_75 = arith.constant dense<0.000000e+00> : vector<2x256xf32>
    %95 = tpu.matmul %92, %94, %cst_75 {dimension_numbers = #tpu.dot_dimension_numbers<[1], [0], [0], [1], [0, 0, 1, 1], [], []>} : vector<2x128xf32>, vector<128x256xf32>, vector<2x256xf32> -> vector<2x256xf32>
    %c0_76 = arith.constant 0 : index
    %c0_77 = arith.constant 0 : index
    %c0_78 = arith.constant 0 : index
    %96 = vector.load %arg3[%c0_76, %c0_77, %c0_78] : memref<2x1x256xf32, #tpu.memory_space<vmem>>, vector<1x1x256xf32>
    %97 = vector.shape_cast %96 : vector<1x1x256xf32> to vector<1x256xf32>
    %98 = vector.broadcast %97 : vector<1x256xf32> to vector<2x256xf32>
    %99 = arith.addf %95, %98 : vector<2x256xf32>
    %100 = vector.extract_strided_slice %99 {offsets = [0, 0], sizes = [2, 192], strides = [1, 1]} : vector<2x256xf32> to vector<2x192xf32>
    %101 = arith.negf %100 : vector<2x192xf32>
    %102 = math.exp %101 : vector<2x192xf32>
    %cst_79 = arith.constant 1.000000e+00 : f32
    %103 = vector.broadcast %cst_79 : f32 to vector<2x192xf32>
    %104 = arith.addf %103, %102 : vector<2x192xf32>
    %105 = arith.divf %103, %104 : vector<2x192xf32>
    %106 = vector.extract_strided_slice %99 {offsets = [0, 192], sizes = [2, 64], strides = [1, 1]} : vector<2x256xf32> to vector<2x64xf32>
    %107 = math.tanh %106 : vector<2x64xf32>
    %108 = vector.extract_strided_slice %105 {offsets = [0, 0], sizes = [2, 64], strides = [1, 1]} : vector<2x192xf32> to vector<2x64xf32>
    %109 = vector.extract_strided_slice %105 {offsets = [0, 64], sizes = [2, 64], strides = [1, 1]} : vector<2x192xf32> to vector<2x64xf32>
    %110 = vector.extract_strided_slice %105 {offsets = [0, 128], sizes = [2, 64], strides = [1, 1]} : vector<2x192xf32> to vector<2x64xf32>
    %c0_80 = arith.constant 0 : index
    %c0_81 = arith.constant 0 : index
    %c0_82 = arith.constant 0 : index
    %111 = vector.load %arg11[%c0_80, %c0_81, %c0_82] : memref<2x2x64xf32, #tpu.memory_space<vmem>>, vector<1x2x64xf32>
    %112 = vector.shape_cast %111 : vector<1x2x64xf32> to vector<2x64xf32>
    %113 = arith.mulf %112, %108 : vector<2x64xf32>
    %114 = arith.mulf %107, %109 : vector<2x64xf32>
    %115 = arith.addf %113, %114 : vector<2x64xf32>
    %116 = math.tanh %115 : vector<2x64xf32>
    %117 = arith.mulf %116, %110 : vector<2x64xf32>
    %c0_83 = arith.constant 0 : index
    %c0_84 = arith.constant 0 : index
    %c0_85 = arith.constant 0 : index
    %118 = vector.load %arg10[%c0_83, %c0_84, %c0_85] : memref<2x2x64xf32, #tpu.memory_space<vmem>>, vector<1x2x64xf32>
    %119 = vector.shape_cast %118 : vector<1x2x64xf32> to vector<2x64xf32>
    %120 = vector.shape_cast %117 : vector<2x64xf32> to vector<1x2x64xf32>
    tpu.vector_store %arg10[%c0_83, %c0_84, %c0_85], %120 {strides = array<i32>} : memref<2x2x64xf32, #tpu.memory_space<vmem>>, vector<1x2x64xf32>,
    %c0_86 = arith.constant 0 : index
    %c0_87 = arith.constant 0 : index
    %c0_88 = arith.constant 0 : index
    %121 = vector.load %arg11[%c0_86, %c0_87, %c0_88] : memref<2x2x64xf32, #tpu.memory_space<vmem>>, vector<1x2x64xf32>
    %122 = vector.shape_cast %121 : vector<1x2x64xf32> to vector<2x64xf32>
    %123 = vector.shape_cast %115 : vector<2x64xf32> to vector<1x2x64xf32>
    tpu.vector_store %arg11[%c0_86, %c0_87, %c0_88], %123 {strides = array<i32>} : memref<2x2x64xf32, #tpu.memory_space<vmem>>, vector<1x2x64xf32>,
    %c0_89 = arith.constant 0 : index
    %c0_90 = arith.constant 0 : index
    %124 = vector.load %arg12[%c0_89, %c0_90] : memref<2x128xf32, #tpu.memory_space<vmem>>, vector<2x64xf32>
    tpu.vector_store %arg12[%c0_89, %c0_90], %117 {strides = array<i32>} : memref<2x128xf32, #tpu.memory_space<vmem>>, vector<2x64xf32>,
    %c1_91 = arith.constant 1 : index
    %c0_92 = arith.constant 0 : index
    %c0_93 = arith.constant 0 : index
    %125 = vector.load %arg10[%c1_91, %c0_92, %c0_93] : memref<2x2x64xf32, #tpu.memory_space<vmem>>, vector<1x2x64xf32>
    %126 = vector.shape_cast %125 : vector<1x2x64xf32> to vector<2x64xf32>
    %c0_94 = arith.constant 0 : index
    %c64_95 = arith.constant 64 : index
    %127 = vector.load %arg12[%c0_94, %c64_95] : memref<2x128xf32, #tpu.memory_space<vmem>>, vector<2x64xf32>
    tpu.vector_store %arg12[%c0_94, %c64_95], %126 {strides = array<i32>} : memref<2x128xf32, #tpu.memory_space<vmem>>, vector<2x64xf32>,
    %c0_96 = arith.constant 0 : index
    %c0_97 = arith.constant 0 : index
    %128 = vector.load %arg12[%c0_96, %c0_97] : memref<2x128xf32, #tpu.memory_space<vmem>>, vector<2x128xf32>
    %c1_98 = arith.constant 1 : index
    %c0_99 = arith.constant 0 : index
    %c0_100 = arith.constant 0 : index
    %129 = vector.load %arg2[%c1_98, %c0_99, %c0_100] : memref<2x128x256xf32, #tpu.memory_space<vmem>>, vector<1x128x256xf32>
    %130 = vector.shape_cast %129 : vector<1x128x256xf32> to vector<128x256xf32>
    %cst_101 = arith.constant dense<0.000000e+00> : vector<2x256xf32>
    %131 = tpu.matmul %128, %130, %cst_101 {dimension_numbers = #tpu.dot_dimension_numbers<[1], [0], [0], [1], [0, 0, 1, 1], [], []>} : vector<2x128xf32>, vector<128x256xf32>, vector<2x256xf32> -> vector<2x256xf32>
    %c1_102 = arith.constant 1 : index
    %c0_103 = arith.constant 0 : index
    %c0_104 = arith.constant 0 : index
    %132 = vector.load %arg3[%c1_102, %c0_103, %c0_104] : memref<2x1x256xf32, #tpu.memory_space<vmem>>, vector<1x1x256xf32>
    %133 = vector.shape_cast %132 : vector<1x1x256xf32> to vector<1x256xf32>
    %134 = vector.broadcast %133 : vector<1x256xf32> to vector<2x256xf32>
    %135 = arith.addf %131, %134 : vector<2x256xf32>
    %136 = vector.extract_strided_slice %135 {offsets = [0, 0], sizes = [2, 192], strides = [1, 1]} : vector<2x256xf32> to vector<2x192xf32>
    %137 = arith.negf %136 : vector<2x192xf32>
    %138 = math.exp %137 : vector<2x192xf32>
    %cst_105 = arith.constant 1.000000e+00 : f32
    %139 = vector.broadcast %cst_105 : f32 to vector<2x192xf32>
    %140 = arith.addf %139, %138 : vector<2x192xf32>
    %141 = arith.divf %139, %140 : vector<2x192xf32>
    %142 = vector.extract_strided_slice %135 {offsets = [0, 192], sizes = [2, 64], strides = [1, 1]} : vector<2x256xf32> to vector<2x64xf32>
    %143 = math.tanh %142 : vector<2x64xf32>
    %144 = vector.extract_strided_slice %141 {offsets = [0, 0], sizes = [2, 64], strides = [1, 1]} : vector<2x192xf32> to vector<2x64xf32>
    %145 = vector.extract_strided_slice %141 {offsets = [0, 64], sizes = [2, 64], strides = [1, 1]} : vector<2x192xf32> to vector<2x64xf32>
    %146 = vector.extract_strided_slice %141 {offsets = [0, 128], sizes = [2, 64], strides = [1, 1]} : vector<2x192xf32> to vector<2x64xf32>
    %c1_106 = arith.constant 1 : index
    %c0_107 = arith.constant 0 : index
    %c0_108 = arith.constant 0 : index
    %147 = vector.load %arg11[%c1_106, %c0_107, %c0_108] : memref<2x2x64xf32, #tpu.memory_space<vmem>>, vector<1x2x64xf32>
    %148 = vector.shape_cast %147 : vector<1x2x64xf32> to vector<2x64xf32>
    %149 = arith.mulf %148, %144 : vector<2x64xf32>
    %150 = arith.mulf %143, %145 : vector<2x64xf32>
    %151 = arith.addf %149, %150 : vector<2x64xf32>
    %152 = math.tanh %151 : vector<2x64xf32>
    %153 = arith.mulf %152, %146 : vector<2x64xf32>
    %c1_109 = arith.constant 1 : index
    %c0_110 = arith.constant 0 : index
    %c0_111 = arith.constant 0 : index
    %154 = vector.load %arg10[%c1_109, %c0_110, %c0_111] : memref<2x2x64xf32, #tpu.memory_space<vmem>>, vector<1x2x64xf32>
    %155 = vector.shape_cast %154 : vector<1x2x64xf32> to vector<2x64xf32>
    %156 = vector.shape_cast %153 : vector<2x64xf32> to vector<1x2x64xf32>
    tpu.vector_store %arg10[%c1_109, %c0_110, %c0_111], %156 {strides = array<i32>} : memref<2x2x64xf32, #tpu.memory_space<vmem>>, vector<1x2x64xf32>,
    %c1_112 = arith.constant 1 : index
    %c0_113 = arith.constant 0 : index
    %c0_114 = arith.constant 0 : index
    %157 = vector.load %arg11[%c1_112, %c0_113, %c0_114] : memref<2x2x64xf32, #tpu.memory_space<vmem>>, vector<1x2x64xf32>
    %158 = vector.shape_cast %157 : vector<1x2x64xf32> to vector<2x64xf32>
    %159 = vector.shape_cast %151 : vector<2x64xf32> to vector<1x2x64xf32>
    tpu.vector_store %arg11[%c1_112, %c0_113, %c0_114], %159 {strides = array<i32>} : memref<2x2x64xf32, #tpu.memory_space<vmem>>, vector<1x2x64xf32>,
    %160 = arith.index_cast %c1_i32 : i32 to index
    %c0_115 = arith.constant 0 : index
    %c0_116 = arith.constant 0 : index
    %161 = vector.load %arg7[%160, %c0_115, %c0_116] : memref<8x2x64xf32, #tpu.memory_space<vmem>>, vector<1x2x64xf32>
    %162 = vector.shape_cast %161 : vector<1x2x64xf32> to vector<2x64xf32>
    %163 = vector.shape_cast %153 : vector<2x64xf32> to vector<1x2x64xf32>
    tpu.vector_store %arg7[%160, %c0_115, %c0_116], %163 {strides = array<i32>} : memref<8x2x64xf32, #tpu.memory_space<vmem>>, vector<1x2x64xf32>,
    %164 = arith.addf %84, %87 : vector<2x64xf32>
    %c2_i32 = arith.constant 2 : i32
    %165 = arith.index_cast %c2_i32 : i32 to index
    %c0_117 = arith.constant 0 : index
    %c0_118 = arith.constant 0 : index
    %166 = vector.load %arg1[%165, %c0_117, %c0_118] : memref<8x2x64xf32, #tpu.memory_space<vmem>>, vector<1x2x64xf32>
    %167 = vector.shape_cast %166 : vector<1x2x64xf32> to vector<2x64xf32>
    %c0_119 = arith.constant 0 : index
    %c0_120 = arith.constant 0 : index
    %168 = vector.load %arg12[%c0_119, %c0_120] : memref<2x128xf32, #tpu.memory_space<vmem>>, vector<2x64xf32>
    tpu.vector_store %arg12[%c0_119, %c0_120], %167 {strides = array<i32>} : memref<2x128xf32, #tpu.memory_space<vmem>>, vector<2x64xf32>,
    %c0_121 = arith.constant 0 : index
    %c0_122 = arith.constant 0 : index
    %c0_123 = arith.constant 0 : index
    %169 = vector.load %arg10[%c0_121, %c0_122, %c0_123] : memref<2x2x64xf32, #tpu.memory_space<vmem>>, vector<1x2x64xf32>
    %170 = vector.shape_cast %169 : vector<1x2x64xf32> to vector<2x64xf32>
    %c0_124 = arith.constant 0 : index
    %c64_125 = arith.constant 64 : index
    %171 = vector.load %arg12[%c0_124, %c64_125] : memref<2x128xf32, #tpu.memory_space<vmem>>, vector<2x64xf32>
    tpu.vector_store %arg12[%c0_124, %c64_125], %170 {strides = array<i32>} : memref<2x128xf32, #tpu.memory_space<vmem>>, vector<2x64xf32>,
    %c0_126 = arith.constant 0 : index
    %c0_127 = arith.constant 0 : index
    %172 = vector.load %arg12[%c0_126, %c0_127] : memref<2x128xf32, #tpu.memory_space<vmem>>, vector<2x128xf32>
    %c0_128 = arith.constant 0 : index
    %c0_129 = arith.constant 0 : index
    %c0_130 = arith.constant 0 : index
    %173 = vector.load %arg2[%c0_128, %c0_129, %c0_130] : memref<2x128x256xf32, #tpu.memory_space<vmem>>, vector<1x128x256xf32>
    %174 = vector.shape_cast %173 : vector<1x128x256xf32> to vector<128x256xf32>
    %cst_131 = arith.constant dense<0.000000e+00> : vector<2x256xf32>
    %175 = tpu.matmul %172, %174, %cst_131 {dimension_numbers = #tpu.dot_dimension_numbers<[1], [0], [0], [1], [0, 0, 1, 1], [], []>} : vector<2x128xf32>, vector<128x256xf32>, vector<2x256xf32> -> vector<2x256xf32>
    %c0_132 = arith.constant 0 : index
    %c0_133 = arith.constant 0 : index
    %c0_134 = arith.constant 0 : index
    %176 = vector.load %arg3[%c0_132, %c0_133, %c0_134] : memref<2x1x256xf32, #tpu.memory_space<vmem>>, vector<1x1x256xf32>
    %177 = vector.shape_cast %176 : vector<1x1x256xf32> to vector<1x256xf32>
    %178 = vector.broadcast %177 : vector<1x256xf32> to vector<2x256xf32>
    %179 = arith.addf %175, %178 : vector<2x256xf32>
    %180 = vector.extract_strided_slice %179 {offsets = [0, 0], sizes = [2, 192], strides = [1, 1]} : vector<2x256xf32> to vector<2x192xf32>
    %181 = arith.negf %180 : vector<2x192xf32>
    %182 = math.exp %181 : vector<2x192xf32>
    %cst_135 = arith.constant 1.000000e+00 : f32
    %183 = vector.broadcast %cst_135 : f32 to vector<2x192xf32>
    %184 = arith.addf %183, %182 : vector<2x192xf32>
    %185 = arith.divf %183, %184 : vector<2x192xf32>
    %186 = vector.extract_strided_slice %179 {offsets = [0, 192], sizes = [2, 64], strides = [1, 1]} : vector<2x256xf32> to vector<2x64xf32>
    %187 = math.tanh %186 : vector<2x64xf32>
    %188 = vector.extract_strided_slice %185 {offsets = [0, 0], sizes = [2, 64], strides = [1, 1]} : vector<2x192xf32> to vector<2x64xf32>
    %189 = vector.extract_strided_slice %185 {offsets = [0, 64], sizes = [2, 64], strides = [1, 1]} : vector<2x192xf32> to vector<2x64xf32>
    %190 = vector.extract_strided_slice %185 {offsets = [0, 128], sizes = [2, 64], strides = [1, 1]} : vector<2x192xf32> to vector<2x64xf32>
    %c0_136 = arith.constant 0 : index
    %c0_137 = arith.constant 0 : index
    %c0_138 = arith.constant 0 : index
    %191 = vector.load %arg11[%c0_136, %c0_137, %c0_138] : memref<2x2x64xf32, #tpu.memory_space<vmem>>, vector<1x2x64xf32>
    %192 = vector.shape_cast %191 : vector<1x2x64xf32> to vector<2x64xf32>
    %193 = arith.mulf %192, %188 : vector<2x64xf32>
    %194 = arith.mulf %187, %189 : vector<2x64xf32>
    %195 = arith.addf %193, %194 : vector<2x64xf32>
    %196 = math.tanh %195 : vector<2x64xf32>
    %197 = arith.mulf %196, %190 : vector<2x64xf32>
    %c0_139 = arith.constant 0 : index
    %c0_140 = arith.constant 0 : index
    %c0_141 = arith.constant 0 : index
    %198 = vector.load %arg10[%c0_139, %c0_140, %c0_141] : memref<2x2x64xf32, #tpu.memory_space<vmem>>, vector<1x2x64xf32>
    %199 = vector.shape_cast %198 : vector<1x2x64xf32> to vector<2x64xf32>
    %200 = vector.shape_cast %197 : vector<2x64xf32> to vector<1x2x64xf32>
    tpu.vector_store %arg10[%c0_139, %c0_140, %c0_141], %200 {strides = array<i32>} : memref<2x2x64xf32, #tpu.memory_space<vmem>>, vector<1x2x64xf32>,
    %c0_142 = arith.constant 0 : index
    %c0_143 = arith.constant 0 : index
    %c0_144 = arith.constant 0 : index
    %201 = vector.load %arg11[%c0_142, %c0_143, %c0_144] : memref<2x2x64xf32, #tpu.memory_space<vmem>>, vector<1x2x64xf32>
    %202 = vector.shape_cast %201 : vector<1x2x64xf32> to vector<2x64xf32>
    %203 = vector.shape_cast %195 : vector<2x64xf32> to vector<1x2x64xf32>
    tpu.vector_store %arg11[%c0_142, %c0_143, %c0_144], %203 {strides = array<i32>} : memref<2x2x64xf32, #tpu.memory_space<vmem>>, vector<1x2x64xf32>,
    %c0_145 = arith.constant 0 : index
    %c0_146 = arith.constant 0 : index
    %204 = vector.load %arg12[%c0_145, %c0_146] : memref<2x128xf32, #tpu.memory_space<vmem>>, vector<2x64xf32>
    tpu.vector_store %arg12[%c0_145, %c0_146], %197 {strides = array<i32>} : memref<2x128xf32, #tpu.memory_space<vmem>>, vector<2x64xf32>,
    %c1_147 = arith.constant 1 : index
    %c0_148 = arith.constant 0 : index
    %c0_149 = arith.constant 0 : index
    %205 = vector.load %arg10[%c1_147, %c0_148, %c0_149] : memref<2x2x64xf32, #tpu.memory_space<vmem>>, vector<1x2x64xf32>
    %206 = vector.shape_cast %205 : vector<1x2x64xf32> to vector<2x64xf32>
    %c0_150 = arith.constant 0 : index
    %c64_151 = arith.constant 64 : index
    %207 = vector.load %arg12[%c0_150, %c64_151] : memref<2x128xf32, #tpu.memory_space<vmem>>, vector<2x64xf32>
    tpu.vector_store %arg12[%c0_150, %c64_151], %206 {strides = array<i32>} : memref<2x128xf32, #tpu.memory_space<vmem>>, vector<2x64xf32>,
    %c0_152 = arith.constant 0 : index
    %c0_153 = arith.constant 0 : index
    %208 = vector.load %arg12[%c0_152, %c0_153] : memref<2x128xf32, #tpu.memory_space<vmem>>, vector<2x128xf32>
    %c1_154 = arith.constant 1 : index
    %c0_155 = arith.constant 0 : index
    %c0_156 = arith.constant 0 : index
    %209 = vector.load %arg2[%c1_154, %c0_155, %c0_156] : memref<2x128x256xf32, #tpu.memory_space<vmem>>, vector<1x128x256xf32>
    %210 = vector.shape_cast %209 : vector<1x128x256xf32> to vector<128x256xf32>
    %cst_157 = arith.constant dense<0.000000e+00> : vector<2x256xf32>
    %211 = tpu.matmul %208, %210, %cst_157 {dimension_numbers = #tpu.dot_dimension_numbers<[1], [0], [0], [1], [0, 0, 1, 1], [], []>} : vector<2x128xf32>, vector<128x256xf32>, vector<2x256xf32> -> vector<2x256xf32>
    %c1_158 = arith.constant 1 : index
    %c0_159 = arith.constant 0 : index
    %c0_160 = arith.constant 0 : index
    %212 = vector.load %arg3[%c1_158, %c0_159, %c0_160] : memref<2x1x256xf32, #tpu.memory_space<vmem>>, vector<1x1x256xf32>
    %213 = vector.shape_cast %212 : vector<1x1x256xf32> to vector<1x256xf32>
    %214 = vector.broadcast %213 : vector<1x256xf32> to vector<2x256xf32>
    %215 = arith.addf %211, %214 : vector<2x256xf32>
    %216 = vector.extract_strided_slice %215 {offsets = [0, 0], sizes = [2, 192], strides = [1, 1]} : vector<2x256xf32> to vector<2x192xf32>
    %217 = arith.negf %216 : vector<2x192xf32>
    %218 = math.exp %217 : vector<2x192xf32>
    %cst_161 = arith.constant 1.000000e+00 : f32
    %219 = vector.broadcast %cst_161 : f32 to vector<2x192xf32>
    %220 = arith.addf %219, %218 : vector<2x192xf32>
    %221 = arith.divf %219, %220 : vector<2x192xf32>
    %222 = vector.extract_strided_slice %215 {offsets = [0, 192], sizes = [2, 64], strides = [1, 1]} : vector<2x256xf32> to vector<2x64xf32>
    %223 = math.tanh %222 : vector<2x64xf32>
    %224 = vector.extract_strided_slice %221 {offsets = [0, 0], sizes = [2, 64], strides = [1, 1]} : vector<2x192xf32> to vector<2x64xf32>
    %225 = vector.extract_strided_slice %221 {offsets = [0, 64], sizes = [2, 64], strides = [1, 1]} : vector<2x192xf32> to vector<2x64xf32>
    %226 = vector.extract_strided_slice %221 {offsets = [0, 128], sizes = [2, 64], strides = [1, 1]} : vector<2x192xf32> to vector<2x64xf32>
    %c1_162 = arith.constant 1 : index
    %c0_163 = arith.constant 0 : index
    %c0_164 = arith.constant 0 : index
    %227 = vector.load %arg11[%c1_162, %c0_163, %c0_164] : memref<2x2x64xf32, #tpu.memory_space<vmem>>, vector<1x2x64xf32>
    %228 = vector.shape_cast %227 : vector<1x2x64xf32> to vector<2x64xf32>
    %229 = arith.mulf %228, %224 : vector<2x64xf32>
    %230 = arith.mulf %223, %225 : vector<2x64xf32>
    %231 = arith.addf %229, %230 : vector<2x64xf32>
    %232 = math.tanh %231 : vector<2x64xf32>
    %233 = arith.mulf %232, %226 : vector<2x64xf32>
    %c1_165 = arith.constant 1 : index
    %c0_166 = arith.constant 0 : index
    %c0_167 = arith.constant 0 : index
    %234 = vector.load %arg10[%c1_165, %c0_166, %c0_167] : memref<2x2x64xf32, #tpu.memory_space<vmem>>, vector<1x2x64xf32>
    %235 = vector.shape_cast %234 : vector<1x2x64xf32> to vector<2x64xf32>
    %236 = vector.shape_cast %233 : vector<2x64xf32> to vector<1x2x64xf32>
    tpu.vector_store %arg10[%c1_165, %c0_166, %c0_167], %236 {strides = array<i32>} : memref<2x2x64xf32, #tpu.memory_space<vmem>>, vector<1x2x64xf32>,
    %c1_168 = arith.constant 1 : index
    %c0_169 = arith.constant 0 : index
    %c0_170 = arith.constant 0 : index
    %237 = vector.load %arg11[%c1_168, %c0_169, %c0_170] : memref<2x2x64xf32, #tpu.memory_space<vmem>>, vector<1x2x64xf32>
    %238 = vector.shape_cast %237 : vector<1x2x64xf32> to vector<2x64xf32>
    %239 = vector.shape_cast %231 : vector<2x64xf32> to vector<1x2x64xf32>
    tpu.vector_store %arg11[%c1_168, %c0_169, %c0_170], %239 {strides = array<i32>} : memref<2x2x64xf32, #tpu.memory_space<vmem>>, vector<1x2x64xf32>,
    %240 = arith.index_cast %c2_i32 : i32 to index
    %c0_171 = arith.constant 0 : index
    %c0_172 = arith.constant 0 : index
    %241 = vector.load %arg7[%240, %c0_171, %c0_172] : memref<8x2x64xf32, #tpu.memory_space<vmem>>, vector<1x2x64xf32>
    %242 = vector.shape_cast %241 : vector<1x2x64xf32> to vector<2x64xf32>
    %243 = vector.shape_cast %233 : vector<2x64xf32> to vector<1x2x64xf32>
    tpu.vector_store %arg7[%240, %c0_171, %c0_172], %243 {strides = array<i32>} : memref<8x2x64xf32, #tpu.memory_space<vmem>>, vector<1x2x64xf32>,
    %244 = arith.addf %164, %167 : vector<2x64xf32>
    %c3_i32 = arith.constant 3 : i32
    %245 = arith.index_cast %c3_i32 : i32 to index
    %c0_173 = arith.constant 0 : index
    %c0_174 = arith.constant 0 : index
    %246 = vector.load %arg1[%245, %c0_173, %c0_174] : memref<8x2x64xf32, #tpu.memory_space<vmem>>, vector<1x2x64xf32>
    %247 = vector.shape_cast %246 : vector<1x2x64xf32> to vector<2x64xf32>
    %c0_175 = arith.constant 0 : index
    %c0_176 = arith.constant 0 : index
    %248 = vector.load %arg12[%c0_175, %c0_176] : memref<2x128xf32, #tpu.memory_space<vmem>>, vector<2x64xf32>
    tpu.vector_store %arg12[%c0_175, %c0_176], %247 {strides = array<i32>} : memref<2x128xf32, #tpu.memory_space<vmem>>, vector<2x64xf32>,
    %c0_177 = arith.constant 0 : index
    %c0_178 = arith.constant 0 : index
    %c0_179 = arith.constant 0 : index
    %249 = vector.load %arg10[%c0_177, %c0_178, %c0_179] : memref<2x2x64xf32, #tpu.memory_space<vmem>>, vector<1x2x64xf32>
    %250 = vector.shape_cast %249 : vector<1x2x64xf32> to vector<2x64xf32>
    %c0_180 = arith.constant 0 : index
    %c64_181 = arith.constant 64 : index
    %251 = vector.load %arg12[%c0_180, %c64_181] : memref<2x128xf32, #tpu.memory_space<vmem>>, vector<2x64xf32>
    tpu.vector_store %arg12[%c0_180, %c64_181], %250 {strides = array<i32>} : memref<2x128xf32, #tpu.memory_space<vmem>>, vector<2x64xf32>,
    %c0_182 = arith.constant 0 : index
    %c0_183 = arith.constant 0 : index
    %252 = vector.load %arg12[%c0_182, %c0_183] : memref<2x128xf32, #tpu.memory_space<vmem>>, vector<2x128xf32>
    %c0_184 = arith.constant 0 : index
    %c0_185 = arith.constant 0 : index
    %c0_186 = arith.constant 0 : index
    %253 = vector.load %arg2[%c0_184, %c0_185, %c0_186] : memref<2x128x256xf32, #tpu.memory_space<vmem>>, vector<1x128x256xf32>
    %254 = vector.shape_cast %253 : vector<1x128x256xf32> to vector<128x256xf32>
    %cst_187 = arith.constant dense<0.000000e+00> : vector<2x256xf32>
    %255 = tpu.matmul %252, %254, %cst_187 {dimension_numbers = #tpu.dot_dimension_numbers<[1], [0], [0], [1], [0, 0, 1, 1], [], []>} : vector<2x128xf32>, vector<128x256xf32>, vector<2x256xf32> -> vector<2x256xf32>
    %c0_188 = arith.constant 0 : index
    %c0_189 = arith.constant 0 : index
    %c0_190 = arith.constant 0 : index
    %256 = vector.load %arg3[%c0_188, %c0_189, %c0_190] : memref<2x1x256xf32, #tpu.memory_space<vmem>>, vector<1x1x256xf32>
    %257 = vector.shape_cast %256 : vector<1x1x256xf32> to vector<1x256xf32>
    %258 = vector.broadcast %257 : vector<1x256xf32> to vector<2x256xf32>
    %259 = arith.addf %255, %258 : vector<2x256xf32>
    %260 = vector.extract_strided_slice %259 {offsets = [0, 0], sizes = [2, 192], strides = [1, 1]} : vector<2x256xf32> to vector<2x192xf32>
    %261 = arith.negf %260 : vector<2x192xf32>
    %262 = math.exp %261 : vector<2x192xf32>
    %cst_191 = arith.constant 1.000000e+00 : f32
    %263 = vector.broadcast %cst_191 : f32 to vector<2x192xf32>
    %264 = arith.addf %263, %262 : vector<2x192xf32>
    %265 = arith.divf %263, %264 : vector<2x192xf32>
    %266 = vector.extract_strided_slice %259 {offsets = [0, 192], sizes = [2, 64], strides = [1, 1]} : vector<2x256xf32> to vector<2x64xf32>
    %267 = math.tanh %266 : vector<2x64xf32>
    %268 = vector.extract_strided_slice %265 {offsets = [0, 0], sizes = [2, 64], strides = [1, 1]} : vector<2x192xf32> to vector<2x64xf32>
    %269 = vector.extract_strided_slice %265 {offsets = [0, 64], sizes = [2, 64], strides = [1, 1]} : vector<2x192xf32> to vector<2x64xf32>
    %270 = vector.extract_strided_slice %265 {offsets = [0, 128], sizes = [2, 64], strides = [1, 1]} : vector<2x192xf32> to vector<2x64xf32>
    %c0_192 = arith.constant 0 : index
    %c0_193 = arith.constant 0 : index
    %c0_194 = arith.constant 0 : index
    %271 = vector.load %arg11[%c0_192, %c0_193, %c0_194] : memref<2x2x64xf32, #tpu.memory_space<vmem>>, vector<1x2x64xf32>
    %272 = vector.shape_cast %271 : vector<1x2x64xf32> to vector<2x64xf32>
    %273 = arith.mulf %272, %268 : vector<2x64xf32>
    %274 = arith.mulf %267, %269 : vector<2x64xf32>
    %275 = arith.addf %273, %274 : vector<2x64xf32>
    %276 = math.tanh %275 : vector<2x64xf32>
    %277 = arith.mulf %276, %270 : vector<2x64xf32>
    %c0_195 = arith.constant 0 : index
    %c0_196 = arith.constant 0 : index
    %c0_197 = arith.constant 0 : index
    %278 = vector.load %arg10[%c0_195, %c0_196, %c0_197] : memref<2x2x64xf32, #tpu.memory_space<vmem>>, vector<1x2x64xf32>
    %279 = vector.shape_cast %278 : vector<1x2x64xf32> to vector<2x64xf32>
    %280 = vector.shape_cast %277 : vector<2x64xf32> to vector<1x2x64xf32>
    tpu.vector_store %arg10[%c0_195, %c0_196, %c0_197], %280 {strides = array<i32>} : memref<2x2x64xf32, #tpu.memory_space<vmem>>, vector<1x2x64xf32>,
    %c0_198 = arith.constant 0 : index
    %c0_199 = arith.constant 0 : index
    %c0_200 = arith.constant 0 : index
    %281 = vector.load %arg11[%c0_198, %c0_199, %c0_200] : memref<2x2x64xf32, #tpu.memory_space<vmem>>, vector<1x2x64xf32>
    %282 = vector.shape_cast %281 : vector<1x2x64xf32> to vector<2x64xf32>
    %283 = vector.shape_cast %275 : vector<2x64xf32> to vector<1x2x64xf32>
    tpu.vector_store %arg11[%c0_198, %c0_199, %c0_200], %283 {strides = array<i32>} : memref<2x2x64xf32, #tpu.memory_space<vmem>>, vector<1x2x64xf32>,
    %c0_201 = arith.constant 0 : index
    %c0_202 = arith.constant 0 : index
    %284 = vector.load %arg12[%c0_201, %c0_202] : memref<2x128xf32, #tpu.memory_space<vmem>>, vector<2x64xf32>
    tpu.vector_store %arg12[%c0_201, %c0_202], %277 {strides = array<i32>} : memref<2x128xf32, #tpu.memory_space<vmem>>, vector<2x64xf32>,
    %c1_203 = arith.constant 1 : index
    %c0_204 = arith.constant 0 : index
    %c0_205 = arith.constant 0 : index
    %285 = vector.load %arg10[%c1_203, %c0_204, %c0_205] : memref<2x2x64xf32, #tpu.memory_space<vmem>>, vector<1x2x64xf32>
    %286 = vector.shape_cast %285 : vector<1x2x64xf32> to vector<2x64xf32>
    %c0_206 = arith.constant 0 : index
    %c64_207 = arith.constant 64 : index
    %287 = vector.load %arg12[%c0_206, %c64_207] : memref<2x128xf32, #tpu.memory_space<vmem>>, vector<2x64xf32>
    tpu.vector_store %arg12[%c0_206, %c64_207], %286 {strides = array<i32>} : memref<2x128xf32, #tpu.memory_space<vmem>>, vector<2x64xf32>,
    %c0_208 = arith.constant 0 : index
    %c0_209 = arith.constant 0 : index
    %288 = vector.load %arg12[%c0_208, %c0_209] : memref<2x128xf32, #tpu.memory_space<vmem>>, vector<2x128xf32>
    %c1_210 = arith.constant 1 : index
    %c0_211 = arith.constant 0 : index
    %c0_212 = arith.constant 0 : index
    %289 = vector.load %arg2[%c1_210, %c0_211, %c0_212] : memref<2x128x256xf32, #tpu.memory_space<vmem>>, vector<1x128x256xf32>
    %290 = vector.shape_cast %289 : vector<1x128x256xf32> to vector<128x256xf32>
    %cst_213 = arith.constant dense<0.000000e+00> : vector<2x256xf32>
    %291 = tpu.matmul %288, %290, %cst_213 {dimension_numbers = #tpu.dot_dimension_numbers<[1], [0], [0], [1], [0, 0, 1, 1], [], []>} : vector<2x128xf32>, vector<128x256xf32>, vector<2x256xf32> -> vector<2x256xf32>
    %c1_214 = arith.constant 1 : index
    %c0_215 = arith.constant 0 : index
    %c0_216 = arith.constant 0 : index
    %292 = vector.load %arg3[%c1_214, %c0_215, %c0_216] : memref<2x1x256xf32, #tpu.memory_space<vmem>>, vector<1x1x256xf32>
    %293 = vector.shape_cast %292 : vector<1x1x256xf32> to vector<1x256xf32>
    %294 = vector.broadcast %293 : vector<1x256xf32> to vector<2x256xf32>
    %295 = arith.addf %291, %294 : vector<2x256xf32>
    %296 = vector.extract_strided_slice %295 {offsets = [0, 0], sizes = [2, 192], strides = [1, 1]} : vector<2x256xf32> to vector<2x192xf32>
    %297 = arith.negf %296 : vector<2x192xf32>
    %298 = math.exp %297 : vector<2x192xf32>
    %cst_217 = arith.constant 1.000000e+00 : f32
    %299 = vector.broadcast %cst_217 : f32 to vector<2x192xf32>
    %300 = arith.addf %299, %298 : vector<2x192xf32>
    %301 = arith.divf %299, %300 : vector<2x192xf32>
    %302 = vector.extract_strided_slice %295 {offsets = [0, 192], sizes = [2, 64], strides = [1, 1]} : vector<2x256xf32> to vector<2x64xf32>
    %303 = math.tanh %302 : vector<2x64xf32>
    %304 = vector.extract_strided_slice %301 {offsets = [0, 0], sizes = [2, 64], strides = [1, 1]} : vector<2x192xf32> to vector<2x64xf32>
    %305 = vector.extract_strided_slice %301 {offsets = [0, 64], sizes = [2, 64], strides = [1, 1]} : vector<2x192xf32> to vector<2x64xf32>
    %306 = vector.extract_strided_slice %301 {offsets = [0, 128], sizes = [2, 64], strides = [1, 1]} : vector<2x192xf32> to vector<2x64xf32>
    %c1_218 = arith.constant 1 : index
    %c0_219 = arith.constant 0 : index
    %c0_220 = arith.constant 0 : index
    %307 = vector.load %arg11[%c1_218, %c0_219, %c0_220] : memref<2x2x64xf32, #tpu.memory_space<vmem>>, vector<1x2x64xf32>
    %308 = vector.shape_cast %307 : vector<1x2x64xf32> to vector<2x64xf32>
    %309 = arith.mulf %308, %304 : vector<2x64xf32>
    %310 = arith.mulf %303, %305 : vector<2x64xf32>
    %311 = arith.addf %309, %310 : vector<2x64xf32>
    %312 = math.tanh %311 : vector<2x64xf32>
    %313 = arith.mulf %312, %306 : vector<2x64xf32>
    %c1_221 = arith.constant 1 : index
    %c0_222 = arith.constant 0 : index
    %c0_223 = arith.constant 0 : index
    %314 = vector.load %arg10[%c1_221, %c0_222, %c0_223] : memref<2x2x64xf32, #tpu.memory_space<vmem>>, vector<1x2x64xf32>
    %315 = vector.shape_cast %314 : vector<1x2x64xf32> to vector<2x64xf32>
    %316 = vector.shape_cast %313 : vector<2x64xf32> to vector<1x2x64xf32>
    tpu.vector_store %arg10[%c1_221, %c0_222, %c0_223], %316 {strides = array<i32>} : memref<2x2x64xf32, #tpu.memory_space<vmem>>, vector<1x2x64xf32>,
    %c1_224 = arith.constant 1 : index
    %c0_225 = arith.constant 0 : index
    %c0_226 = arith.constant 0 : index
    %317 = vector.load %arg11[%c1_224, %c0_225, %c0_226] : memref<2x2x64xf32, #tpu.memory_space<vmem>>, vector<1x2x64xf32>
    %318 = vector.shape_cast %317 : vector<1x2x64xf32> to vector<2x64xf32>
    %319 = vector.shape_cast %311 : vector<2x64xf32> to vector<1x2x64xf32>
    tpu.vector_store %arg11[%c1_224, %c0_225, %c0_226], %319 {strides = array<i32>} : memref<2x2x64xf32, #tpu.memory_space<vmem>>, vector<1x2x64xf32>,
    %320 = arith.index_cast %c3_i32 : i32 to index
    %c0_227 = arith.constant 0 : index
    %c0_228 = arith.constant 0 : index
    %321 = vector.load %arg7[%320, %c0_227, %c0_228] : memref<8x2x64xf32, #tpu.memory_space<vmem>>, vector<1x2x64xf32>
    %322 = vector.shape_cast %321 : vector<1x2x64xf32> to vector<2x64xf32>
    %323 = vector.shape_cast %313 : vector<2x64xf32> to vector<1x2x64xf32>
    tpu.vector_store %arg7[%320, %c0_227, %c0_228], %323 {strides = array<i32>} : memref<8x2x64xf32, #tpu.memory_space<vmem>>, vector<1x2x64xf32>,
    %324 = arith.addf %244, %247 : vector<2x64xf32>
    %c4_i32 = arith.constant 4 : i32
    %325 = arith.index_cast %c4_i32 : i32 to index
    %c0_229 = arith.constant 0 : index
    %c0_230 = arith.constant 0 : index
    %326 = vector.load %arg1[%325, %c0_229, %c0_230] : memref<8x2x64xf32, #tpu.memory_space<vmem>>, vector<1x2x64xf32>
    %327 = vector.shape_cast %326 : vector<1x2x64xf32> to vector<2x64xf32>
    %c0_231 = arith.constant 0 : index
    %c0_232 = arith.constant 0 : index
    %328 = vector.load %arg12[%c0_231, %c0_232] : memref<2x128xf32, #tpu.memory_space<vmem>>, vector<2x64xf32>
    tpu.vector_store %arg12[%c0_231, %c0_232], %327 {strides = array<i32>} : memref<2x128xf32, #tpu.memory_space<vmem>>, vector<2x64xf32>,
    %c0_233 = arith.constant 0 : index
    %c0_234 = arith.constant 0 : index
    %c0_235 = arith.constant 0 : index
    %329 = vector.load %arg10[%c0_233, %c0_234, %c0_235] : memref<2x2x64xf32, #tpu.memory_space<vmem>>, vector<1x2x64xf32>
    %330 = vector.shape_cast %329 : vector<1x2x64xf32> to vector<2x64xf32>
    %c0_236 = arith.constant 0 : index
    %c64_237 = arith.constant 64 : index
    %331 = vector.load %arg12[%c0_236, %c64_237] : memref<2x128xf32, #tpu.memory_space<vmem>>, vector<2x64xf32>
    tpu.vector_store %arg12[%c0_236, %c64_237], %330 {strides = array<i32>} : memref<2x128xf32, #tpu.memory_space<vmem>>, vector<2x64xf32>,
    %c0_238 = arith.constant 0 : index
    %c0_239 = arith.constant 0 : index
    %332 = vector.load %arg12[%c0_238, %c0_239] : memref<2x128xf32, #tpu.memory_space<vmem>>, vector<2x128xf32>
    %c0_240 = arith.constant 0 : index
    %c0_241 = arith.constant 0 : index
    %c0_242 = arith.constant 0 : index
    %333 = vector.load %arg2[%c0_240, %c0_241, %c0_242] : memref<2x128x256xf32, #tpu.memory_space<vmem>>, vector<1x128x256xf32>
    %334 = vector.shape_cast %333 : vector<1x128x256xf32> to vector<128x256xf32>
    %cst_243 = arith.constant dense<0.000000e+00> : vector<2x256xf32>
    %335 = tpu.matmul %332, %334, %cst_243 {dimension_numbers = #tpu.dot_dimension_numbers<[1], [0], [0], [1], [0, 0, 1, 1], [], []>} : vector<2x128xf32>, vector<128x256xf32>, vector<2x256xf32> -> vector<2x256xf32>
    %c0_244 = arith.constant 0 : index
    %c0_245 = arith.constant 0 : index
    %c0_246 = arith.constant 0 : index
    %336 = vector.load %arg3[%c0_244, %c0_245, %c0_246] : memref<2x1x256xf32, #tpu.memory_space<vmem>>, vector<1x1x256xf32>
    %337 = vector.shape_cast %336 : vector<1x1x256xf32> to vector<1x256xf32>
    %338 = vector.broadcast %337 : vector<1x256xf32> to vector<2x256xf32>
    %339 = arith.addf %335, %338 : vector<2x256xf32>
    %340 = vector.extract_strided_slice %339 {offsets = [0, 0], sizes = [2, 192], strides = [1, 1]} : vector<2x256xf32> to vector<2x192xf32>
    %341 = arith.negf %340 : vector<2x192xf32>
    %342 = math.exp %341 : vector<2x192xf32>
    %cst_247 = arith.constant 1.000000e+00 : f32
    %343 = vector.broadcast %cst_247 : f32 to vector<2x192xf32>
    %344 = arith.addf %343, %342 : vector<2x192xf32>
    %345 = arith.divf %343, %344 : vector<2x192xf32>
    %346 = vector.extract_strided_slice %339 {offsets = [0, 192], sizes = [2, 64], strides = [1, 1]} : vector<2x256xf32> to vector<2x64xf32>
    %347 = math.tanh %346 : vector<2x64xf32>
    %348 = vector.extract_strided_slice %345 {offsets = [0, 0], sizes = [2, 64], strides = [1, 1]} : vector<2x192xf32> to vector<2x64xf32>
    %349 = vector.extract_strided_slice %345 {offsets = [0, 64], sizes = [2, 64], strides = [1, 1]} : vector<2x192xf32> to vector<2x64xf32>
    %350 = vector.extract_strided_slice %345 {offsets = [0, 128], sizes = [2, 64], strides = [1, 1]} : vector<2x192xf32> to vector<2x64xf32>
    %c0_248 = arith.constant 0 : index
    %c0_249 = arith.constant 0 : index
    %c0_250 = arith.constant 0 : index
    %351 = vector.load %arg11[%c0_248, %c0_249, %c0_250] : memref<2x2x64xf32, #tpu.memory_space<vmem>>, vector<1x2x64xf32>
    %352 = vector.shape_cast %351 : vector<1x2x64xf32> to vector<2x64xf32>
    %353 = arith.mulf %352, %348 : vector<2x64xf32>
    %354 = arith.mulf %347, %349 : vector<2x64xf32>
    %355 = arith.addf %353, %354 : vector<2x64xf32>
    %356 = math.tanh %355 : vector<2x64xf32>
    %357 = arith.mulf %356, %350 : vector<2x64xf32>
    %c0_251 = arith.constant 0 : index
    %c0_252 = arith.constant 0 : index
    %c0_253 = arith.constant 0 : index
    %358 = vector.load %arg10[%c0_251, %c0_252, %c0_253] : memref<2x2x64xf32, #tpu.memory_space<vmem>>, vector<1x2x64xf32>
    %359 = vector.shape_cast %358 : vector<1x2x64xf32> to vector<2x64xf32>
    %360 = vector.shape_cast %357 : vector<2x64xf32> to vector<1x2x64xf32>
    tpu.vector_store %arg10[%c0_251, %c0_252, %c0_253], %360 {strides = array<i32>} : memref<2x2x64xf32, #tpu.memory_space<vmem>>, vector<1x2x64xf32>,
    %c0_254 = arith.constant 0 : index
    %c0_255 = arith.constant 0 : index
    %c0_256 = arith.constant 0 : index
    %361 = vector.load %arg11[%c0_254, %c0_255, %c0_256] : memref<2x2x64xf32, #tpu.memory_space<vmem>>, vector<1x2x64xf32>
    %362 = vector.shape_cast %361 : vector<1x2x64xf32> to vector<2x64xf32>
    %363 = vector.shape_cast %355 : vector<2x64xf32> to vector<1x2x64xf32>
    tpu.vector_store %arg11[%c0_254, %c0_255, %c0_256], %363 {strides = array<i32>} : memref<2x2x64xf32, #tpu.memory_space<vmem>>, vector<1x2x64xf32>,
    %c0_257 = arith.constant 0 : index
    %c0_258 = arith.constant 0 : index
    %364 = vector.load %arg12[%c0_257, %c0_258] : memref<2x128xf32, #tpu.memory_space<vmem>>, vector<2x64xf32>
    tpu.vector_store %arg12[%c0_257, %c0_258], %357 {strides = array<i32>} : memref<2x128xf32, #tpu.memory_space<vmem>>, vector<2x64xf32>,
    %c1_259 = arith.constant 1 : index
    %c0_260 = arith.constant 0 : index
    %c0_261 = arith.constant 0 : index
    %365 = vector.load %arg10[%c1_259, %c0_260, %c0_261] : memref<2x2x64xf32, #tpu.memory_space<vmem>>, vector<1x2x64xf32>
    %366 = vector.shape_cast %365 : vector<1x2x64xf32> to vector<2x64xf32>
    %c0_262 = arith.constant 0 : index
    %c64_263 = arith.constant 64 : index
    %367 = vector.load %arg12[%c0_262, %c64_263] : memref<2x128xf32, #tpu.memory_space<vmem>>, vector<2x64xf32>
    tpu.vector_store %arg12[%c0_262, %c64_263], %366 {strides = array<i32>} : memref<2x128xf32, #tpu.memory_space<vmem>>, vector<2x64xf32>,
    %c0_264 = arith.constant 0 : index
    %c0_265 = arith.constant 0 : index
    %368 = vector.load %arg12[%c0_264, %c0_265] : memref<2x128xf32, #tpu.memory_space<vmem>>, vector<2x128xf32>
    %c1_266 = arith.constant 1 : index
    %c0_267 = arith.constant 0 : index
    %c0_268 = arith.constant 0 : index
    %369 = vector.load %arg2[%c1_266, %c0_267, %c0_268] : memref<2x128x256xf32, #tpu.memory_space<vmem>>, vector<1x128x256xf32>
    %370 = vector.shape_cast %369 : vector<1x128x256xf32> to vector<128x256xf32>
    %cst_269 = arith.constant dense<0.000000e+00> : vector<2x256xf32>
    %371 = tpu.matmul %368, %370, %cst_269 {dimension_numbers = #tpu.dot_dimension_numbers<[1], [0], [0], [1], [0, 0, 1, 1], [], []>} : vector<2x128xf32>, vector<128x256xf32>, vector<2x256xf32> -> vector<2x256xf32>
    %c1_270 = arith.constant 1 : index
    %c0_271 = arith.constant 0 : index
    %c0_272 = arith.constant 0 : index
    %372 = vector.load %arg3[%c1_270, %c0_271, %c0_272] : memref<2x1x256xf32, #tpu.memory_space<vmem>>, vector<1x1x256xf32>
    %373 = vector.shape_cast %372 : vector<1x1x256xf32> to vector<1x256xf32>
    %374 = vector.broadcast %373 : vector<1x256xf32> to vector<2x256xf32>
    %375 = arith.addf %371, %374 : vector<2x256xf32>
    %376 = vector.extract_strided_slice %375 {offsets = [0, 0], sizes = [2, 192], strides = [1, 1]} : vector<2x256xf32> to vector<2x192xf32>
    %377 = arith.negf %376 : vector<2x192xf32>
    %378 = math.exp %377 : vector<2x192xf32>
    %cst_273 = arith.constant 1.000000e+00 : f32
    %379 = vector.broadcast %cst_273 : f32 to vector<2x192xf32>
    %380 = arith.addf %379, %378 : vector<2x192xf32>
    %381 = arith.divf %379, %380 : vector<2x192xf32>
    %382 = vector.extract_strided_slice %375 {offsets = [0, 192], sizes = [2, 64], strides = [1, 1]} : vector<2x256xf32> to vector<2x64xf32>
    %383 = math.tanh %382 : vector<2x64xf32>
    %384 = vector.extract_strided_slice %381 {offsets = [0, 0], sizes = [2, 64], strides = [1, 1]} : vector<2x192xf32> to vector<2x64xf32>
    %385 = vector.extract_strided_slice %381 {offsets = [0, 64], sizes = [2, 64], strides = [1, 1]} : vector<2x192xf32> to vector<2x64xf32>
    %386 = vector.extract_strided_slice %381 {offsets = [0, 128], sizes = [2, 64], strides = [1, 1]} : vector<2x192xf32> to vector<2x64xf32>
    %c1_274 = arith.constant 1 : index
    %c0_275 = arith.constant 0 : index
    %c0_276 = arith.constant 0 : index
    %387 = vector.load %arg11[%c1_274, %c0_275, %c0_276] : memref<2x2x64xf32, #tpu.memory_space<vmem>>, vector<1x2x64xf32>
    %388 = vector.shape_cast %387 : vector<1x2x64xf32> to vector<2x64xf32>
    %389 = arith.mulf %388, %384 : vector<2x64xf32>
    %390 = arith.mulf %383, %385 : vector<2x64xf32>
    %391 = arith.addf %389, %390 : vector<2x64xf32>
    %392 = math.tanh %391 : vector<2x64xf32>
    %393 = arith.mulf %392, %386 : vector<2x64xf32>
    %c1_277 = arith.constant 1 : index
    %c0_278 = arith.constant 0 : index
    %c0_279 = arith.constant 0 : index
    %394 = vector.load %arg10[%c1_277, %c0_278, %c0_279] : memref<2x2x64xf32, #tpu.memory_space<vmem>>, vector<1x2x64xf32>
    %395 = vector.shape_cast %394 : vector<1x2x64xf32> to vector<2x64xf32>
    %396 = vector.shape_cast %393 : vector<2x64xf32> to vector<1x2x64xf32>
    tpu.vector_store %arg10[%c1_277, %c0_278, %c0_279], %396 {strides = array<i32>} : memref<2x2x64xf32, #tpu.memory_space<vmem>>, vector<1x2x64xf32>,
    %c1_280 = arith.constant 1 : index
    %c0_281 = arith.constant 0 : index
    %c0_282 = arith.constant 0 : index
    %397 = vector.load %arg11[%c1_280, %c0_281, %c0_282] : memref<2x2x64xf32, #tpu.memory_space<vmem>>, vector<1x2x64xf32>
    %398 = vector.shape_cast %397 : vector<1x2x64xf32> to vector<2x64xf32>
    %399 = vector.shape_cast %391 : vector<2x64xf32> to vector<1x2x64xf32>
    tpu.vector_store %arg11[%c1_280, %c0_281, %c0_282], %399 {strides = array<i32>} : memref<2x2x64xf32, #tpu.memory_space<vmem>>, vector<1x2x64xf32>,
    %400 = arith.index_cast %c4_i32 : i32 to index
    %c0_283 = arith.constant 0 : index
    %c0_284 = arith.constant 0 : index
    %401 = vector.load %arg7[%400, %c0_283, %c0_284] : memref<8x2x64xf32, #tpu.memory_space<vmem>>, vector<1x2x64xf32>
    %402 = vector.shape_cast %401 : vector<1x2x64xf32> to vector<2x64xf32>
    %403 = vector.shape_cast %393 : vector<2x64xf32> to vector<1x2x64xf32>
    tpu.vector_store %arg7[%400, %c0_283, %c0_284], %403 {strides = array<i32>} : memref<8x2x64xf32, #tpu.memory_space<vmem>>, vector<1x2x64xf32>,
    %404 = arith.addf %324, %327 : vector<2x64xf32>
    %c5_i32 = arith.constant 5 : i32
    %405 = arith.index_cast %c5_i32 : i32 to index
    %c0_285 = arith.constant 0 : index
    %c0_286 = arith.constant 0 : index
    %406 = vector.load %arg1[%405, %c0_285, %c0_286] : memref<8x2x64xf32, #tpu.memory_space<vmem>>, vector<1x2x64xf32>
    %407 = vector.shape_cast %406 : vector<1x2x64xf32> to vector<2x64xf32>
    %c0_287 = arith.constant 0 : index
    %c0_288 = arith.constant 0 : index
    %408 = vector.load %arg12[%c0_287, %c0_288] : memref<2x128xf32, #tpu.memory_space<vmem>>, vector<2x64xf32>
    tpu.vector_store %arg12[%c0_287, %c0_288], %407 {strides = array<i32>} : memref<2x128xf32, #tpu.memory_space<vmem>>, vector<2x64xf32>,
    %c0_289 = arith.constant 0 : index
    %c0_290 = arith.constant 0 : index
    %c0_291 = arith.constant 0 : index
    %409 = vector.load %arg10[%c0_289, %c0_290, %c0_291] : memref<2x2x64xf32, #tpu.memory_space<vmem>>, vector<1x2x64xf32>
    %410 = vector.shape_cast %409 : vector<1x2x64xf32> to vector<2x64xf32>
    %c0_292 = arith.constant 0 : index
    %c64_293 = arith.constant 64 : index
    %411 = vector.load %arg12[%c0_292, %c64_293] : memref<2x128xf32, #tpu.memory_space<vmem>>, vector<2x64xf32>
    tpu.vector_store %arg12[%c0_292, %c64_293], %410 {strides = array<i32>} : memref<2x128xf32, #tpu.memory_space<vmem>>, vector<2x64xf32>,
    %c0_294 = arith.constant 0 : index
    %c0_295 = arith.constant 0 : index
    %412 = vector.load %arg12[%c0_294, %c0_295] : memref<2x128xf32, #tpu.memory_space<vmem>>, vector<2x128xf32>
    %c0_296 = arith.constant 0 : index
    %c0_297 = arith.constant 0 : index
    %c0_298 = arith.constant 0 : index
    %413 = vector.load %arg2[%c0_296, %c0_297, %c0_298] : memref<2x128x256xf32, #tpu.memory_space<vmem>>, vector<1x128x256xf32>
    %414 = vector.shape_cast %413 : vector<1x128x256xf32> to vector<128x256xf32>
    %cst_299 = arith.constant dense<0.000000e+00> : vector<2x256xf32>
    %415 = tpu.matmul %412, %414, %cst_299 {dimension_numbers = #tpu.dot_dimension_numbers<[1], [0], [0], [1], [0, 0, 1, 1], [], []>} : vector<2x128xf32>, vector<128x256xf32>, vector<2x256xf32> -> vector<2x256xf32>
    %c0_300 = arith.constant 0 : index
    %c0_301 = arith.constant 0 : index
    %c0_302 = arith.constant 0 : index
    %416 = vector.load %arg3[%c0_300, %c0_301, %c0_302] : memref<2x1x256xf32, #tpu.memory_space<vmem>>, vector<1x1x256xf32>
    %417 = vector.shape_cast %416 : vector<1x1x256xf32> to vector<1x256xf32>
    %418 = vector.broadcast %417 : vector<1x256xf32> to vector<2x256xf32>
    %419 = arith.addf %415, %418 : vector<2x256xf32>
    %420 = vector.extract_strided_slice %419 {offsets = [0, 0], sizes = [2, 192], strides = [1, 1]} : vector<2x256xf32> to vector<2x192xf32>
    %421 = arith.negf %420 : vector<2x192xf32>
    %422 = math.exp %421 : vector<2x192xf32>
    %cst_303 = arith.constant 1.000000e+00 : f32
    %423 = vector.broadcast %cst_303 : f32 to vector<2x192xf32>
    %424 = arith.addf %423, %422 : vector<2x192xf32>
    %425 = arith.divf %423, %424 : vector<2x192xf32>
    %426 = vector.extract_strided_slice %419 {offsets = [0, 192], sizes = [2, 64], strides = [1, 1]} : vector<2x256xf32> to vector<2x64xf32>
    %427 = math.tanh %426 : vector<2x64xf32>
    %428 = vector.extract_strided_slice %425 {offsets = [0, 0], sizes = [2, 64], strides = [1, 1]} : vector<2x192xf32> to vector<2x64xf32>
    %429 = vector.extract_strided_slice %425 {offsets = [0, 64], sizes = [2, 64], strides = [1, 1]} : vector<2x192xf32> to vector<2x64xf32>
    %430 = vector.extract_strided_slice %425 {offsets = [0, 128], sizes = [2, 64], strides = [1, 1]} : vector<2x192xf32> to vector<2x64xf32>
    %c0_304 = arith.constant 0 : index
    %c0_305 = arith.constant 0 : index
    %c0_306 = arith.constant 0 : index
    %431 = vector.load %arg11[%c0_304, %c0_305, %c0_306] : memref<2x2x64xf32, #tpu.memory_space<vmem>>, vector<1x2x64xf32>
    %432 = vector.shape_cast %431 : vector<1x2x64xf32> to vector<2x64xf32>
    %433 = arith.mulf %432, %428 : vector<2x64xf32>
    %434 = arith.mulf %427, %429 : vector<2x64xf32>
    %435 = arith.addf %433, %434 : vector<2x64xf32>
    %436 = math.tanh %435 : vector<2x64xf32>
    %437 = arith.mulf %436, %430 : vector<2x64xf32>
    %c0_307 = arith.constant 0 : index
    %c0_308 = arith.constant 0 : index
    %c0_309 = arith.constant 0 : index
    %438 = vector.load %arg10[%c0_307, %c0_308, %c0_309] : memref<2x2x64xf32, #tpu.memory_space<vmem>>, vector<1x2x64xf32>
    %439 = vector.shape_cast %438 : vector<1x2x64xf32> to vector<2x64xf32>
    %440 = vector.shape_cast %437 : vector<2x64xf32> to vector<1x2x64xf32>
    tpu.vector_store %arg10[%c0_307, %c0_308, %c0_309], %440 {strides = array<i32>} : memref<2x2x64xf32, #tpu.memory_space<vmem>>, vector<1x2x64xf32>,
    %c0_310 = arith.constant 0 : index
    %c0_311 = arith.constant 0 : index
    %c0_312 = arith.constant 0 : index
    %441 = vector.load %arg11[%c0_310, %c0_311, %c0_312] : memref<2x2x64xf32, #tpu.memory_space<vmem>>, vector<1x2x64xf32>
    %442 = vector.shape_cast %441 : vector<1x2x64xf32> to vector<2x64xf32>
    %443 = vector.shape_cast %435 : vector<2x64xf32> to vector<1x2x64xf32>
    tpu.vector_store %arg11[%c0_310, %c0_311, %c0_312], %443 {strides = array<i32>} : memref<2x2x64xf32, #tpu.memory_space<vmem>>, vector<1x2x64xf32>,
    %c0_313 = arith.constant 0 : index
    %c0_314 = arith.constant 0 : index
    %444 = vector.load %arg12[%c0_313, %c0_314] : memref<2x128xf32, #tpu.memory_space<vmem>>, vector<2x64xf32>
    tpu.vector_store %arg12[%c0_313, %c0_314], %437 {strides = array<i32>} : memref<2x128xf32, #tpu.memory_space<vmem>>, vector<2x64xf32>,
    %c1_315 = arith.constant 1 : index
    %c0_316 = arith.constant 0 : index
    %c0_317 = arith.constant 0 : index
    %445 = vector.load %arg10[%c1_315, %c0_316, %c0_317] : memref<2x2x64xf32, #tpu.memory_space<vmem>>, vector<1x2x64xf32>
    %446 = vector.shape_cast %445 : vector<1x2x64xf32> to vector<2x64xf32>
    %c0_318 = arith.constant 0 : index
    %c64_319 = arith.constant 64 : index
    %447 = vector.load %arg12[%c0_318, %c64_319] : memref<2x128xf32, #tpu.memory_space<vmem>>, vector<2x64xf32>
    tpu.vector_store %arg12[%c0_318, %c64_319], %446 {strides = array<i32>} : memref<2x128xf32, #tpu.memory_space<vmem>>, vector<2x64xf32>,
    %c0_320 = arith.constant 0 : index
    %c0_321 = arith.constant 0 : index
    %448 = vector.load %arg12[%c0_320, %c0_321] : memref<2x128xf32, #tpu.memory_space<vmem>>, vector<2x128xf32>
    %c1_322 = arith.constant 1 : index
    %c0_323 = arith.constant 0 : index
    %c0_324 = arith.constant 0 : index
    %449 = vector.load %arg2[%c1_322, %c0_323, %c0_324] : memref<2x128x256xf32, #tpu.memory_space<vmem>>, vector<1x128x256xf32>
    %450 = vector.shape_cast %449 : vector<1x128x256xf32> to vector<128x256xf32>
    %cst_325 = arith.constant dense<0.000000e+00> : vector<2x256xf32>
    %451 = tpu.matmul %448, %450, %cst_325 {dimension_numbers = #tpu.dot_dimension_numbers<[1], [0], [0], [1], [0, 0, 1, 1], [], []>} : vector<2x128xf32>, vector<128x256xf32>, vector<2x256xf32> -> vector<2x256xf32>
    %c1_326 = arith.constant 1 : index
    %c0_327 = arith.constant 0 : index
    %c0_328 = arith.constant 0 : index
    %452 = vector.load %arg3[%c1_326, %c0_327, %c0_328] : memref<2x1x256xf32, #tpu.memory_space<vmem>>, vector<1x1x256xf32>
    %453 = vector.shape_cast %452 : vector<1x1x256xf32> to vector<1x256xf32>
    %454 = vector.broadcast %453 : vector<1x256xf32> to vector<2x256xf32>
    %455 = arith.addf %451, %454 : vector<2x256xf32>
    %456 = vector.extract_strided_slice %455 {offsets = [0, 0], sizes = [2, 192], strides = [1, 1]} : vector<2x256xf32> to vector<2x192xf32>
    %457 = arith.negf %456 : vector<2x192xf32>
    %458 = math.exp %457 : vector<2x192xf32>
    %cst_329 = arith.constant 1.000000e+00 : f32
    %459 = vector.broadcast %cst_329 : f32 to vector<2x192xf32>
    %460 = arith.addf %459, %458 : vector<2x192xf32>
    %461 = arith.divf %459, %460 : vector<2x192xf32>
    %462 = vector.extract_strided_slice %455 {offsets = [0, 192], sizes = [2, 64], strides = [1, 1]} : vector<2x256xf32> to vector<2x64xf32>
    %463 = math.tanh %462 : vector<2x64xf32>
    %464 = vector.extract_strided_slice %461 {offsets = [0, 0], sizes = [2, 64], strides = [1, 1]} : vector<2x192xf32> to vector<2x64xf32>
    %465 = vector.extract_strided_slice %461 {offsets = [0, 64], sizes = [2, 64], strides = [1, 1]} : vector<2x192xf32> to vector<2x64xf32>
    %466 = vector.extract_strided_slice %461 {offsets = [0, 128], sizes = [2, 64], strides = [1, 1]} : vector<2x192xf32> to vector<2x64xf32>
    %c1_330 = arith.constant 1 : index
    %c0_331 = arith.constant 0 : index
    %c0_332 = arith.constant 0 : index
    %467 = vector.load %arg11[%c1_330, %c0_331, %c0_332] : memref<2x2x64xf32, #tpu.memory_space<vmem>>, vector<1x2x64xf32>
    %468 = vector.shape_cast %467 : vector<1x2x64xf32> to vector<2x64xf32>
    %469 = arith.mulf %468, %464 : vector<2x64xf32>
    %470 = arith.mulf %463, %465 : vector<2x64xf32>
    %471 = arith.addf %469, %470 : vector<2x64xf32>
    %472 = math.tanh %471 : vector<2x64xf32>
    %473 = arith.mulf %472, %466 : vector<2x64xf32>
    %c1_333 = arith.constant 1 : index
    %c0_334 = arith.constant 0 : index
    %c0_335 = arith.constant 0 : index
    %474 = vector.load %arg10[%c1_333, %c0_334, %c0_335] : memref<2x2x64xf32, #tpu.memory_space<vmem>>, vector<1x2x64xf32>
    %475 = vector.shape_cast %474 : vector<1x2x64xf32> to vector<2x64xf32>
    %476 = vector.shape_cast %473 : vector<2x64xf32> to vector<1x2x64xf32>
    tpu.vector_store %arg10[%c1_333, %c0_334, %c0_335], %476 {strides = array<i32>} : memref<2x2x64xf32, #tpu.memory_space<vmem>>, vector<1x2x64xf32>,
    %c1_336 = arith.constant 1 : index
    %c0_337 = arith.constant 0 : index
    %c0_338 = arith.constant 0 : index
    %477 = vector.load %arg11[%c1_336, %c0_337, %c0_338] : memref<2x2x64xf32, #tpu.memory_space<vmem>>, vector<1x2x64xf32>
    %478 = vector.shape_cast %477 : vector<1x2x64xf32> to vector<2x64xf32>
    %479 = vector.shape_cast %471 : vector<2x64xf32> to vector<1x2x64xf32>
    tpu.vector_store %arg11[%c1_336, %c0_337, %c0_338], %479 {strides = array<i32>} : memref<2x2x64xf32, #tpu.memory_space<vmem>>, vector<1x2x64xf32>,
    %480 = arith.index_cast %c5_i32 : i32 to index
    %c0_339 = arith.constant 0 : index
    %c0_340 = arith.constant 0 : index
    %481 = vector.load %arg7[%480, %c0_339, %c0_340] : memref<8x2x64xf32, #tpu.memory_space<vmem>>, vector<1x2x64xf32>
    %482 = vector.shape_cast %481 : vector<1x2x64xf32> to vector<2x64xf32>
    %483 = vector.shape_cast %473 : vector<2x64xf32> to vector<1x2x64xf32>
    tpu.vector_store %arg7[%480, %c0_339, %c0_340], %483 {strides = array<i32>} : memref<8x2x64xf32, #tpu.memory_space<vmem>>, vector<1x2x64xf32>,
    %484 = arith.addf %404, %407 : vector<2x64xf32>
    %c6_i32 = arith.constant 6 : i32
    %485 = arith.index_cast %c6_i32 : i32 to index
    %c0_341 = arith.constant 0 : index
    %c0_342 = arith.constant 0 : index
    %486 = vector.load %arg1[%485, %c0_341, %c0_342] : memref<8x2x64xf32, #tpu.memory_space<vmem>>, vector<1x2x64xf32>
    %487 = vector.shape_cast %486 : vector<1x2x64xf32> to vector<2x64xf32>
    %c0_343 = arith.constant 0 : index
    %c0_344 = arith.constant 0 : index
    %488 = vector.load %arg12[%c0_343, %c0_344] : memref<2x128xf32, #tpu.memory_space<vmem>>, vector<2x64xf32>
    tpu.vector_store %arg12[%c0_343, %c0_344], %487 {strides = array<i32>} : memref<2x128xf32, #tpu.memory_space<vmem>>, vector<2x64xf32>,
    %c0_345 = arith.constant 0 : index
    %c0_346 = arith.constant 0 : index
    %c0_347 = arith.constant 0 : index
    %489 = vector.load %arg10[%c0_345, %c0_346, %c0_347] : memref<2x2x64xf32, #tpu.memory_space<vmem>>, vector<1x2x64xf32>
    %490 = vector.shape_cast %489 : vector<1x2x64xf32> to vector<2x64xf32>
    %c0_348 = arith.constant 0 : index
    %c64_349 = arith.constant 64 : index
    %491 = vector.load %arg12[%c0_348, %c64_349] : memref<2x128xf32, #tpu.memory_space<vmem>>, vector<2x64xf32>
    tpu.vector_store %arg12[%c0_348, %c64_349], %490 {strides = array<i32>} : memref<2x128xf32, #tpu.memory_space<vmem>>, vector<2x64xf32>,
    %c0_350 = arith.constant 0 : index
    %c0_351 = arith.constant 0 : index
    %492 = vector.load %arg12[%c0_350, %c0_351] : memref<2x128xf32, #tpu.memory_space<vmem>>, vector<2x128xf32>
    %c0_352 = arith.constant 0 : index
    %c0_353 = arith.constant 0 : index
    %c0_354 = arith.constant 0 : index
    %493 = vector.load %arg2[%c0_352, %c0_353, %c0_354] : memref<2x128x256xf32, #tpu.memory_space<vmem>>, vector<1x128x256xf32>
    %494 = vector.shape_cast %493 : vector<1x128x256xf32> to vector<128x256xf32>
    %cst_355 = arith.constant dense<0.000000e+00> : vector<2x256xf32>
    %495 = tpu.matmul %492, %494, %cst_355 {dimension_numbers = #tpu.dot_dimension_numbers<[1], [0], [0], [1], [0, 0, 1, 1], [], []>} : vector<2x128xf32>, vector<128x256xf32>, vector<2x256xf32> -> vector<2x256xf32>
    %c0_356 = arith.constant 0 : index
    %c0_357 = arith.constant 0 : index
    %c0_358 = arith.constant 0 : index
    %496 = vector.load %arg3[%c0_356, %c0_357, %c0_358] : memref<2x1x256xf32, #tpu.memory_space<vmem>>, vector<1x1x256xf32>
    %497 = vector.shape_cast %496 : vector<1x1x256xf32> to vector<1x256xf32>
    %498 = vector.broadcast %497 : vector<1x256xf32> to vector<2x256xf32>
    %499 = arith.addf %495, %498 : vector<2x256xf32>
    %500 = vector.extract_strided_slice %499 {offsets = [0, 0], sizes = [2, 192], strides = [1, 1]} : vector<2x256xf32> to vector<2x192xf32>
    %501 = arith.negf %500 : vector<2x192xf32>
    %502 = math.exp %501 : vector<2x192xf32>
    %cst_359 = arith.constant 1.000000e+00 : f32
    %503 = vector.broadcast %cst_359 : f32 to vector<2x192xf32>
    %504 = arith.addf %503, %502 : vector<2x192xf32>
    %505 = arith.divf %503, %504 : vector<2x192xf32>
    %506 = vector.extract_strided_slice %499 {offsets = [0, 192], sizes = [2, 64], strides = [1, 1]} : vector<2x256xf32> to vector<2x64xf32>
    %507 = math.tanh %506 : vector<2x64xf32>
    %508 = vector.extract_strided_slice %505 {offsets = [0, 0], sizes = [2, 64], strides = [1, 1]} : vector<2x192xf32> to vector<2x64xf32>
    %509 = vector.extract_strided_slice %505 {offsets = [0, 64], sizes = [2, 64], strides = [1, 1]} : vector<2x192xf32> to vector<2x64xf32>
    %510 = vector.extract_strided_slice %505 {offsets = [0, 128], sizes = [2, 64], strides = [1, 1]} : vector<2x192xf32> to vector<2x64xf32>
    %c0_360 = arith.constant 0 : index
    %c0_361 = arith.constant 0 : index
    %c0_362 = arith.constant 0 : index
    %511 = vector.load %arg11[%c0_360, %c0_361, %c0_362] : memref<2x2x64xf32, #tpu.memory_space<vmem>>, vector<1x2x64xf32>
    %512 = vector.shape_cast %511 : vector<1x2x64xf32> to vector<2x64xf32>
    %513 = arith.mulf %512, %508 : vector<2x64xf32>
    %514 = arith.mulf %507, %509 : vector<2x64xf32>
    %515 = arith.addf %513, %514 : vector<2x64xf32>
    %516 = math.tanh %515 : vector<2x64xf32>
    %517 = arith.mulf %516, %510 : vector<2x64xf32>
    %c0_363 = arith.constant 0 : index
    %c0_364 = arith.constant 0 : index
    %c0_365 = arith.constant 0 : index
    %518 = vector.load %arg10[%c0_363, %c0_364, %c0_365] : memref<2x2x64xf32, #tpu.memory_space<vmem>>, vector<1x2x64xf32>
    %519 = vector.shape_cast %518 : vector<1x2x64xf32> to vector<2x64xf32>
    %520 = vector.shape_cast %517 : vector<2x64xf32> to vector<1x2x64xf32>
    tpu.vector_store %arg10[%c0_363, %c0_364, %c0_365], %520 {strides = array<i32>} : memref<2x2x64xf32, #tpu.memory_space<vmem>>, vector<1x2x64xf32>,
    %c0_366 = arith.constant 0 : index
    %c0_367 = arith.constant 0 : index
    %c0_368 = arith.constant 0 : index
    %521 = vector.load %arg11[%c0_366, %c0_367, %c0_368] : memref<2x2x64xf32, #tpu.memory_space<vmem>>, vector<1x2x64xf32>
    %522 = vector.shape_cast %521 : vector<1x2x64xf32> to vector<2x64xf32>
    %523 = vector.shape_cast %515 : vector<2x64xf32> to vector<1x2x64xf32>
    tpu.vector_store %arg11[%c0_366, %c0_367, %c0_368], %523 {strides = array<i32>} : memref<2x2x64xf32, #tpu.memory_space<vmem>>, vector<1x2x64xf32>,
    %c0_369 = arith.constant 0 : index
    %c0_370 = arith.constant 0 : index
    %524 = vector.load %arg12[%c0_369, %c0_370] : memref<2x128xf32, #tpu.memory_space<vmem>>, vector<2x64xf32>
    tpu.vector_store %arg12[%c0_369, %c0_370], %517 {strides = array<i32>} : memref<2x128xf32, #tpu.memory_space<vmem>>, vector<2x64xf32>,
    %c1_371 = arith.constant 1 : index
    %c0_372 = arith.constant 0 : index
    %c0_373 = arith.constant 0 : index
    %525 = vector.load %arg10[%c1_371, %c0_372, %c0_373] : memref<2x2x64xf32, #tpu.memory_space<vmem>>, vector<1x2x64xf32>
    %526 = vector.shape_cast %525 : vector<1x2x64xf32> to vector<2x64xf32>
    %c0_374 = arith.constant 0 : index
    %c64_375 = arith.constant 64 : index
    %527 = vector.load %arg12[%c0_374, %c64_375] : memref<2x128xf32, #tpu.memory_space<vmem>>, vector<2x64xf32>
    tpu.vector_store %arg12[%c0_374, %c64_375], %526 {strides = array<i32>} : memref<2x128xf32, #tpu.memory_space<vmem>>, vector<2x64xf32>,
    %c0_376 = arith.constant 0 : index
    %c0_377 = arith.constant 0 : index
    %528 = vector.load %arg12[%c0_376, %c0_377] : memref<2x128xf32, #tpu.memory_space<vmem>>, vector<2x128xf32>
    %c1_378 = arith.constant 1 : index
    %c0_379 = arith.constant 0 : index
    %c0_380 = arith.constant 0 : index
    %529 = vector.load %arg2[%c1_378, %c0_379, %c0_380] : memref<2x128x256xf32, #tpu.memory_space<vmem>>, vector<1x128x256xf32>
    %530 = vector.shape_cast %529 : vector<1x128x256xf32> to vector<128x256xf32>
    %cst_381 = arith.constant dense<0.000000e+00> : vector<2x256xf32>
    %531 = tpu.matmul %528, %530, %cst_381 {dimension_numbers = #tpu.dot_dimension_numbers<[1], [0], [0], [1], [0, 0, 1, 1], [], []>} : vector<2x128xf32>, vector<128x256xf32>, vector<2x256xf32> -> vector<2x256xf32>
    %c1_382 = arith.constant 1 : index
    %c0_383 = arith.constant 0 : index
    %c0_384 = arith.constant 0 : index
    %532 = vector.load %arg3[%c1_382, %c0_383, %c0_384] : memref<2x1x256xf32, #tpu.memory_space<vmem>>, vector<1x1x256xf32>
    %533 = vector.shape_cast %532 : vector<1x1x256xf32> to vector<1x256xf32>
    %534 = vector.broadcast %533 : vector<1x256xf32> to vector<2x256xf32>
    %535 = arith.addf %531, %534 : vector<2x256xf32>
    %536 = vector.extract_strided_slice %535 {offsets = [0, 0], sizes = [2, 192], strides = [1, 1]} : vector<2x256xf32> to vector<2x192xf32>
    %537 = arith.negf %536 : vector<2x192xf32>
    %538 = math.exp %537 : vector<2x192xf32>
    %cst_385 = arith.constant 1.000000e+00 : f32
    %539 = vector.broadcast %cst_385 : f32 to vector<2x192xf32>
    %540 = arith.addf %539, %538 : vector<2x192xf32>
    %541 = arith.divf %539, %540 : vector<2x192xf32>
    %542 = vector.extract_strided_slice %535 {offsets = [0, 192], sizes = [2, 64], strides = [1, 1]} : vector<2x256xf32> to vector<2x64xf32>
    %543 = math.tanh %542 : vector<2x64xf32>
    %544 = vector.extract_strided_slice %541 {offsets = [0, 0], sizes = [2, 64], strides = [1, 1]} : vector<2x192xf32> to vector<2x64xf32>
    %545 = vector.extract_strided_slice %541 {offsets = [0, 64], sizes = [2, 64], strides = [1, 1]} : vector<2x192xf32> to vector<2x64xf32>
    %546 = vector.extract_strided_slice %541 {offsets = [0, 128], sizes = [2, 64], strides = [1, 1]} : vector<2x192xf32> to vector<2x64xf32>
    %c1_386 = arith.constant 1 : index
    %c0_387 = arith.constant 0 : index
    %c0_388 = arith.constant 0 : index
    %547 = vector.load %arg11[%c1_386, %c0_387, %c0_388] : memref<2x2x64xf32, #tpu.memory_space<vmem>>, vector<1x2x64xf32>
    %548 = vector.shape_cast %547 : vector<1x2x64xf32> to vector<2x64xf32>
    %549 = arith.mulf %548, %544 : vector<2x64xf32>
    %550 = arith.mulf %543, %545 : vector<2x64xf32>
    %551 = arith.addf %549, %550 : vector<2x64xf32>
    %552 = math.tanh %551 : vector<2x64xf32>
    %553 = arith.mulf %552, %546 : vector<2x64xf32>
    %c1_389 = arith.constant 1 : index
    %c0_390 = arith.constant 0 : index
    %c0_391 = arith.constant 0 : index
    %554 = vector.load %arg10[%c1_389, %c0_390, %c0_391] : memref<2x2x64xf32, #tpu.memory_space<vmem>>, vector<1x2x64xf32>
    %555 = vector.shape_cast %554 : vector<1x2x64xf32> to vector<2x64xf32>
    %556 = vector.shape_cast %553 : vector<2x64xf32> to vector<1x2x64xf32>
    tpu.vector_store %arg10[%c1_389, %c0_390, %c0_391], %556 {strides = array<i32>} : memref<2x2x64xf32, #tpu.memory_space<vmem>>, vector<1x2x64xf32>,
    %c1_392 = arith.constant 1 : index
    %c0_393 = arith.constant 0 : index
    %c0_394 = arith.constant 0 : index
    %557 = vector.load %arg11[%c1_392, %c0_393, %c0_394] : memref<2x2x64xf32, #tpu.memory_space<vmem>>, vector<1x2x64xf32>
    %558 = vector.shape_cast %557 : vector<1x2x64xf32> to vector<2x64xf32>
    %559 = vector.shape_cast %551 : vector<2x64xf32> to vector<1x2x64xf32>
    tpu.vector_store %arg11[%c1_392, %c0_393, %c0_394], %559 {strides = array<i32>} : memref<2x2x64xf32, #tpu.memory_space<vmem>>, vector<1x2x64xf32>,
    %560 = arith.index_cast %c6_i32 : i32 to index
    %c0_395 = arith.constant 0 : index
    %c0_396 = arith.constant 0 : index
    %561 = vector.load %arg7[%560, %c0_395, %c0_396] : memref<8x2x64xf32, #tpu.memory_space<vmem>>, vector<1x2x64xf32>
    %562 = vector.shape_cast %561 : vector<1x2x64xf32> to vector<2x64xf32>
    %563 = vector.shape_cast %553 : vector<2x64xf32> to vector<1x2x64xf32>
    tpu.vector_store %arg7[%560, %c0_395, %c0_396], %563 {strides = array<i32>} : memref<8x2x64xf32, #tpu.memory_space<vmem>>, vector<1x2x64xf32>,
    %564 = arith.addf %484, %487 : vector<2x64xf32>
    %c7_i32 = arith.constant 7 : i32
    %565 = arith.index_cast %c7_i32 : i32 to index
    %c0_397 = arith.constant 0 : index
    %c0_398 = arith.constant 0 : index
    %566 = vector.load %arg1[%565, %c0_397, %c0_398] : memref<8x2x64xf32, #tpu.memory_space<vmem>>, vector<1x2x64xf32>
    %567 = vector.shape_cast %566 : vector<1x2x64xf32> to vector<2x64xf32>
    %c0_399 = arith.constant 0 : index
    %c0_400 = arith.constant 0 : index
    %568 = vector.load %arg12[%c0_399, %c0_400] : memref<2x128xf32, #tpu.memory_space<vmem>>, vector<2x64xf32>
    tpu.vector_store %arg12[%c0_399, %c0_400], %567 {strides = array<i32>} : memref<2x128xf32, #tpu.memory_space<vmem>>, vector<2x64xf32>,
    %c0_401 = arith.constant 0 : index
    %c0_402 = arith.constant 0 : index
    %c0_403 = arith.constant 0 : index
    %569 = vector.load %arg10[%c0_401, %c0_402, %c0_403] : memref<2x2x64xf32, #tpu.memory_space<vmem>>, vector<1x2x64xf32>
    %570 = vector.shape_cast %569 : vector<1x2x64xf32> to vector<2x64xf32>
    %c0_404 = arith.constant 0 : index
    %c64_405 = arith.constant 64 : index
    %571 = vector.load %arg12[%c0_404, %c64_405] : memref<2x128xf32, #tpu.memory_space<vmem>>, vector<2x64xf32>
    tpu.vector_store %arg12[%c0_404, %c64_405], %570 {strides = array<i32>} : memref<2x128xf32, #tpu.memory_space<vmem>>, vector<2x64xf32>,
    %c0_406 = arith.constant 0 : index
    %c0_407 = arith.constant 0 : index
    %572 = vector.load %arg12[%c0_406, %c0_407] : memref<2x128xf32, #tpu.memory_space<vmem>>, vector<2x128xf32>
    %c0_408 = arith.constant 0 : index
    %c0_409 = arith.constant 0 : index
    %c0_410 = arith.constant 0 : index
    %573 = vector.load %arg2[%c0_408, %c0_409, %c0_410] : memref<2x128x256xf32, #tpu.memory_space<vmem>>, vector<1x128x256xf32>
    %574 = vector.shape_cast %573 : vector<1x128x256xf32> to vector<128x256xf32>
    %cst_411 = arith.constant dense<0.000000e+00> : vector<2x256xf32>
    %575 = tpu.matmul %572, %574, %cst_411 {dimension_numbers = #tpu.dot_dimension_numbers<[1], [0], [0], [1], [0, 0, 1, 1], [], []>} : vector<2x128xf32>, vector<128x256xf32>, vector<2x256xf32> -> vector<2x256xf32>
    %c0_412 = arith.constant 0 : index
    %c0_413 = arith.constant 0 : index
    %c0_414 = arith.constant 0 : index
    %576 = vector.load %arg3[%c0_412, %c0_413, %c0_414] : memref<2x1x256xf32, #tpu.memory_space<vmem>>, vector<1x1x256xf32>
    %577 = vector.shape_cast %576 : vector<1x1x256xf32> to vector<1x256xf32>
    %578 = vector.broadcast %577 : vector<1x256xf32> to vector<2x256xf32>
    %579 = arith.addf %575, %578 : vector<2x256xf32>
    %580 = vector.extract_strided_slice %579 {offsets = [0, 0], sizes = [2, 192], strides = [1, 1]} : vector<2x256xf32> to vector<2x192xf32>
    %581 = arith.negf %580 : vector<2x192xf32>
    %582 = math.exp %581 : vector<2x192xf32>
    %cst_415 = arith.constant 1.000000e+00 : f32
    %583 = vector.broadcast %cst_415 : f32 to vector<2x192xf32>
    %584 = arith.addf %583, %582 : vector<2x192xf32>
    %585 = arith.divf %583, %584 : vector<2x192xf32>
    %586 = vector.extract_strided_slice %579 {offsets = [0, 192], sizes = [2, 64], strides = [1, 1]} : vector<2x256xf32> to vector<2x64xf32>
    %587 = math.tanh %586 : vector<2x64xf32>
    %588 = vector.extract_strided_slice %585 {offsets = [0, 0], sizes = [2, 64], strides = [1, 1]} : vector<2x192xf32> to vector<2x64xf32>
    %589 = vector.extract_strided_slice %585 {offsets = [0, 64], sizes = [2, 64], strides = [1, 1]} : vector<2x192xf32> to vector<2x64xf32>
    %590 = vector.extract_strided_slice %585 {offsets = [0, 128], sizes = [2, 64], strides = [1, 1]} : vector<2x192xf32> to vector<2x64xf32>
    %c0_416 = arith.constant 0 : index
    %c0_417 = arith.constant 0 : index
    %c0_418 = arith.constant 0 : index
    %591 = vector.load %arg11[%c0_416, %c0_417, %c0_418] : memref<2x2x64xf32, #tpu.memory_space<vmem>>, vector<1x2x64xf32>
    %592 = vector.shape_cast %591 : vector<1x2x64xf32> to vector<2x64xf32>
    %593 = arith.mulf %592, %588 : vector<2x64xf32>
    %594 = arith.mulf %587, %589 : vector<2x64xf32>
    %595 = arith.addf %593, %594 : vector<2x64xf32>
    %596 = math.tanh %595 : vector<2x64xf32>
    %597 = arith.mulf %596, %590 : vector<2x64xf32>
    %c0_419 = arith.constant 0 : index
    %c0_420 = arith.constant 0 : index
    %c0_421 = arith.constant 0 : index
    %598 = vector.load %arg10[%c0_419, %c0_420, %c0_421] : memref<2x2x64xf32, #tpu.memory_space<vmem>>, vector<1x2x64xf32>
    %599 = vector.shape_cast %598 : vector<1x2x64xf32> to vector<2x64xf32>
    %600 = vector.shape_cast %597 : vector<2x64xf32> to vector<1x2x64xf32>
    tpu.vector_store %arg10[%c0_419, %c0_420, %c0_421], %600 {strides = array<i32>} : memref<2x2x64xf32, #tpu.memory_space<vmem>>, vector<1x2x64xf32>,
    %c0_422 = arith.constant 0 : index
    %c0_423 = arith.constant 0 : index
    %c0_424 = arith.constant 0 : index
    %601 = vector.load %arg11[%c0_422, %c0_423, %c0_424] : memref<2x2x64xf32, #tpu.memory_space<vmem>>, vector<1x2x64xf32>
    %602 = vector.shape_cast %601 : vector<1x2x64xf32> to vector<2x64xf32>
    %603 = vector.shape_cast %595 : vector<2x64xf32> to vector<1x2x64xf32>
    tpu.vector_store %arg11[%c0_422, %c0_423, %c0_424], %603 {strides = array<i32>} : memref<2x2x64xf32, #tpu.memory_space<vmem>>, vector<1x2x64xf32>,
    %c0_425 = arith.constant 0 : index
    %c0_426 = arith.constant 0 : index
    %604 = vector.load %arg12[%c0_425, %c0_426] : memref<2x128xf32, #tpu.memory_space<vmem>>, vector<2x64xf32>
    tpu.vector_store %arg12[%c0_425, %c0_426], %597 {strides = array<i32>} : memref<2x128xf32, #tpu.memory_space<vmem>>, vector<2x64xf32>,
    %c1_427 = arith.constant 1 : index
    %c0_428 = arith.constant 0 : index
    %c0_429 = arith.constant 0 : index
    %605 = vector.load %arg10[%c1_427, %c0_428, %c0_429] : memref<2x2x64xf32, #tpu.memory_space<vmem>>, vector<1x2x64xf32>
    %606 = vector.shape_cast %605 : vector<1x2x64xf32> to vector<2x64xf32>
    %c0_430 = arith.constant 0 : index
    %c64_431 = arith.constant 64 : index
    %607 = vector.load %arg12[%c0_430, %c64_431] : memref<2x128xf32, #tpu.memory_space<vmem>>, vector<2x64xf32>
    tpu.vector_store %arg12[%c0_430, %c64_431], %606 {strides = array<i32>} : memref<2x128xf32, #tpu.memory_space<vmem>>, vector<2x64xf32>,
    %c0_432 = arith.constant 0 : index
    %c0_433 = arith.constant 0 : index
    %608 = vector.load %arg12[%c0_432, %c0_433] : memref<2x128xf32, #tpu.memory_space<vmem>>, vector<2x128xf32>
    %c1_434 = arith.constant 1 : index
    %c0_435 = arith.constant 0 : index
    %c0_436 = arith.constant 0 : index
    %609 = vector.load %arg2[%c1_434, %c0_435, %c0_436] : memref<2x128x256xf32, #tpu.memory_space<vmem>>, vector<1x128x256xf32>
    %610 = vector.shape_cast %609 : vector<1x128x256xf32> to vector<128x256xf32>
    %cst_437 = arith.constant dense<0.000000e+00> : vector<2x256xf32>
    %611 = tpu.matmul %608, %610, %cst_437 {dimension_numbers = #tpu.dot_dimension_numbers<[1], [0], [0], [1], [0, 0, 1, 1], [], []>} : vector<2x128xf32>, vector<128x256xf32>, vector<2x256xf32> -> vector<2x256xf32>
    %c1_438 = arith.constant 1 : index
    %c0_439 = arith.constant 0 : index
    %c0_440 = arith.constant 0 : index
    %612 = vector.load %arg3[%c1_438, %c0_439, %c0_440] : memref<2x1x256xf32, #tpu.memory_space<vmem>>, vector<1x1x256xf32>
    %613 = vector.shape_cast %612 : vector<1x1x256xf32> to vector<1x256xf32>
    %614 = vector.broadcast %613 : vector<1x256xf32> to vector<2x256xf32>
    %615 = arith.addf %611, %614 : vector<2x256xf32>
    %616 = vector.extract_strided_slice %615 {offsets = [0, 0], sizes = [2, 192], strides = [1, 1]} : vector<2x256xf32> to vector<2x192xf32>
    %617 = arith.negf %616 : vector<2x192xf32>
    %618 = math.exp %617 : vector<2x192xf32>
    %cst_441 = arith.constant 1.000000e+00 : f32
    %619 = vector.broadcast %cst_441 : f32 to vector<2x192xf32>
    %620 = arith.addf %619, %618 : vector<2x192xf32>
    %621 = arith.divf %619, %620 : vector<2x192xf32>
    %622 = vector.extract_strided_slice %615 {offsets = [0, 192], sizes = [2, 64], strides = [1, 1]} : vector<2x256xf32> to vector<2x64xf32>
    %623 = math.tanh %622 : vector<2x64xf32>
    %624 = vector.extract_strided_slice %621 {offsets = [0, 0], sizes = [2, 64], strides = [1, 1]} : vector<2x192xf32> to vector<2x64xf32>
    %625 = vector.extract_strided_slice %621 {offsets = [0, 64], sizes = [2, 64], strides = [1, 1]} : vector<2x192xf32> to vector<2x64xf32>
    %626 = vector.extract_strided_slice %621 {offsets = [0, 128], sizes = [2, 64], strides = [1, 1]} : vector<2x192xf32> to vector<2x64xf32>
    %c1_442 = arith.constant 1 : index
    %c0_443 = arith.constant 0 : index
    %c0_444 = arith.constant 0 : index
    %627 = vector.load %arg11[%c1_442, %c0_443, %c0_444] : memref<2x2x64xf32, #tpu.memory_space<vmem>>, vector<1x2x64xf32>
    %628 = vector.shape_cast %627 : vector<1x2x64xf32> to vector<2x64xf32>
    %629 = arith.mulf %628, %624 : vector<2x64xf32>
    %630 = arith.mulf %623, %625 : vector<2x64xf32>
    %631 = arith.addf %629, %630 : vector<2x64xf32>
    %632 = math.tanh %631 : vector<2x64xf32>
    %633 = arith.mulf %632, %626 : vector<2x64xf32>
    %c1_445 = arith.constant 1 : index
    %c0_446 = arith.constant 0 : index
    %c0_447 = arith.constant 0 : index
    %634 = vector.load %arg10[%c1_445, %c0_446, %c0_447] : memref<2x2x64xf32, #tpu.memory_space<vmem>>, vector<1x2x64xf32>
    %635 = vector.shape_cast %634 : vector<1x2x64xf32> to vector<2x64xf32>
    %636 = vector.shape_cast %633 : vector<2x64xf32> to vector<1x2x64xf32>
    tpu.vector_store %arg10[%c1_445, %c0_446, %c0_447], %636 {strides = array<i32>} : memref<2x2x64xf32, #tpu.memory_space<vmem>>, vector<1x2x64xf32>,
    %c1_448 = arith.constant 1 : index
    %c0_449 = arith.constant 0 : index
    %c0_450 = arith.constant 0 : index
    %637 = vector.load %arg11[%c1_448, %c0_449, %c0_450] : memref<2x2x64xf32, #tpu.memory_space<vmem>>, vector<1x2x64xf32>
    %638 = vector.shape_cast %637 : vector<1x2x64xf32> to vector<2x64xf32>
    %639 = vector.shape_cast %631 : vector<2x64xf32> to vector<1x2x64xf32>
    tpu.vector_store %arg11[%c1_448, %c0_449, %c0_450], %639 {strides = array<i32>} : memref<2x2x64xf32, #tpu.memory_space<vmem>>, vector<1x2x64xf32>,
    %640 = arith.index_cast %c7_i32 : i32 to index
    %c0_451 = arith.constant 0 : index
    %c0_452 = arith.constant 0 : index
    %641 = vector.load %arg7[%640, %c0_451, %c0_452] : memref<8x2x64xf32, #tpu.memory_space<vmem>>, vector<1x2x64xf32>
    %642 = vector.shape_cast %641 : vector<1x2x64xf32> to vector<2x64xf32>
    %643 = vector.shape_cast %633 : vector<2x64xf32> to vector<1x2x64xf32>
    tpu.vector_store %arg7[%640, %c0_451, %c0_452], %643 {strides = array<i32>} : memref<8x2x64xf32, #tpu.memory_space<vmem>>, vector<1x2x64xf32>,
    %644 = arith.addf %564, %567 : vector<2x64xf32>
    %c8_i32 = arith.constant 8 : i32
    %c0_453 = arith.constant 0 : index
    %c0_454 = arith.constant 0 : index
    %c0_455 = arith.constant 0 : index
    %645 = vector.load %arg10[%c0_453, %c0_454, %c0_455] : memref<2x2x64xf32, #tpu.memory_space<vmem>>, vector<2x2x64xf32>
    %c0_456 = arith.constant 0 : index
    %c0_457 = arith.constant 0 : index
    %c0_458 = arith.constant 0 : index
    %646 = vector.load %arg8[%c0_456, %c0_457, %c0_458] : memref<2x2x64xf32, #tpu.memory_space<vmem>>, vector<2x2x64xf32>
    tpu.vector_store %arg8[%c0_456, %c0_457, %c0_458], %645 {strides = array<i32>} : memref<2x2x64xf32, #tpu.memory_space<vmem>>, vector<2x2x64xf32>,
    %c0_459 = arith.constant 0 : index
    %c0_460 = arith.constant 0 : index
    %c0_461 = arith.constant 0 : index
    %647 = vector.load %arg11[%c0_459, %c0_460, %c0_461] : memref<2x2x64xf32, #tpu.memory_space<vmem>>, vector<2x2x64xf32>
    %c0_462 = arith.constant 0 : index
    %c0_463 = arith.constant 0 : index
    %c0_464 = arith.constant 0 : index
    %648 = vector.load %arg9[%c0_462, %c0_463, %c0_464] : memref<2x2x64xf32, #tpu.memory_space<vmem>>, vector<2x2x64xf32>
    tpu.vector_store %arg9[%c0_462, %c0_463, %c0_464], %647 {strides = array<i32>} : memref<2x2x64xf32, #tpu.memory_space<vmem>>, vector<2x2x64xf32>,
    %cst_465 = arith.constant 1.250000e-01 : f32
    %649 = vector.broadcast %cst_465 : f32 to vector<2x64xf32>
    %650 = arith.mulf %644, %649 : vector<2x64xf32>
    %c0_466 = arith.constant 0 : index
    %c0_467 = arith.constant 0 : index
    %651 = vector.load %arg4[%c0_466, %c0_467] : memref<64x128xf32, #tpu.memory_space<vmem>>, vector<64x128xf32>
    %cst_468 = arith.constant dense<0.000000e+00> : vector<2x128xf32>
    %652 = tpu.matmul %650, %651, %cst_468 {dimension_numbers = #tpu.dot_dimension_numbers<[1], [0], [0], [1], [0, 0, 1, 1], [], []>} : vector<2x64xf32>, vector<64x128xf32>, vector<2x128xf32> -> vector<2x128xf32>
    %c0_469 = arith.constant 0 : index
    %c0_470 = arith.constant 0 : index
    %653 = vector.load %arg5[%c0_469, %c0_470] : memref<1x128xf32, #tpu.memory_space<vmem>>, vector<1x128xf32>
    %654 = vector.broadcast %653 : vector<1x128xf32> to vector<2x128xf32>
    %655 = arith.addf %652, %654 : vector<2x128xf32>
    %c0_471 = arith.constant 0 : index
    %c0_472 = arith.constant 0 : index
    %656 = vector.load %arg6[%c0_471, %c0_472] : memref<2x128xf32, #tpu.memory_space<vmem>>, vector<2x128xf32>
    tpu.vector_store %arg6[%c0_471, %c0_472], %655 {strides = array<i32>} : memref<2x128xf32, #tpu.memory_space<vmem>>, vector<2x128xf32>,
    return
  }
  func.func @transform_0(%arg0: i32) -> (i32, i32, i32) {
    %c0_i32 = arith.constant 0 : i32
    %c0_i32_0 = arith.constant 0 : i32
    %c0_i32_1 = arith.constant 0 : i32
    %c0_i32_2 = arith.constant 0 : i32
    return %c0_i32, %c0_i32_0, %c0_i32_1 : i32, i32, i32
  }
  func.func @transform_1(%arg0: i32) -> (i32, i32, i32) {
    %c0_i32 = arith.constant 0 : i32
    %c0_i32_0 = arith.constant 0 : i32
    %c0_i32_1 = arith.constant 0 : i32
    %c0_i32_2 = arith.constant 0 : i32
    return %c0_i32, %c0_i32_0, %c0_i32_1 : i32, i32, i32
  }
  func.func @transform_2(%arg0: i32) -> (i32, i32, i32) {
    %c0_i32 = arith.constant 0 : i32
    %c0_i32_0 = arith.constant 0 : i32
    %c0_i32_1 = arith.constant 0 : i32
    %c0_i32_2 = arith.constant 0 : i32
    return %c0_i32, %c0_i32_0, %c0_i32_1 : i32, i32, i32
  }
  func.func @transform_3(%arg0: i32) -> (i32, i32) {
    %c0_i32 = arith.constant 0 : i32
    %c0_i32_0 = arith.constant 0 : i32
    %c0_i32_1 = arith.constant 0 : i32
    return %c0_i32, %c0_i32_0 : i32, i32
  }
  func.func @transform_4(%arg0: i32) -> (i32, i32) {
    %c0_i32 = arith.constant 0 : i32
    %c0_i32_0 = arith.constant 0 : i32
    %c0_i32_1 = arith.constant 0 : i32
    return %c0_i32, %c0_i32_0 : i32, i32
  }
  func.func @transform_5(%arg0: i32) -> (i32, i32) {
    %c0_i32 = arith.constant 0 : i32
    %c0_i32_0 = arith.constant 0 : i32
    %c0_i32_1 = arith.constant 0 : i32
    return %c0_i32, %c0_i32_0 : i32, i32
  }
  func.func @transform_6(%arg0: i32) -> (i32, i32, i32) {
    %c0_i32 = arith.constant 0 : i32
    %c0_i32_0 = arith.constant 0 : i32
    %c0_i32_1 = arith.constant 0 : i32
    %c0_i32_2 = arith.constant 0 : i32
    return %c0_i32, %c0_i32_0, %c0_i32_1 : i32, i32, i32
  }
  func.func @transform_7(%arg0: i32) -> (i32, i32, i32) {
    %c0_i32 = arith.constant 0 : i32
    %c0_i32_0 = arith.constant 0 : i32
    %c0_i32_1 = arith.constant 0 : i32
    %c0_i32_2 = arith.constant 0 : i32
    return %c0_i32, %c0_i32_0, %c0_i32_1 : i32, i32, i32
  }
  func.func @transform_8(%arg0: i32) -> (i32, i32, i32) {
    %c0_i32 = arith.constant 0 : i32
    %c0_i32_0 = arith.constant 0 : i32
    %c0_i32_1 = arith.constant 0 : i32
    %c0_i32_2 = arith.constant 0 : i32
    return %c0_i32, %c0_i32_0, %c0_i32_1 : i32, i32, i32
  }
}

</mosaic_0001>

<llo_original>
// kernel: tpu_custom_call.1
$region0: #{tpu_custom_call.1}
  #allocation0 [shape = 'u32[]', space=smem, size = 0x4, offset = 0x4, fixed_abs, tag = 'smem constant byte address 0x4 - core index']
  #allocation1 [shape = 'u32[144,128]{1,0:T(1,128)}', space=vmem, size = 0x12000, scoped, tag = 'internal scratch']
  #allocation2 [shape = 'f32[2,2,64]{2,1,0:T(2,128)}', space=vmem, size = 0x800, scoped, tag = 'scratch operand']
  #allocation3 [shape = 'f32[2,2,64]{2,1,0:T(2,128)}', space=vmem, size = 0x800, scoped, tag = 'scratch operand']
  #allocation4 [shape = 'f32[2,128]{1,0:T(2,128)}', space=vmem, size = 0x400, scoped, tag = 'scratch operand']
  %s0 = inlined_call_operand.hbm [shape: f32[8,2,64], index: 0, kind: input, shape index: {}]
  %s1 = inlined_call_operand.hbm [shape: f32[2,128,256], index: 1, kind: input, shape index: {}]
  %s2 = inlined_call_operand.hbm [shape: f32[2,1,256], index: 2, kind: input, shape index: {}]
  %s3 = inlined_call_operand.hbm [shape: f32[64,128], index: 3, kind: input, shape index: {}]
  %s4 = inlined_call_operand.vmem [shape: f32[1,128], index: 4, kind: input, shape index: {}]
  %s5 = inlined_call_operand.hbm [shape: f32[2,128], index: 5, kind: output, shape index: {0}]
  %s6 = inlined_call_operand.hbm [shape: f32[8,2,64], index: 6, kind: output, shape index: {1}]
  %s7 = inlined_call_operand.hbm [shape: f32[2,2,64], index: 7, kind: output, shape index: {2}]
  %s8 = inlined_call_operand.hbm [shape: f32[2,2,64], index: 8, kind: output, shape index: {3}]
  %9 = xla_tuple %s5, %s6, %s7, %s8
  %s10 = sld [smem:[#allocation0]]
  $region70: #{tpu_custom_call.1} parent=0
    _
  %s12 = ssub.s32 1, %s10
  %s13 = scalar_select 0, %s12, %s10
  $region1: #{tpu_custom_call.1} parent=0
    #allocation5 [shape = 'u8[8192]{0}', space=vmem, size = 0x2000, scoped, tag = 'input window, operand 0, single buffered']
    #allocation6 [shape = 's32[1]{0}', space=sflag, size = 0x4, scoped, tag = 'scoped memory for tpu_custom_call.1']
    #allocation7 [shape = 's32[1]{0}', space=sflag, size = 0x4, scoped, tag = 'scoped memory for tpu_custom_call.1']
    #allocation8 [shape = 'u8[262144]{0}', space=vmem, size = 0x40000, scoped, tag = 'input window, operand 1, single buffered']
    #allocation9 [shape = 's32[1]{0}', space=sflag, size = 0x4, scoped, tag = 'scoped memory for tpu_custom_call.1']
    #allocation10 [shape = 'u8[2048]{0}', space=vmem, size = 0x800, scoped, tag = 'input window, operand 2, single buffered']
    #allocation11 [shape = 'u8[32768]{0}', space=vmem, size = 0x8000, scoped, tag = 'input window, operand 3, single buffered']
    #allocation12 [shape = 's32[1]{0}', space=sflag, size = 0x4, scoped, tag = 'scoped memory for tpu_custom_call.1']
    #allocation13 [shape = 'u8[1024]{0}', space=vmem, size = 0x400, scoped, tag = 'output window, operand 0, single buffered']
    #allocation14 [shape = 'u8[8192]{0}', space=vmem, size = 0x2000, scoped, tag = 'output window, operand 1, single buffered']
    #allocation15 [shape = 's32[1]{0}', space=sflag, size = 0x4, scoped, tag = 'scoped memory for tpu_custom_call.1']
    #allocation16 [shape = 'u8[2048]{0}', space=vmem, size = 0x800, scoped, tag = 'output window, operand 2, single buffered']
    #allocation17 [shape = 'u8[2048]{0}', space=vmem, size = 0x800, scoped, tag = 'output window, operand 3, single buffered']
    #allocation18 [shape = 's32[1]{0}', space=sflag, size = 0x4, scoped, tag = 'scoped memory for tpu_custom_call.1']
    %14 = vsyncpa [#allocation6], 0
    %15 = vsyncpa [#allocation9], 0
    %16 = vsyncpa [#allocation12], 0
    %17 = vsyncpa [#allocation7], 0
    %18 = vsyncpa [#allocation15], 0
    %19 = vsyncpa [#allocation18], 0
    // Predicated region
    $region2: #{tpu_custom_call.1} parent=1 // pred_check
      _
    $region3: #{tpu_custom_call.1} parent=1 // pred_check_branch
      %21 = sbr.rel (0) target = $region5
    $region4: #{tpu_custom_call.1} parent=1 // pred_region
      %s23 = ssub.s32 256, 256
      %24 = vsyncadd [#allocation6], %s23
      %s25 = sshll.u32 [#allocation5], 4
      %s26 = int_to_ptr.vmem [resolvable:$true] %s25
      %31 = dma.hbm_to_vmem [thread:$0]  %s0, 256, %s26, [#allocation6], 32, 32, 2
    $region5: #{tpu_custom_call.1} parent=1 // pred_fallthru
      _
    // Predicated region
    $region6: #{tpu_custom_call.1} parent=1 // pred_check
      _
    $region7: #{tpu_custom_call.1} parent=1 // pred_check_branch
      %33 = sbr.rel (0) target = $region9
    $region8: #{tpu_custom_call.1} parent=1 // pred_region
      %s35 = ssub.s32 8192, 8192
      %36 = vsyncadd [#allocation9], %s35
      %s37 = sshll.u32 [#allocation8], 4
      %s38 = int_to_ptr.vmem [resolvable:$true] %s37
      %43 = dma.hbm_to_vmem [thread:$0]  %s1, 8192, %s38, [#allocation9], 256, 256, 16
    $region9: #{tpu_custom_call.1} parent=1 // pred_fallthru
      _
    // Predicated region
    $region10: #{tpu_custom_call.1} parent=1 // pred_check
      _
    $region11: #{tpu_custom_call.1} parent=1 // pred_check_branch
      %45 = sbr.rel (0) target = $region13
    $region12: #{tpu_custom_call.1} parent=1 // pred_region
      %s47 = ssub.s32 64, 64
      %48 = vsyncadd [#allocation9], %s47
      %s49 = sshll.u32 [#allocation10], 4
      %s50 = int_to_ptr.vmem [resolvable:$true] %s49
      %55 = dma.hbm_to_vmem [thread:$0]  %s2, 64, %s50, [#allocation9], 32, 32, 2
    $region13: #{tpu_custom_call.1} parent=1 // pred_fallthru
      _
    // Predicated region
    $region14: #{tpu_custom_call.1} parent=1 // pred_check
      _
    $region15: #{tpu_custom_call.1} parent=1 // pred_check_branch
      %57 = sbr.rel (0) target = $region17
    $region16: #{tpu_custom_call.1} parent=1 // pred_region
      %s59 = ssub.s32 1024, 1024
      %60 = vsyncadd [#allocation12], %s59
      %s61 = sshll.u32 [#allocation11], 4
      %s62 = int_to_ptr.vmem [resolvable:$true] %s61
      %67 = dma.hbm_to_vmem [thread:$0]  %s3, 1024, %s62, [#allocation12], 128, 128, 8
    $region17: #{tpu_custom_call.1} parent=1 // pred_fallthru
      _
    // Predicated region
    $region18: #{tpu_custom_call.1} parent=1 // pred_check
      _
    $region19: #{tpu_custom_call.1} parent=1 // pred_check_branch
      %69 = sbr.rel (0) target = $region21
    $region20: #{tpu_custom_call.1} parent=1 // pred_region
      _
    $region21: #{tpu_custom_call.1} parent=1 // pred_fallthru
      _
    // Predicated region
    $region22: #{tpu_custom_call.1} parent=1 // pred_check
      _
    $region23: #{tpu_custom_call.1} parent=1 // pred_check_branch
      %71 = sbr.rel (0) target = $region25
    $region24: #{tpu_custom_call.1} parent=1 // pred_region
      %72 = dma.done [#allocation6], 256
    $region25: #{tpu_custom_call.1} parent=1 // pred_fallthru
      _
    // Predicated region
    $region26: #{tpu_custom_call.1} parent=1 // pred_check
      _
    $region27: #{tpu_custom_call.1} parent=1 // pred_check_branch
      %74 = sbr.rel (0) target = $region29
    $region28: #{tpu_custom_call.1} parent=1 // pred_region
      %75 = dma.done [#allocation9], 8192
    $region29: #{tpu_custom_call.1} parent=1 // pred_fallthru
      _
    // Predicated region
    $region30: #{tpu_custom_call.1} parent=1 // pred_check
      _
    $region31: #{tpu_custom_call.1} parent=1 // pred_check_branch
      %77 = sbr.rel (0) target = $region33
    $region32: #{tpu_custom_call.1} parent=1 // pred_region
      %78 = dma.done [#allocation9], 64
    $region33: #{tpu_custom_call.1} parent=1 // pred_fallthru
      _
    // Predicated region
    $region34: #{tpu_custom_call.1} parent=1 // pred_check
      _
    $region35: #{tpu_custom_call.1} parent=1 // pred_check_branch
      %80 = sbr.rel (0) target = $region37
    $region36: #{tpu_custom_call.1} parent=1 // pred_region
      %81 = dma.done [#allocation12], 1024
    $region37: #{tpu_custom_call.1} parent=1 // pred_fallthru
      _
    %vm82 = vcmask 517120
    %83 = vst.msk [vmem:[#allocation2] sm:$0x3] %vm82, 0.0
    %84 = vst.msk [vmem:[#allocation2 + $0x2] sm:$0x3] %vm82, 0.0
    %85 = vst.msk [vmem:[#allocation3] sm:$0x3] %vm82, 0.0
    %86 = vst.msk [vmem:[#allocation3 + $0x2] sm:$0x3] %vm82, 0.0
    %v87 = vld [vmem:[#allocation5] sm:$0x3]
    %88 = vst.msk [vmem:[#allocation4] sm:$0x3] %vm82, %v87
    %v89 = vld [vmem:[#allocation2] sm:$0x3]
    %91 = vrot.lane.b32.xlu0 %v89, 64
    %v92 = vpop.permute.xlu0 %91
    %vm94 = vcmask 1041920
    %95 = vst.msk [vmem:[#allocation4] sm:$0x3] %vm94, %v92
    %v96 = vld [vmem:[#allocation4] sm:$0x3]
    %v97 = vld [vmem:[#allocation8] sm:$0xff]
    %v98 = vld [vmem:[#allocation8 + $0x8] sm:$0xff]
    %v99 = vld [vmem:[#allocation8 + $0x10] sm:$0xff]
    %v100 = vld [vmem:[#allocation8 + $0x18] sm:$0xff]
    %v101 = vld [vmem:[#allocation8 + $0x20] sm:$0xff]
    %v102 = vld [vmem:[#allocation8 + $0x28] sm:$0xff]
    %v103 = vld [vmem:[#allocation8 + $0x30] sm:$0xff]
    %v104 = vld [vmem:[#allocation8 + $0x38] sm:$0xff]
    %v105 = vld [vmem:[#allocation8 + $0x40] sm:$0xff]
    %v106 = vld [vmem:[#allocation8 + $0x48] sm:$0xff]
    %v107 = vld [vmem:[#allocation8 + $0x50] sm:$0xff]
    %v108 = vld [vmem:[#allocation8 + $0x58] sm:$0xff]
    %v109 = vld [vmem:[#allocation8 + $0x60] sm:$0xff]
    %v110 = vld [vmem:[#allocation8 + $0x68] sm:$0xff]
    %v111 = vld [vmem:[#allocation8 + $0x70] sm:$0xff]
    %v112 = vld [vmem:[#allocation8 + $0x78] sm:$0xff]
    %v113 = vld [vmem:[#allocation8 + $0x80] sm:$0xff]
    %v114 = vld [vmem:[#allocation8 + $0x88] sm:$0xff]
    %v115 = vld [vmem:[#allocation8 + $0x90] sm:$0xff]
    %v116 = vld [vmem:[#allocation8 + $0x98] sm:$0xff]
    %v117 = vld [vmem:[#allocation8 + $0xa0] sm:$0xff]
    %v118 = vld [vmem:[#allocation8 + $0xa8] sm:$0xff]
    %v119 = vld [vmem:[#allocation8 + $0xb0] sm:$0xff]
    %v120 = vld [vmem:[#allocation8 + $0xb8] sm:$0xff]
    %v121 = vld [vmem:[#allocation8 + $0xc0] sm:$0xff]
    %v122 = vld [vmem:[#allocation8 + $0xc8] sm:$0xff]
    %v123 = vld [vmem:[#allocation8 + $0xd0] sm:$0xff]
    %v124 = vld [vmem:[#allocation8 + $0xd8] sm:$0xff]
    %v125 = vld [vmem:[#allocation8 + $0xe0] sm:$0xff]
    %v126 = vld [vmem:[#allocation8 + $0xe8] sm:$0xff]
    %v127 = vld [vmem:[#allocation8 + $0xf0] sm:$0xff]
    %v128 = vld [vmem:[#allocation8 + $0xf8] sm:$0xff]
    %v129 = vld [vmem:[#allocation10] sm:$0x3]
    %v131 = vlaneseq
    %v132 = vshrl.u32 %v131, 7
    %v133 = vsub.s32 0, %v132
    %v134 = vrot.slane %v129, %v133
    %v135 = vlaneseq
    %v136 = vshrl.u32 %v135, 7
    %v137 = vsub.s32 1, %v136
    %v138 = vrot.slane %v129, %v137
    %141 = vmatprep.subr.mxu0 %v128
    %142 = vmatpush1.msra.mxu0 %v127
    %143 = vmatprep.subr.mxu0 %v126
    %144 = vmatpush1.msra.mxu0 %v125
    %145 = vmatprep.subr.mxu0 %v124
    %146 = vmatpush1.msra.mxu0 %v123
    %147 = vmatprep.subr.mxu0 %v122
    %148 = vmatpush1.msra.mxu0 %v121
    %149 = vmatprep.subr.mxu0 %v120
    %150 = vmatpush1.msra.mxu0 %v119
    %151 = vmatprep.subr.mxu0 %v118
    %152 = vmatpush1.msra.mxu0 %v117
    %153 = vmatprep.subr.mxu0 %v116
    %154 = vmatpush1.msra.mxu0 %v115
    %155 = vmatprep.subr.mxu0 %v114
    %156 = vmatpush1.msra.mxu0 %v113
    %157 = vmatprep.subr.mxu0 %v112
    %158 = vmatpush1.msra.mxu0 %v111
    %159 = vmatprep.subr.mxu0 %v110
    %160 = vmatpush1.msra.mxu0 %v109
    %161 = vmatprep.subr.mxu0 %v108
    %162 = vmatpush1.msra.mxu0 %v107
    %163 = vmatprep.subr.mxu0 %v106
    %164 = vmatpush1.msra.mxu0 %v105
    %165 = vmatprep.subr.mxu0 %v104
    %166 = vmatpush1.msra.mxu0 %v103
    %167 = vmatprep.subr.mxu0 %v102
    %168 = vmatpush1.msra.mxu0 %v101
    %169 = vmatprep.subr.mxu0 %v100
    %170 = vmatpush1.msra.mxu0 %v99
    %171 = vmatprep.subr.mxu0 %v98
    %172 = vmatpush1.msra.mxu0 %v97
    %173 = vmatprep.subr.mxu0 0.0
    %174 = vmatpush2.msra.mxu0 0.0
    %175 = vmatprep.subr.mxu0 0.0
    %176 = vmatpush2.msra.mxu0 0.0
    %177 = vmatprep.subr.mxu0 0.0
    %178 = vmatpush2.msra.mxu0 0.0
    %179 = vmatprep.subr.mxu0 0.0
    %180 = vmatpush2.msra.mxu0 0.0
    %181 = vmatprep.subr.mxu0 0.0
    %182 = vmatpush2.msra.mxu0 0.0
    %183 = vmatprep.subr.mxu0 0.0
    %184 = vmatpush2.msra.mxu0 0.0
    %185 = vmatprep.subr.mxu0 0.0
    %186 = vmatpush2.msra.mxu0 0.0
    %187 = vmatprep.subr.mxu0 0.0
    %188 = vmatpush2.msra.mxu0 0.0
    %189 = vmatprep.subr.mxu0 0.0
    %190 = vmatpush2.msra.mxu0 0.0
    %191 = vmatprep.subr.mxu0 0.0
    %192 = vmatpush2.msra.mxu0 0.0
    %193 = vmatprep.subr.mxu0 0.0
    %194 = vmatpush2.msra.mxu0 0.0
    %195 = vmatprep.subr.mxu0 0.0
    %196 = vmatpush2.msra.mxu0 0.0
    %197 = vmatprep.subr.mxu0 0.0
    %198 = vmatpush2.msra.mxu0 0.0
    %199 = vmatprep.subr.mxu0 0.0
    %200 = vmatpush2.msra.mxu0 0.0
    %201 = vmatprep.subr.mxu0 0.0
    %202 = vmatpush2.msra.mxu0 0.0
    %203 = vmatprep.subr.mxu0 0.0
    %204 = vmatpush2.msra.mxu0 0.0
    %205 = vmatprep.mubr.f32.mxu0 0.0
    %206 = vmatmul.mubr.f32.gmra.mxu0 %v96
    %v207 = vpop.f32.mrf.mxu0
    %v208 = vadd.f32 %v134, %v207
    %v209 = vpop.f32.mrf.mxu0
    %v210 = vadd.f32 %v138, %v209
    %211 = vdwg.mxu0
    %v212 = vxor.u32 %v208, 2147483648
    %v213 = vxor.u32 %v210, 2147483648
    %v214 = vmul.f32 %v212, 1.442695
    %v215 = vpow.pop %v214
    %v216 = vmul.f32 %v213, 1.442695
    %v217 = vpow.pop %v216
    %v218 = vadd.f32 %v215, 1.0
    %v219 = vadd.f32 %v217, 1.0
    %v220 = vrcp.pop %v218
    %v221 = vmul.f32 1.0, %v220
    %v222 = vrcp.pop %v219
    %v223 = vmul.f32 1.0, %v222
    %v224 = vtanh.pop %v210
    %v225 = vld [vmem:[#allocation3] sm:$0x3]
    %v226 = vmul.f32 %v225, %v221
    %v227 = vmul.f32 %v224, %v221
    %229 = vrot.lane.b32.xlu0 %v227, 64
    %v230 = vpop.permute.xlu0 %229
    %v232 = vadd.f32 %v226, %v230
    %v233 = vtanh.pop %v232
    %v234 = vmul.f32 %v233, %v223
    %235 = vst.msk [vmem:[#allocation2] sm:$0x3] %vm82, %v234
    %236 = vst.msk [vmem:[#allocation3] sm:$0x3] %vm82, %v232
    %237 = vst.msk [vmem:[#allocation4] sm:$0x3] %vm82, %v234
    %s238 = scalar_lea.vmem [#allocation2], 2
    %v239 = vld [vmem:[%s238] sm:$0x3]
    %241 = vrot.lane.b32.xlu0 %v239, 64
    %v242 = vpop.permute.xlu0 %241
    %244 = vst.msk [vmem:[#allocation4] sm:$0x3] %vm94, %v242
    %v245 = vld [vmem:[#allocation4] sm:$0x3]
    %s246 = scalar_lea.vmem [#allocation8], 256
    %v247 = vld [vmem:[%s246] sm:$0xff]
    %v248 = vld [vmem:[%s246 + $0x8] sm:$0xff]
    %v249 = vld [vmem:[%s246 + $0x10] sm:$0xff]
    %v250 = vld [vmem:[%s246 + $0x18] sm:$0xff]
    %v251 = vld [vmem:[%s246 + $0x20] sm:$0xff]
    %v252 = vld [vmem:[%s246 + $0x28] sm:$0xff]
    %v253 = vld [vmem:[%s246 + $0x30] sm:$0xff]
    %v254 = vld [vmem:[%s246 + $0x38] sm:$0xff]
    %v255 = vld [vmem:[%s246 + $0x40] sm:$0xff]
    %v256 = vld [vmem:[%s246 + $0x48] sm:$0xff]
    %v257 = vld [vmem:[%s246 + $0x50] sm:$0xff]
    %v258 = vld [vmem:[%s246 + $0x58] sm:$0xff]
    %v259 = vld [vmem:[%s246 + $0x60] sm:$0xff]
    %v260 = vld [vmem:[%s246 + $0x68] sm:$0xff]
    %v261 = vld [vmem:[%s246 + $0x70] sm:$0xff]
    %v262 = vld [vmem:[%s246 + $0x78] sm:$0xff]
    %v263 = vld [vmem:[%s246 + $0x80] sm:$0xff]
    %v264 = vld [vmem:[%s246 + $0x88] sm:$0xff]
    %v265 = vld [vmem:[%s246 + $0x90] sm:$0xff]
    %v266 = vld [vmem:[%s246 + $0x98] sm:$0xff]
    %v267 = vld [vmem:[%s246 + $0xa0] sm:$0xff]
    %v268 = vld [vmem:[%s246 + $0xa8] sm:$0xff]
    %v269 = vld [vmem:[%s246 + $0xb0] sm:$0xff]
    %v270 = vld [vmem:[%s246 + $0xb8] sm:$0xff]
    %v271 = vld [vmem:[%s246 + $0xc0] sm:$0xff]
    %v272 = vld [vmem:[%s246 + $0xc8] sm:$0xff]
    %v273 = vld [vmem:[%s246 + $0xd0] sm:$0xff]
    %v274 = vld [vmem:[%s246 + $0xd8] sm:$0xff]
    %v275 = vld [vmem:[%s246 + $0xe0] sm:$0xff]
    %v276 = vld [vmem:[%s246 + $0xe8] sm:$0xff]
    %v277 = vld [vmem:[%s246 + $0xf0] sm:$0xff]
    %v278 = vld [vmem:[%s246 + $0xf8] sm:$0xff]
    %s279 = scalar_lea.vmem [#allocation10], 2
    %v280 = vld [vmem:[%s279] sm:$0x3]
    %v282 = vlaneseq
    %v283 = vshrl.u32 %v282, 7
    %v284 = vsub.s32 0, %v283
    %v285 = vrot.slane %v280, %v284
    %v286 = vlaneseq
    %v287 = vshrl.u32 %v286, 7
    %v288 = vsub.s32 1, %v287
    %v289 = vrot.slane %v280, %v288
    %292 = vmatprep.subr.mxu0 %v278
    %293 = vmatpush1.msra.mxu0 %v277
    %294 = vmatprep.subr.mxu0 %v276
    %295 = vmatpush1.msra.mxu0 %v275
    %296 = vmatprep.subr.mxu0 %v274
    %297 = vmatpush1.msra.mxu0 %v273
    %298 = vmatprep.subr.mxu0 %v272
    %299 = vmatpush1.msra.mxu0 %v271
    %300 = vmatprep.subr.mxu0 %v270
    %301 = vmatpush1.msra.mxu0 %v269
    %302 = vmatprep.subr.mxu0 %v268
    %303 = vmatpush1.msra.mxu0 %v267
    %304 = vmatprep.subr.mxu0 %v266
    %305 = vmatpush1.msra.mxu0 %v265
    %306 = vmatprep.subr.mxu0 %v264
    %307 = vmatpush1.msra.mxu0 %v263
    %308 = vmatprep.subr.mxu0 %v262
    %309 = vmatpush1.msra.mxu0 %v261
    %310 = vmatprep.subr.mxu0 %v260
    %311 = vmatpush1.msra.mxu0 %v259
    %312 = vmatprep.subr.mxu0 %v258
    %313 = vmatpush1.msra.mxu0 %v257
    %314 = vmatprep.subr.mxu0 %v256
    %315 = vmatpush1.msra.mxu0 %v255
    %316 = vmatprep.subr.mxu0 %v254
    %317 = vmatpush1.msra.mxu0 %v253
    %318 = vmatprep.subr.mxu0 %v252
    %319 = vmatpush1.msra.mxu0 %v251
    %320 = vmatprep.subr.mxu0 %v250
    %321 = vmatpush1.msra.mxu0 %v249
    %322 = vmatprep.subr.mxu0 %v248
    %323 = vmatpush1.msra.mxu0 %v247
    %324 = vmatprep.subr.mxu0 0.0
    %325 = vmatpush2.msra.mxu0 0.0
    %326 = vmatprep.subr.mxu0 0.0
    %327 = vmatpush2.msra.mxu0 0.0
    %328 = vmatprep.subr.mxu0 0.0
    %329 = vmatpush2.msra.mxu0 0.0
    %330 = vmatprep.subr.mxu0 0.0
    %331 = vmatpush2.msra.mxu0 0.0
    %332 = vmatprep.subr.mxu0 0.0
    %333 = vmatpush2.msra.mxu0 0.0
    %334 = vmatprep.subr.mxu0 0.0
    %335 = vmatpush2.msra.mxu0 0.0
    %336 = vmatprep.subr.mxu0 0.0
    %337 = vmatpush2.msra.mxu0 0.0
    %338 = vmatprep.subr.mxu0 0.0
    %339 = vmatpush2.msra.mxu0 0.0
    %340 = vmatprep.subr.mxu0 0.0
    %341 = vmatpush2.msra.mxu0 0.0
    %342 = vmatprep.subr.mxu0 0.0
    %343 = vmatpush2.msra.mxu0 0.0
    %344 = vmatprep.subr.mxu0 0.0
    %345 = vmatpush2.msra.mxu0 0.0
    %346 = vmatprep.subr.mxu0 0.0
    %347 = vmatpush2.msra.mxu0 0.0
    %348 = vmatprep.subr.mxu0 0.0
    %349 = vmatpush2.msra.mxu0 0.0
    %350 = vmatprep.subr.mxu0 0.0
    %351 = vmatpush2.msra.mxu0 0.0
    %352 = vmatprep.subr.mxu0 0.0
    %353 = vmatpush2.msra.mxu0 0.0
    %354 = vmatprep.subr.mxu0 0.0
    %355 = vmatpush2.msra.mxu0 0.0
    %356 = vmatprep.mubr.f32.mxu0 0.0
    %357 = vmatmul.mubr.f32.gmra.mxu0 %v245
    %v358 = vpop.f32.mrf.mxu0
    %v359 = vadd.f32 %v285, %v358
    %v360 = vpop.f32.mrf.mxu0
    %v361 = vadd.f32 %v289, %v360
    %362 = vdwg.mxu0
    %v363 = vxor.u32 %v359, 2147483648
    %v364 = vxor.u32 %v361, 2147483648
    %v365 = vmul.f32 %v363, 1.442695
    %v366 = vpow.pop %v365
    %v367 = vmul.f32 %v364, 1.442695
    %v368 = vpow.pop %v367
    %v369 = vadd.f32 %v366, 1.0
    %v370 = vadd.f32 %v368, 1.0
    %v371 = vrcp.pop %v369
    %v372 = vmul.f32 1.0, %v371
    %v373 = vrcp.pop %v370
    %v374 = vmul.f32 1.0, %v373
    %v375 = vtanh.pop %v361
    %s376 = scalar_lea.vmem [#allocation3], 2
    %v377 = vld [vmem:[%s376] sm:$0x3]
    %v378 = vmul.f32 %v377, %v372
    %v379 = vmul.f32 %v375, %v372
    %381 = vrot.lane.b32.xlu0 %v379, 64
    %v382 = vpop.permute.xlu0 %381
    %v384 = vadd.f32 %v378, %v382
    %v385 = vtanh.pop %v384
    %v386 = vmul.f32 %v385, %v374
    %387 = vst.msk [vmem:[%s238] sm:$0x3] %vm82, %v386
    %388 = vst.msk [vmem:[%s376] sm:$0x3] %vm82, %v384
    %389 = vst.msk [vmem:[#allocation14] sm:$0x3] %vm82, %v386
    %v390 = vadd.f32 %v87, 0.0
    %s391 = scalar_lea.vmem [#allocation5], 2
    %v392 = vld [vmem:[%s391] sm:$0x3]
    %393 = vst.msk [vmem:[#allocation4] sm:$0x3] %vm82, %v392
    %v394 = vld [vmem:[#allocation2] sm:$0x3]
    %396 = vrot.lane.b32.xlu0 %v394, 64
    %v397 = vpop.permute.xlu0 %396
    %399 = vst.msk [vmem:[#allocation4] sm:$0x3] %vm94, %v397
    %v400 = vld [vmem:[#allocation4] sm:$0x3]
    %v401 = vld [vmem:[#allocation8] sm:$0xff]
    %v402 = vld [vmem:[#allocation8 + $0x8] sm:$0xff]
    %v403 = vld [vmem:[#allocation8 + $0x10] sm:$0xff]
    %v404 = vld [vmem:[#allocation8 + $0x18] sm:$0xff]
    %v405 = vld [vmem:[#allocation8 + $0x20] sm:$0xff]
    %v406 = vld [vmem:[#allocation8 + $0x28] sm:$0xff]
    %v407 = vld [vmem:[#allocation8 + $0x30] sm:$0xff]
    %v408 = vld [vmem:[#allocation8 + $0x38] sm:$0xff]
    %v409 = vld [vmem:[#allocation8 + $0x40] sm:$0xff]
    %v410 = vld [vmem:[#allocation8 + $0x48] sm:$0xff]
    %v411 = vld [vmem:[#allocation8 + $0x50] sm:$0xff]
    %v412 = vld [vmem:[#allocation8 + $0x58] sm:$0xff]
    %v413 = vld [vmem:[#allocation8 + $0x60] sm:$0xff]
    %v414 = vld [vmem:[#allocation8 + $0x68] sm:$0xff]
    %v415 = vld [vmem:[#allocation8 + $0x70] sm:$0xff]
    %v416 = vld [vmem:[#allocation8 + $0x78] sm:$0xff]
    %v417 = vld [vmem:[#allocation8 + $0x80] sm:$0xff]
    %v418 = vld [vmem:[#allocation8 + $0x88] sm:$0xff]
    %v419 = vld [vmem:[#allocation8 + $0x90] sm:$0xff]
    %v420 = vld [vmem:[#allocation8 + $0x98] sm:$0xff]
    %v421 = vld [vmem:[#allocation8 + $0xa0] sm:$0xff]
    %v422 = vld [vmem:[#allocation8 + $0xa8] sm:$0xff]
    %v423 = vld [vmem:[#allocation8 + $0xb0] sm:$0xff]
    %v424 = vld [vmem:[#allocation8 + $0xb8] sm:$0xff]
    %v425 = vld [vmem:[#allocation8 + $0xc0] sm:$0xff]
    %v426 = vld [vmem:[#allocation8 + $0xc8] sm:$0xff]
    %v427 = vld [vmem:[#allocation8 + $0xd0] sm:$0xff]
    %v428 = vld [vmem:[#allocation8 + $0xd8] sm:$0xff]
    %v429 = vld [vmem:[#allocation8 + $0xe0] sm:$0xff]
    %v430 = vld [vmem:[#allocation8 + $0xe8] sm:$0xff]
    %v431 = vld [vmem:[#allocation8 + $0xf0] sm:$0xff]
    %v432 = vld [vmem:[#allocation8 + $0xf8] sm:$0xff]
    %v433 = vld [vmem:[#allocation10] sm:$0x3]
    %v435 = vlaneseq
    %v436 = vshrl.u32 %v435, 7
    %v437 = vsub.s32 0, %v436
    %v438 = vrot.slane %v433, %v437
    %v439 = vlaneseq
    %v440 = vshrl.u32 %v439, 7
    %v441 = vsub.s32 1, %v440
    %v442 = vrot.slane %v433, %v441
    %445 = vmatprep.subr.mxu0 %v432
    %446 = vmatpush1.msra.mxu0 %v431
    %447 = vmatprep.subr.mxu0 %v430
    %448 = vmatpush1.msra.mxu0 %v429
    %449 = vmatprep.subr.mxu0 %v428
    %450 = vmatpush1.msra.mxu0 %v427
    %451 = vmatprep.subr.mxu0 %v426
    %452 = vmatpush1.msra.mxu0 %v425
    %453 = vmatprep.subr.mxu0 %v424
    %454 = vmatpush1.msra.mxu0 %v423
    %455 = vmatprep.subr.mxu0 %v422
    %456 = vmatpush1.msra.mxu0 %v421
    %457 = vmatprep.subr.mxu0 %v420
    %458 = vmatpush1.msra.mxu0 %v419
    %459 = vmatprep.subr.mxu0 %v418
    %460 = vmatpush1.msra.mxu0 %v417
    %461 = vmatprep.subr.mxu0 %v416
    %462 = vmatpush1.msra.mxu0 %v415
    %463 = vmatprep.subr.mxu0 %v414
    %464 = vmatpush1.msra.mxu0 %v413
    %465 = vmatprep.subr.mxu0 %v412
    %466 = vmatpush1.msra.mxu0 %v411
    %467 = vmatprep.subr.mxu0 %v410
    %468 = vmatpush1.msra.mxu0 %v409
    %469 = vmatprep.subr.mxu0 %v408
    %470 = vmatpush1.msra.mxu0 %v407
    %471 = vmatprep.subr.mxu0 %v406
    %472 = vmatpush1.msra.mxu0 %v405
    %473 = vmatprep.subr.mxu0 %v404
    %474 = vmatpush1.msra.mxu0 %v403
    %475 = vmatprep.subr.mxu0 %v402
    %476 = vmatpush1.msra.mxu0 %v401
    %477 = vmatprep.subr.mxu0 0.0
    %478 = vmatpush2.msra.mxu0 0.0
    %479 = vmatprep.subr.mxu0 0.0
    %480 = vmatpush2.msra.mxu0 0.0
    %481 = vmatprep.subr.mxu0 0.0
    %482 = vmatpush2.msra.mxu0 0.0
    %483 = vmatprep.subr.mxu0 0.0
    %484 = vmatpush2.msra.mxu0 0.0
    %485 = vmatprep.subr.mxu0 0.0
    %486 = vmatpush2.msra.mxu0 0.0
    %487 = vmatprep.subr.mxu0 0.0
    %488 = vmatpush2.msra.mxu0 0.0
    %489 = vmatprep.subr.mxu0 0.0
    %490 = vmatpush2.msra.mxu0 0.0
    %491 = vmatprep.subr.mxu0 0.0
    %492 = vmatpush2.msra.mxu0 0.0
    %493 = vmatprep.subr.mxu0 0.0
    %494 = vmatpush2.msra.mxu0 0.0
    %495 = vmatprep.subr.mxu0 0.0
    %496 = vmatpush2.msra.mxu0 0.0
    %497 = vmatprep.subr.mxu0 0.0
    %498 = vmatpush2.msra.mxu0 0.0
    %499 = vmatprep.subr.mxu0 0.0
    %500 = vmatpush2.msra.mxu0 0.0
    %501 = vmatprep.subr.mxu0 0.0
    %502 = vmatpush2.msra.mxu0 0.0
    %503 = vmatprep.subr.mxu0 0.0
    %504 = vmatpush2.msra.mxu0 0.0
    %505 = vmatprep.subr.mxu0 0.0
    %506 = vmatpush2.msra.mxu0 0.0
    %507 = vmatprep.subr.mxu0 0.0
    %508 = vmatpush2.msra.mxu0 0.0
    %509 = vmatprep.mubr.f32.mxu0 0.0
    %510 = vmatmul.mubr.f32.gmra.mxu0 %v400
    %v511 = vpop.f32.mrf.mxu0
    %v512 = vadd.f32 %v438, %v511
    %v513 = vpop.f32.mrf.mxu0
    %v514 = vadd.f32 %v442, %v513
    %515 = vdwg.mxu0
    %v516 = vxor.u32 %v512, 2147483648
    %v517 = vxor.u32 %v514, 2147483648
    %v518 = vmul.f32 %v516, 1.442695
    %v519 = vpow.pop %v518
    %v520 = vmul.f32 %v517, 1.442695
    %v521 = vpow.pop %v520
    %v522 = vadd.f32 %v519, 1.0
    %v523 = vadd.f32 %v521, 1.0
    %v524 = vrcp.pop %v522
    %v525 = vmul.f32 1.0, %v524
    %v526 = vrcp.pop %v523
    %v527 = vmul.f32 1.0, %v526
    %v528 = vtanh.pop %v514
    %v529 = vld [vmem:[#allocation3] sm:$0x3]
    %v530 = vmul.f32 %v529, %v525
    %v531 = vmul.f32 %v528, %v525
    %533 = vrot.lane.b32.xlu0 %v531, 64
    %v534 = vpop.permute.xlu0 %533
    %v536 = vadd.f32 %v530, %v534
    %v537 = vtanh.pop %v536
    %v538 = vmul.f32 %v537, %v527
    %539 = vst.msk [vmem:[#allocation2] sm:$0x3] %vm82, %v538
    %540 = vst.msk [vmem:[#allocation3] sm:$0x3] %vm82, %v536
    %541 = vst.msk [vmem:[#allocation4] sm:$0x3] %vm82, %v538
    %v542 = vld [vmem:[%s238] sm:$0x3]
    %544 = vrot.lane.b32.xlu0 %v542, 64
    %v545 = vpop.permute.xlu0 %544
    %547 = vst.msk [vmem:[#allocation4] sm:$0x3] %vm94, %v545
    %v548 = vld [vmem:[#allocation4] sm:$0x3]
    %v549 = vld [vmem:[%s246] sm:$0xff]
    %v550 = vld [vmem:[%s246 + $0x8] sm:$0xff]
    %v551 = vld [vmem:[%s246 + $0x10] sm:$0xff]
    %v552 = vld [vmem:[%s246 + $0x18] sm:$0xff]
    %v553 = vld [vmem:[%s246 + $0x20] sm:$0xff]
    %v554 = vld [vmem:[%s246 + $0x28] sm:$0xff]
    %v555 = vld [vmem:[%s246 + $0x30] sm:$0xff]
    %v556 = vld [vmem:[%s246 + $0x38] sm:$0xff]
    %v557 = vld [vmem:[%s246 + $0x40] sm:$0xff]
    %v558 = vld [vmem:[%s246 + $0x48] sm:$0xff]
    %v559 = vld [vmem:[%s246 + $0x50] sm:$0xff]
    %v560 = vld [vmem:[%s246 + $0x58] sm:$0xff]
    %v561 = vld [vmem:[%s246 + $0x60] sm:$0xff]
    %v562 = vld [vmem:[%s246 + $0x68] sm:$0xff]
    %v563 = vld [vmem:[%s246 + $0x70] sm:$0xff]
    %v564 = vld [vmem:[%s246 + $0x78] sm:$0xff]
    %v565 = vld [vmem:[%s246 + $0x80] sm:$0xff]
    %v566 = vld [vmem:[%s246 + $0x88] sm:$0xff]
    %v567 = vld [vmem:[%s246 + $0x90] sm:$0xff]
    %v568 = vld [vmem:[%s246 + $0x98] sm:$0xff]
    %v569 = vld [vmem:[%s246 + $0xa0] sm:$0xff]
    %v570 = vld [vmem:[%s246 + $0xa8] sm:$0xff]
    %v571 = vld [vmem:[%s246 + $0xb0] sm:$0xff]
    %v572 = vld [vmem:[%s246 + $0xb8] sm:$0xff]
    %v573 = vld [vmem:[%s246 + $0xc0] sm:$0xff]
    %v574 = vld [vmem:[%s246 + $0xc8] sm:$0xff]
    %v575 = vld [vmem:[%s246 + $0xd0] sm:$0xff]
    %v576 = vld [vmem:[%s246 + $0xd8] sm:$0xff]
    %v577 = vld [vmem:[%s246 + $0xe0] sm:$0xff]
    %v578 = vld [vmem:[%s246 + $0xe8] sm:$0xff]
    %v579 = vld [vmem:[%s246 + $0xf0] sm:$0xff]
    %v580 = vld [vmem:[%s246 + $0xf8] sm:$0xff]
    %v581 = vld [vmem:[%s279] sm:$0x3]
    %v583 = vlaneseq
    %v584 = vshrl.u32 %v583, 7
    %v585 = vsub.s32 0, %v584
    %v586 = vrot.slane %v581, %v585
    %v587 = vlaneseq
    %v588 = vshrl.u32 %v587, 7
    %v589 = vsub.s32 1, %v588
    %v590 = vrot.slane %v581, %v589
    %593 = vmatprep.subr.mxu0 %v580
    %594 = vmatpush1.msra.mxu0 %v579
    %595 = vmatprep.subr.mxu0 %v578
    %596 = vmatpush1.msra.mxu0 %v577
    %597 = vmatprep.subr.mxu0 %v576
    %598 = vmatpush1.msra.mxu0 %v575
    %599 = vmatprep.subr.mxu0 %v574
    %600 = vmatpush1.msra.mxu0 %v573
    %601 = vmatprep.subr.mxu0 %v572
    %602 = vmatpush1.msra.mxu0 %v571
    %603 = vmatprep.subr.mxu0 %v570
    %604 = vmatpush1.msra.mxu0 %v569
    %605 = vmatprep.subr.mxu0 %v568
    %606 = vmatpush1.msra.mxu0 %v567
    %607 = vmatprep.subr.mxu0 %v566
    %608 = vmatpush1.msra.mxu0 %v565
    %609 = vmatprep.subr.mxu0 %v564
    %610 = vmatpush1.msra.mxu0 %v563
    %611 = vmatprep.subr.mxu0 %v562
    %612 = vmatpush1.msra.mxu0 %v561
    %613 = vmatprep.subr.mxu0 %v560
    %614 = vmatpush1.msra.mxu0 %v559
    %615 = vmatprep.subr.mxu0 %v558
    %616 = vmatpush1.msra.mxu0 %v557
    %617 = vmatprep.subr.mxu0 %v556
    %618 = vmatpush1.msra.mxu0 %v555
    %619 = vmatprep.subr.mxu0 %v554
    %620 = vmatpush1.msra.mxu0 %v553
    %621 = vmatprep.subr.mxu0 %v552
    %622 = vmatpush1.msra.mxu0 %v551
    %623 = vmatprep.subr.mxu0 %v550
    %624 = vmatpush1.msra.mxu0 %v549
    %625 = vmatprep.subr.mxu0 0.0
    %626 = vmatpush2.msra.mxu0 0.0
    %627 = vmatprep.subr.mxu0 0.0
    %628 = vmatpush2.msra.mxu0 0.0
    %629 = vmatprep.subr.mxu0 0.0
    %630 = vmatpush2.msra.mxu0 0.0
    %631 = vmatprep.subr.mxu0 0.0
    %632 = vmatpush2.msra.mxu0 0.0
    %633 = vmatprep.subr.mxu0 0.0
    %634 = vmatpush2.msra.mxu0 0.0
    %635 = vmatprep.subr.mxu0 0.0
    %636 = vmatpush2.msra.mxu0 0.0
    %637 = vmatprep.subr.mxu0 0.0
    %638 = vmatpush2.msra.mxu0 0.0
    %639 = vmatprep.subr.mxu0 0.0
    %640 = vmatpush2.msra.mxu0 0.0
    %641 = vmatprep.subr.mxu0 0.0
    %642 = vmatpush2.msra.mxu0 0.0
    %643 = vmatprep.subr.mxu0 0.0
    %644 = vmatpush2.msra.mxu0 0.0
    %645 = vmatprep.subr.mxu0 0.0
    %646 = vmatpush2.msra.mxu0 0.0
    %647 = vmatprep.subr.mxu0 0.0
    %648 = vmatpush2.msra.mxu0 0.0
    %649 = vmatprep.subr.mxu0 0.0
    %650 = vmatpush2.msra.mxu0 0.0
    %651 = vmatprep.subr.mxu0 0.0
    %652 = vmatpush2.msra.mxu0 0.0
    %653 = vmatprep.subr.mxu0 0.0
    %654 = vmatpush2.msra.mxu0 0.0
    %655 = vmatprep.subr.mxu0 0.0
    %656 = vmatpush2.msra.mxu0 0.0
    %657 = vmatprep.mubr.f32.mxu0 0.0
    %658 = vmatmul.mubr.f32.gmra.mxu0 %v548
    %v659 = vpop.f32.mrf.mxu0
    %v660 = vadd.f32 %v586, %v659
    %v661 = vpop.f32.mrf.mxu0
    %v662 = vadd.f32 %v590, %v661
    %663 = vdwg.mxu0
    %v664 = vxor.u32 %v660, 2147483648
    %v665 = vxor.u32 %v662, 2147483648
    %v666 = vmul.f32 %v664, 1.442695
    %v667 = vpow.pop %v666
    %v668 = vmul.f32 %v665, 1.442695
    %v669 = vpow.pop %v668
    %v670 = vadd.f32 %v667, 1.0
    %v671 = vadd.f32 %v669, 1.0
    %v672 = vrcp.pop %v670
    %v673 = vmul.f32 1.0, %v672
    %v674 = vrcp.pop %v671
    %v675 = vmul.f32 1.0, %v674
    %v676 = vtanh.pop %v662
    %v677 = vld [vmem:[%s376] sm:$0x3]
    %v678 = vmul.f32 %v677, %v673
    %v679 = vmul.f32 %v676, %v673
    %681 = vrot.lane.b32.xlu0 %v679, 64
    %v682 = vpop.permute.xlu0 %681
    %v684 = vadd.f32 %v678, %v682
    %v685 = vtanh.pop %v684
    %v686 = vmul.f32 %v685, %v675
    %687 = vst.msk [vmem:[%s238] sm:$0x3] %vm82, %v686
    %688 = vst.msk [vmem:[%s376] sm:$0x3] %vm82, %v684
    %s689 = scalar_lea.vmem [#allocation14], 2
    %690 = vst.msk [vmem:[%s689] sm:$0x3] %vm82, %v686
    %v691 = vadd.f32 %v390, %v392
    %s692 = scalar_lea.vmem [#allocation5], 4
    %v693 = vld [vmem:[%s692] sm:$0x3]
    %694 = vst.msk [vmem:[#allocation4] sm:$0x3] %vm82, %v693
    %v695 = vld [vmem:[#allocation2] sm:$0x3]
    %697 = vrot.lane.b32.xlu0 %v695, 64
    %v698 = vpop.permute.xlu0 %697
    %700 = vst.msk [vmem:[#allocation4] sm:$0x3] %vm94, %v698
    %v701 = vld [vmem:[#allocation4] sm:$0x3]
    %v702 = vld [vmem:[#allocation8] sm:$0xff]
    %v703 = vld [vmem:[#allocation8 + $0x8] sm:$0xff]
    %v704 = vld [vmem:[#allocation8 + $0x10] sm:$0xff]
    %v705 = vld [vmem:[#allocation8 + $0x18] sm:$0xff]
    %v706 = vld [vmem:[#allocation8 + $0x20] sm:$0xff]
    %v707 = vld [vmem:[#allocation8 + $0x28] sm:$0xff]
    %v708 = vld [vmem:[#allocation8 + $0x30] sm:$0xff]
    %v709 = vld [vmem:[#allocation8 + $0x38] sm:$0xff]
    %v710 = vld [vmem:[#allocation8 + $0x40] sm:$0xff]
    %v711 = vld [vmem:[#allocation8 + $0x48] sm:$0xff]
    %v712 = vld [vmem:[#allocation8 + $0x50] sm:$0xff]
    %v713 = vld [vmem:[#allocation8 + $0x58] sm:$0xff]
    %v714 = vld [vmem:[#allocation8 + $0x60] sm:$0xff]
    %v715 = vld [vmem:[#allocation8 + $0x68] sm:$0xff]
    %v716 = vld [vmem:[#allocation8 + $0x70] sm:$0xff]
    %v717 = vld [vmem:[#allocation8 + $0x78] sm:$0xff]
    %v718 = vld [vmem:[#allocation8 + $0x80] sm:$0xff]
    %v719 = vld [vmem:[#allocation8 + $0x88] sm:$0xff]
    %v720 = vld [vmem:[#allocation8 + $0x90] sm:$0xff]
    %v721 = vld [vmem:[#allocation8 + $0x98] sm:$0xff]
    %v722 = vld [vmem:[#allocation8 + $0xa0] sm:$0xff]
    %v723 = vld [vmem:[#allocation8 + $0xa8] sm:$0xff]
    %v724 = vld [vmem:[#allocation8 + $0xb0] sm:$0xff]
    %v725 = vld [vmem:[#allocation8 + $0xb8] sm:$0xff]
    %v726 = vld [vmem:[#allocation8 + $0xc0] sm:$0xff]
    %v727 = vld [vmem:[#allocation8 + $0xc8] sm:$0xff]
    %v728 = vld [vmem:[#allocation8 + $0xd0] sm:$0xff]
    %v729 = vld [vmem:[#allocation8 + $0xd8] sm:$0xff]
    %v730 = vld [vmem:[#allocation8 + $0xe0] sm:$0xff]
    %v731 = vld [vmem:[#allocation8 + $0xe8] sm:$0xff]
    %v732 = vld [vmem:[#allocation8 + $0xf0] sm:$0xff]
    %v733 = vld [vmem:[#allocation8 + $0xf8] sm:$0xff]
    %v734 = vld [vmem:[#allocation10] sm:$0x3]
    %v736 = vlaneseq
    %v737 = vshrl.u32 %v736, 7
    %v738 = vsub.s32 0, %v737
    %v739 = vrot.slane %v734, %v738
    %v740 = vlaneseq
    %v741 = vshrl.u32 %v740, 7
    %v742 = vsub.s32 1, %v741
    %v743 = vrot.slane %v734, %v742
    %746 = vmatprep.subr.mxu0 %v733
    %747 = vmatpush1.msra.mxu0 %v732
    %748 = vmatprep.subr.mxu0 %v731
    %749 = vmatpush1.msra.mxu0 %v730
    %750 = vmatprep.subr.mxu0 %v729
    %751 = vmatpush1.msra.mxu0 %v728
    %752 = vmatprep.subr.mxu0 %v727
    %753 = vmatpush1.msra.mxu0 %v726
    %754 = vmatprep.subr.mxu0 %v725
    %755 = vmatpush1.msra.mxu0 %v724
    %756 = vmatprep.subr.mxu0 %v723
    %757 = vmatpush1.msra.mxu0 %v722
    %758 = vmatprep.subr.mxu0 %v721
    %759 = vmatpush1.msra.mxu0 %v720
    %760 = vmatprep.subr.mxu0 %v719
    %761 = vmatpush1.msra.mxu0 %v718
    %762 = vmatprep.subr.mxu0 %v717
    %763 = vmatpush1.msra.mxu0 %v716
    %764 = vmatprep.subr.mxu0 %v715
    %765 = vmatpush1.msra.mxu0 %v714
    %766 = vmatprep.subr.mxu0 %v713
    %767 = vmatpush1.msra.mxu0 %v712
    %768 = vmatprep.subr.mxu0 %v711
    %769 = vmatpush1.msra.mxu0 %v710
    %770 = vmatprep.subr.mxu0 %v709
    %771 = vmatpush1.msra.mxu0 %v708
    %772 = vmatprep.subr.mxu0 %v707
    %773 = vmatpush1.msra.mxu0 %v706
    %774 = vmatprep.subr.mxu0 %v705
    %775 = vmatpush1.msra.mxu0 %v704
    %776 = vmatprep.subr.mxu0 %v703
    %777 = vmatpush1.msra.mxu0 %v702
    %778 = vmatprep.subr.mxu0 0.0
    %779 = vmatpush2.msra.mxu0 0.0
    %780 = vmatprep.subr.mxu0 0.0
    %781 = vmatpush2.msra.mxu0 0.0
    %782 = vmatprep.subr.mxu0 0.0
    %783 = vmatpush2.msra.mxu0 0.0
    %784 = vmatprep.subr.mxu0 0.0
    %785 = vmatpush2.msra.mxu0 0.0
    %786 = vmatprep.subr.mxu0 0.0
    %787 = vmatpush2.msra.mxu0 0.0
    %788 = vmatprep.subr.mxu0 0.0
    %789 = vmatpush2.msra.mxu0 0.0
    %790 = vmatprep.subr.mxu0 0.0
    %791 = vmatpush2.msra.mxu0 0.0
    %792 = vmatprep.subr.mxu0 0.0
    %793 = vmatpush2.msra.mxu0 0.0
    %794 = vmatprep.subr.mxu0 0.0
    %795 = vmatpush2.msra.mxu0 0.0
    %796 = vmatprep.subr.mxu0 0.0
    %797 = vmatpush2.msra.mxu0 0.0
    %798 = vmatprep.subr.mxu0 0.0
    %799 = vmatpush2.msra.mxu0 0.0
    %800 = vmatprep.subr.mxu0 0.0
    %801 = vmatpush2.msra.mxu0 0.0
    %802 = vmatprep.subr.mxu0 0.0
    %803 = vmatpush2.msra.mxu0 0.0
    %804 = vmatprep.subr.mxu0 0.0
    %805 = vmatpush2.msra.mxu0 0.0
    %806 = vmatprep.subr.mxu0 0.0
    %807 = vmatpush2.msra.mxu0 0.0
    %808 = vmatprep.subr.mxu0 0.0
    %809 = vmatpush2.msra.mxu0 0.0
    %810 = vmatprep.mubr.f32.mxu0 0.0
    %811 = vmatmul.mubr.f32.gmra.mxu0 %v701
    %v812 = vpop.f32.mrf.mxu0
    %v813 = vadd.f32 %v739, %v812
    %v814 = vpop.f32.mrf.mxu0
    %v815 = vadd.f32 %v743, %v814
    %816 = vdwg.mxu0
    %v817 = vxor.u32 %v813, 2147483648
    %v818 = vxor.u32 %v815, 2147483648
    %v819 = vmul.f32 %v817, 1.442695
    %v820 = vpow.pop %v819
    %v821 = vmul.f32 %v818, 1.442695
    %v822 = vpow.pop %v821
    %v823 = vadd.f32 %v820, 1.0
    %v824 = vadd.f32 %v822, 1.0
    %v825 = vrcp.pop %v823
    %v826 = vmul.f32 1.0, %v825
    %v827 = vrcp.pop %v824
    %v828 = vmul.f32 1.0, %v827
    %v829 = vtanh.pop %v815
    %v830 = vld [vmem:[#allocation3] sm:$0x3]
    %v831 = vmul.f32 %v830, %v826
    %v832 = vmul.f32 %v829, %v826
    %834 = vrot.lane.b32.xlu0 %v832, 64
    %v835 = vpop.permute.xlu0 %834
    %v837 = vadd.f32 %v831, %v835
    %v838 = vtanh.pop %v837
    %v839 = vmul.f32 %v838, %v828
    %840 = vst.msk [vmem:[#allocation2] sm:$0x3] %vm82, %v839
    %841 = vst.msk [vmem:[#allocation3] sm:$0x3] %vm82, %v837
    %842 = vst.msk [vmem:[#allocation4] sm:$0x3] %vm82, %v839
    %v843 = vld [vmem:[%s238] sm:$0x3]
    %845 = vrot.lane.b32.xlu0 %v843, 64
    %v846 = vpop.permute.xlu0 %845
    %848 = vst.msk [vmem:[#allocation4] sm:$0x3] %vm94, %v846
    %v849 = vld [vmem:[#allocation4] sm:$0x3]
    %v850 = vld [vmem:[%s246] sm:$0xff]
    %v851 = vld [vmem:[%s246 + $0x8] sm:$0xff]
    %v852 = vld [vmem:[%s246 + $0x10] sm:$0xff]
    %v853 = vld [vmem:[%s246 + $0x18] sm:$0xff]
    %v854 = vld [vmem:[%s246 + $0x20] sm:$0xff]
    %v855 = vld [vmem:[%s246 + $0x28] sm:$0xff]
    %v856 = vld [vmem:[%s246 + $0x30] sm:$0xff]
    %v857 = vld [vmem:[%s246 + $0x38] sm:$0xff]
    %v858 = vld [vmem:[%s246 + $0x40] sm:$0xff]
    %v859 = vld [vmem:[%s246 + $0x48] sm:$0xff]
    %v860 = vld [vmem:[%s246 + $0x50] sm:$0xff]
    %v861 = vld [vmem:[%s246 + $0x58] sm:$0xff]
    %v862 = vld [vmem:[%s246 + $0x60] sm:$0xff]
    %v863 = vld [vmem:[%s246 + $0x68] sm:$0xff]
    %v864 = vld [vmem:[%s246 + $0x70] sm:$0xff]
    %v865 = vld [vmem:[%s246 + $0x78] sm:$0xff]
    %v866 = vld [vmem:[%s246 + $0x80] sm:$0xff]
    %v867 = vld [vmem:[%s246 + $0x88] sm:$0xff]
    %v868 = vld [vmem:[%s246 + $0x90] sm:$0xff]
    %v869 = vld [vmem:[%s246 + $0x98] sm:$0xff]
    %v870 = vld [vmem:[%s246 + $0xa0] sm:$0xff]
    %v871 = vld [vmem:[%s246 + $0xa8] sm:$0xff]
    %v872 = vld [vmem:[%s246 + $0xb0] sm:$0xff]
    %v873 = vld [vmem:[%s246 + $0xb8] sm:$0xff]
    %v874 = vld [vmem:[%s246 + $0xc0] sm:$0xff]
    %v875 = vld [vmem:[%s246 + $0xc8] sm:$0xff]
    %v876 = vld [vmem:[%s246 + $0xd0] sm:$0xff]
    %v877 = vld [vmem:[%s246 + $0xd8] sm:$0xff]
    %v878 = vld [vmem:[%s246 + $0xe0] sm:$0xff]
    %v879 = vld [vmem:[%s246 + $0xe8] sm:$0xff]
    %v880 = vld [vmem:[%s246 + $0xf0] sm:$0xff]
    %v881 = vld [vmem:[%s246 + $0xf8] sm:$0xff]
    %v882 = vld [vmem:[%s279] sm:$0x3]
    %v884 = vlaneseq
    %v885 = vshrl.u32 %v884, 7
    %v886 = vsub.s32 0, %v885
    %v887 = vrot.slane %v882, %v886
    %v888 = vlaneseq
    %v889 = vshrl.u32 %v888, 7
    %v890 = vsub.s32 1, %v889
    %v891 = vrot.slane %v882, %v890
    %894 = vmatprep.subr.mxu0 %v881
    %895 = vmatpush1.msra.mxu0 %v880
    %896 = vmatprep.subr.mxu0 %v879
    %897 = vmatpush1.msra.mxu0 %v878
    %898 = vmatprep.subr.mxu0 %v877
    %899 = vmatpush1.msra.mxu0 %v876
    %900 = vmatprep.subr.mxu0 %v875
    %901 = vmatpush1.msra.mxu0 %v874
    %902 = vmatprep.subr.mxu0 %v873
    %903 = vmatpush1.msra.mxu0 %v872
    %904 = vmatprep.subr.mxu0 %v871
    %905 = vmatpush1.msra.mxu0 %v870
    %906 = vmatprep.subr.mxu0 %v869
    %907 = vmatpush1.msra.mxu0 %v868
    %908 = vmatprep.subr.mxu0 %v867
    %909 = vmatpush1.msra.mxu0 %v866
    %910 = vmatprep.subr.mxu0 %v865
    %911 = vmatpush1.msra.mxu0 %v864
    %912 = vmatprep.subr.mxu0 %v863
    %913 = vmatpush1.msra.mxu0 %v862
    %914 = vmatprep.subr.mxu0 %v861
    %915 = vmatpush1.msra.mxu0 %v860
    %916 = vmatprep.subr.mxu0 %v859
    %917 = vmatpush1.msra.mxu0 %v858
    %918 = vmatprep.subr.mxu0 %v857
    %919 = vmatpush1.msra.mxu0 %v856
    %920 = vmatprep.subr.mxu0 %v855
    %921 = vmatpush1.msra.mxu0 %v854
    %922 = vmatprep.subr.mxu0 %v853
    %923 = vmatpush1.msra.mxu0 %v852
    %924 = vmatprep.subr.mxu0 %v851
    %925 = vmatpush1.msra.mxu0 %v850
    %926 = vmatprep.subr.mxu0 0.0
    %927 = vmatpush2.msra.mxu0 0.0
    %928 = vmatprep.subr.mxu0 0.0
    %929 = vmatpush2.msra.mxu0 0.0
    %930 = vmatprep.subr.mxu0 0.0
    %931 = vmatpush2.msra.mxu0 0.0
    %932 = vmatprep.subr.mxu0 0.0
    %933 = vmatpush2.msra.mxu0 0.0
    %934 = vmatprep.subr.mxu0 0.0
    %935 = vmatpush2.msra.mxu0 0.0
    %936 = vmatprep.subr.mxu0 0.0
    %937 = vmatpush2.msra.mxu0 0.0
    %938 = vmatprep.subr.mxu0 0.0
    %939 = vmatpush2.msra.mxu0 0.0
    %940 = vmatprep.subr.mxu0 0.0
    %941 = vmatpush2.msra.mxu0 0.0
    %942 = vmatprep.subr.mxu0 0.0
    %943 = vmatpush2.msra.mxu0 0.0
    %944 = vmatprep.subr.mxu0 0.0
    %945 = vmatpush2.msra.mxu0 0.0
    %946 = vmatprep.subr.mxu0 0.0
    %947 = vmatpush2.msra.mxu0 0.0
    %948 = vmatprep.subr.mxu0 0.0
    %949 = vmatpush2.msra.mxu0 0.0
    %950 = vmatprep.subr.mxu0 0.0
    %951 = vmatpush2.msra.mxu0 0.0
    %952 = vmatprep.subr.mxu0 0.0
    %953 = vmatpush2.msra.mxu0 0.0
    %954 = vmatprep.subr.mxu0 0.0
    %955 = vmatpush2.msra.mxu0 0.0
    %956 = vmatprep.subr.mxu0 0.0
    %957 = vmatpush2.msra.mxu0 0.0
    %958 = vmatprep.mubr.f32.mxu0 0.0
    %959 = vmatmul.mubr.f32.gmra.mxu0 %v849
    %v960 = vpop.f32.mrf.mxu0
    %v961 = vadd.f32 %v887, %v960
    %v962 = vpop.f32.mrf.mxu0
    %v963 = vadd.f32 %v891, %v962
    %964 = vdwg.mxu0
    %v965 = vxor.u32 %v961, 2147483648
    %v966 = vxor.u32 %v963, 2147483648
    %v967 = vmul.f32 %v965, 1.442695
    %v968 = vpow.pop %v967
    %v969 = vmul.f32 %v966, 1.442695
    %v970 = vpow.pop %v969
    %v971 = vadd.f32 %v968, 1.0
    %v972 = vadd.f32 %v970, 1.0
    %v973 = vrcp.pop %v971
    %v974 = vmul.f32 1.0, %v973
    %v975 = vrcp.pop %v972
    %v976 = vmul.f32 1.0, %v975
    %v977 = vtanh.pop %v963
    %v978 = vld [vmem:[%s376] sm:$0x3]
    %v979 = vmul.f32 %v978, %v974
    %v980 = vmul.f32 %v977, %v974
    %982 = vrot.lane.b32.xlu0 %v980, 64
    %v983 = vpop.permute.xlu0 %982
    %v985 = vadd.f32 %v979, %v983
    %v986 = vtanh.pop %v985
    %v987 = vmul.f32 %v986, %v976
    %988 = vst.msk [vmem:[%s238] sm:$0x3] %vm82, %v987
    %989 = vst.msk [vmem:[%s376] sm:$0x3] %vm82, %v985
    %s990 = scalar_lea.vmem [#allocation14], 4
    %991 = vst.msk [vmem:[%s990] sm:$0x3] %vm82, %v987
    %v992 = vadd.f32 %v691, %v693
    %s993 = scalar_lea.vmem [#allocation5], 6
    %v994 = vld [vmem:[%s993] sm:$0x3]
    %995 = vst.msk [vmem:[#allocation4] sm:$0x3] %vm82, %v994
    %v996 = vld [vmem:[#allocation2] sm:$0x3]
    %998 = vrot.lane.b32.xlu0 %v996, 64
    %v999 = vpop.permute.xlu0 %998
    %1001 = vst.msk [vmem:[#allocation4] sm:$0x3] %vm94, %v999
    %v1002 = vld [vmem:[#allocation4] sm:$0x3]
    %v1003 = vld [vmem:[#allocation8] sm:$0xff]
    %v1004 = vld [vmem:[#allocation8 + $0x8] sm:$0xff]
    %v1005 = vld [vmem:[#allocation8 + $0x10] sm:$0xff]
    %v1006 = vld [vmem:[#allocation8 + $0x18] sm:$0xff]
    %v1007 = vld [vmem:[#allocation8 + $0x20] sm:$0xff]
    %v1008 = vld [vmem:[#allocation8 + $0x28] sm:$0xff]
    %v1009 = vld [vmem:[#allocation8 + $0x30] sm:$0xff]
    %v1010 = vld [vmem:[#allocation8 + $0x38] sm:$0xff]
    %v1011 = vld [vmem:[#allocation8 + $0x40] sm:$0xff]
    %v1012 = vld [vmem:[#allocation8 + $0x48] sm:$0xff]
    %v1013 = vld [vmem:[#allocation8 + $0x50] sm:$0xff]
    %v1014 = vld [vmem:[#allocation8 + $0x58] sm:$0xff]
    %v1015 = vld [vmem:[#allocation8 + $0x60] sm:$0xff]
    %v1016 = vld [vmem:[#allocation8 + $0x68] sm:$0xff]
    %v1017 = vld [vmem:[#allocation8 + $0x70] sm:$0xff]
    %v1018 = vld [vmem:[#allocation8 + $0x78] sm:$0xff]
    %v1019 = vld [vmem:[#allocation8 + $0x80] sm:$0xff]
    %v1020 = vld [vmem:[#allocation8 + $0x88] sm:$0xff]
    %v1021 = vld [vmem:[#allocation8 + $0x90] sm:$0xff]
    %v1022 = vld [vmem:[#allocation8 + $0x98] sm:$0xff]
    %v1023 = vld [vmem:[#allocation8 + $0xa0] sm:$0xff]
    %v1024 = vld [vmem:[#allocation8 + $0xa8] sm:$0xff]
    %v1025 = vld [vmem:[#allocation8 + $0xb0] sm:$0xff]
    %v1026 = vld [vmem:[#allocation8 + $0xb8] sm:$0xff]
    %v1027 = vld [vmem:[#allocation8 + $0xc0] sm:$0xff]
    %v1028 = vld [vmem:[#allocation8 + $0xc8] sm:$0xff]
    %v1029 = vld [vmem:[#allocation8 + $0xd0] sm:$0xff]
    %v1030 = vld [vmem:[#allocation8 + $0xd8] sm:$0xff]
    %v1031 = vld [vmem:[#allocation8 + $0xe0] sm:$0xff]
    %v1032 = vld [vmem:[#allocation8 + $0xe8] sm:$0xff]
    %v1033 = vld [vmem:[#allocation8 + $0xf0] sm:$0xff]
    %v1034 = vld [vmem:[#allocation8 + $0xf8] sm:$0xff]
    %v1035 = vld [vmem:[#allocation10] sm:$0x3]
    %v1037 = vlaneseq
    %v1038 = vshrl.u32 %v1037, 7
    %v1039 = vsub.s32 0, %v1038
    %v1040 = vrot.slane %v1035, %v1039
    %v1041 = vlaneseq
    %v1042 = vshrl.u32 %v1041, 7
    %v1043 = vsub.s32 1, %v1042
    %v1044 = vrot.slane %v1035, %v1043
    %1047 = vmatprep.subr.mxu0 %v1034
    %1048 = vmatpush1.msra.mxu0 %v1033
    %1049 = vmatprep.subr.mxu0 %v1032
    %1050 = vmatpush1.msra.mxu0 %v1031
    %1051 = vmatprep.subr.mxu0 %v1030
    %1052 = vmatpush1.msra.mxu0 %v1029
    %1053 = vmatprep.subr.mxu0 %v1028
    %1054 = vmatpush1.msra.mxu0 %v1027
    %1055 = vmatprep.subr.mxu0 %v1026
    %1056 = vmatpush1.msra.mxu0 %v1025
    %1057 = vmatprep.subr.mxu0 %v1024
    %1058 = vmatpush1.msra.mxu0 %v1023
    %1059 = vmatprep.subr.mxu0 %v1022
    %1060 = vmatpush1.msra.mxu0 %v1021
    %1061 = vmatprep.subr.mxu0 %v1020
    %1062 = vmatpush1.msra.mxu0 %v1019
    %1063 = vmatprep.subr.mxu0 %v1018
    %1064 = vmatpush1.msra.mxu0 %v1017
    %1065 = vmatprep.subr.mxu0 %v1016
    %1066 = vmatpush1.msra.mxu0 %v1015
    %1067 = vmatprep.subr.mxu0 %v1014
    %1068 = vmatpush1.msra.mxu0 %v1013
    %1069 = vmatprep.subr.mxu0 %v1012
    %1070 = vmatpush1.msra.mxu0 %v1011
    %1071 = vmatprep.subr.mxu0 %v1010
    %1072 = vmatpush1.msra.mxu0 %v1009
    %1073 = vmatprep.subr.mxu0 %v1008
    %1074 = vmatpush1.msra.mxu0 %v1007
    %1075 = vmatprep.subr.mxu0 %v1006
    %1076 = vmatpush1.msra.mxu0 %v1005
    %1077 = vmatprep.subr.mxu0 %v1004
    %1078 = vmatpush1.msra.mxu0 %v1003
    %1079 = vmatprep.subr.mxu0 0.0
    %1080 = vmatpush2.msra.mxu0 0.0
    %1081 = vmatprep.subr.mxu0 0.0
    %1082 = vmatpush2.msra.mxu0 0.0
    %1083 = vmatprep.subr.mxu0 0.0
    %1084 = vmatpush2.msra.mxu0 0.0
    %1085 = vmatprep.subr.mxu0 0.0
    %1086 = vmatpush2.msra.mxu0 0.0
    %1087 = vmatprep.subr.mxu0 0.0
    %1088 = vmatpush2.msra.mxu0 0.0
    %1089 = vmatprep.subr.mxu0 0.0
    %1090 = vmatpush2.msra.mxu0 0.0
    %1091 = vmatprep.subr.mxu0 0.0
    %1092 = vmatpush2.msra.mxu0 0.0
    %1093 = vmatprep.subr.mxu0 0.0
    %1094 = vmatpush2.msra.mxu0 0.0
    %1095 = vmatprep.subr.mxu0 0.0
    %1096 = vmatpush2.msra.mxu0 0.0
    %1097 = vmatprep.subr.mxu0 0.0
    %1098 = vmatpush2.msra.mxu0 0.0
    %1099 = vmatprep.subr.mxu0 0.0
    %1100 = vmatpush2.msra.mxu0 0.0
    %1101 = vmatprep.subr.mxu0 0.0
    %1102 = vmatpush2.msra.mxu0 0.0
    %1103 = vmatprep.subr.mxu0 0.0
    %1104 = vmatpush2.msra.mxu0 0.0
    %1105 = vmatprep.subr.mxu0 0.0
    %1106 = vmatpush2.msra.mxu0 0.0
    %1107 = vmatprep.subr.mxu0 0.0
    %1108 = vmatpush2.msra.mxu0 0.0
    %1109 = vmatprep.subr.mxu0 0.0
    %1110 = vmatpush2.msra.mxu0 0.0
    %1111 = vmatprep.mubr.f32.mxu0 0.0
    %1112 = vmatmul.mubr.f32.gmra.mxu0 %v1002
    %v1113 = vpop.f32.mrf.mxu0
    %v1114 = vadd.f32 %v1040, %v1113
    %v1115 = vpop.f32.mrf.mxu0
    %v1116 = vadd.f32 %v1044, %v1115
    %1117 = vdwg.mxu0
    %v1118 = vxor.u32 %v1114, 2147483648
    %v1119 = vxor.u32 %v1116, 2147483648
    %v1120 = vmul.f32 %v1118, 1.442695
    %v1121 = vpow.pop %v1120
    %v1122 = vmul.f32 %v1119, 1.442695
    %v1123 = vpow.pop %v1122
    %v1124 = vadd.f32 %v1121, 1.0
    %v1125 = vadd.f32 %v1123, 1.0
    %v1126 = vrcp.pop %v1124
    %v1127 = vmul.f32 1.0, %v1126
    %v1128 = vrcp.pop %v1125
    %v1129 = vmul.f32 1.0, %v1128
    %v1130 = vtanh.pop %v1116
    %v1131 = vld [vmem:[#allocation3] sm:$0x3]
    %v1132 = vmul.f32 %v1131, %v1127
    %v1133 = vmul.f32 %v1130, %v1127
    %1135 = vrot.lane.b32.xlu0 %v1133, 64
    %v1136 = vpop.permute.xlu0 %1135
    %v1138 = vadd.f32 %v1132, %v1136
    %v1139 = vtanh.pop %v1138
    %v1140 = vmul.f32 %v1139, %v1129
    %1141 = vst.msk [vmem:[#allocation2] sm:$0x3] %vm82, %v1140
    %1142 = vst.msk [vmem:[#allocation3] sm:$0x3] %vm82, %v1138
    %1143 = vst.msk [vmem:[#allocation4] sm:$0x3] %vm82, %v1140
    %v1144 = vld [vmem:[%s238] sm:$0x3]
    %1146 = vrot.lane.b32.xlu0 %v1144, 64
    %v1147 = vpop.permute.xlu0 %1146
    %1149 = vst.msk [vmem:[#allocation4] sm:$0x3] %vm94, %v1147
    %v1150 = vld [vmem:[#allocation4] sm:$0x3]
    %v1151 = vld [vmem:[%s246] sm:$0xff]
    %v1152 = vld [vmem:[%s246 + $0x8] sm:$0xff]
    %v1153 = vld [vmem:[%s246 + $0x10] sm:$0xff]
    %v1154 = vld [vmem:[%s246 + $0x18] sm:$0xff]
    %v1155 = vld [vmem:[%s246 + $0x20] sm:$0xff]
    %v1156 = vld [vmem:[%s246 + $0x28] sm:$0xff]
    %v1157 = vld [vmem:[%s246 + $0x30] sm:$0xff]
    %v1158 = vld [vmem:[%s246 + $0x38] sm:$0xff]
    %v1159 = vld [vmem:[%s246 + $0x40] sm:$0xff]
    %v1160 = vld [vmem:[%s246 + $0x48] sm:$0xff]
    %v1161 = vld [vmem:[%s246 + $0x50] sm:$0xff]
    %v1162 = vld [vmem:[%s246 + $0x58] sm:$0xff]
    %v1163 = vld [vmem:[%s246 + $0x60] sm:$0xff]
    %v1164 = vld [vmem:[%s246 + $0x68] sm:$0xff]
    %v1165 = vld [vmem:[%s246 + $0x70] sm:$0xff]
    %v1166 = vld [vmem:[%s246 + $0x78] sm:$0xff]
    %v1167 = vld [vmem:[%s246 + $0x80] sm:$0xff]
    %v1168 = vld [vmem:[%s246 + $0x88] sm:$0xff]
    %v1169 = vld [vmem:[%s246 + $0x90] sm:$0xff]
    %v1170 = vld [vmem:[%s246 + $0x98] sm:$0xff]
    %v1171 = vld [vmem:[%s246 + $0xa0] sm:$0xff]
    %v1172 = vld [vmem:[%s246 + $0xa8] sm:$0xff]
    %v1173 = vld [vmem:[%s246 + $0xb0] sm:$0xff]
    %v1174 = vld [vmem:[%s246 + $0xb8] sm:$0xff]
    %v1175 = vld [vmem:[%s246 + $0xc0] sm:$0xff]
    %v1176 = vld [vmem:[%s246 + $0xc8] sm:$0xff]
    %v1177 = vld [vmem:[%s246 + $0xd0] sm:$0xff]
    %v1178 = vld [vmem:[%s246 + $0xd8] sm:$0xff]
    %v1179 = vld [vmem:[%s246 + $0xe0] sm:$0xff]
    %v1180 = vld [vmem:[%s246 + $0xe8] sm:$0xff]
    %v1181 = vld [vmem:[%s246 + $0xf0] sm:$0xff]
    %v1182 = vld [vmem:[%s246 + $0xf8] sm:$0xff]
    %v1183 = vld [vmem:[%s279] sm:$0x3]
    %v1185 = vlaneseq
    %v1186 = vshrl.u32 %v1185, 7
    %v1187 = vsub.s32 0, %v1186
    %v1188 = vrot.slane %v1183, %v1187
    %v1189 = vlaneseq
    %v1190 = vshrl.u32 %v1189, 7
    %v1191 = vsub.s32 1, %v1190
    %v1192 = vrot.slane %v1183, %v1191
    %1195 = vmatprep.subr.mxu0 %v1182
    %1196 = vmatpush1.msra.mxu0 %v1181
    %1197 = vmatprep.subr.mxu0 %v1180
    %1198 = vmatpush1.msra.mxu0 %v1179
    %1199 = vmatprep.subr.mxu0 %v1178
    %1200 = vmatpush1.msra.mxu0 %v1177
    %1201 = vmatprep.subr.mxu0 %v1176
    %1202 = vmatpush1.msra.mxu0 %v1175
    %1203 = vmatprep.subr.mxu0 %v1174
    %1204 = vmatpush1.msra.mxu0 %v1173
    %1205 = vmatprep.subr.mxu0 %v1172
    %1206 = vmatpush1.msra.mxu0 %v1171
    %1207 = vmatprep.subr.mxu0 %v1170
    %1208 = vmatpush1.msra.mxu0 %v1169
    %1209 = vmatprep.subr.mxu0 %v1168
    %1210 = vmatpush1.msra.mxu0 %v1167
    %1211 = vmatprep.subr.mxu0 %v1166
    %1212 = vmatpush1.msra.mxu0 %v1165
    %1213 = vmatprep.subr.mxu0 %v1164
    %1214 = vmatpush1.msra.mxu0 %v1163
    %1215 = vmatprep.subr.mxu0 %v1162
    %1216 = vmatpush1.msra.mxu0 %v1161
    %1217 = vmatprep.subr.mxu0 %v1160
    %1218 = vmatpush1.msra.mxu0 %v1159
    %1219 = vmatprep.subr.mxu0 %v1158
    %1220 = vmatpush1.msra.mxu0 %v1157
    %1221 = vmatprep.subr.mxu0 %v1156
    %1222 = vmatpush1.msra.mxu0 %v1155
    %1223 = vmatprep.subr.mxu0 %v1154
    %1224 = vmatpush1.msra.mxu0 %v1153
    %1225 = vmatprep.subr.mxu0 %v1152
    %1226 = vmatpush1.msra.mxu0 %v1151
    %1227 = vmatprep.subr.mxu0 0.0
    %1228 = vmatpush2.msra.mxu0 0.0
    %1229 = vmatprep.subr.mxu0 0.0
    %1230 = vmatpush2.msra.mxu0 0.0
    %1231 = vmatprep.subr.mxu0 0.0
    %1232 = vmatpush2.msra.mxu0 0.0
    %1233 = vmatprep.subr.mxu0 0.0
    %1234 = vmatpush2.msra.mxu0 0.0
    %1235 = vmatprep.subr.mxu0 0.0
    %1236 = vmatpush2.msra.mxu0 0.0
    %1237 = vmatprep.subr.mxu0 0.0
    %1238 = vmatpush2.msra.mxu0 0.0
    %1239 = vmatprep.subr.mxu0 0.0
    %1240 = vmatpush2.msra.mxu0 0.0
    %1241 = vmatprep.subr.mxu0 0.0
    %1242 = vmatpush2.msra.mxu0 0.0
    %1243 = vmatprep.subr.mxu0 0.0
    %1244 = vmatpush2.msra.mxu0 0.0
    %1245 = vmatprep.subr.mxu0 0.0
    %1246 = vmatpush2.msra.mxu0 0.0
    %1247 = vmatprep.subr.mxu0 0.0
    %1248 = vmatpush2.msra.mxu0 0.0
    %1249 = vmatprep.subr.mxu0 0.0
    %1250 = vmatpush2.msra.mxu0 0.0
    %1251 = vmatprep.subr.mxu0 0.0
    %1252 = vmatpush2.msra.mxu0 0.0
    %1253 = vmatprep.subr.mxu0 0.0
    %1254 = vmatpush2.msra.mxu0 0.0
    %1255 = vmatprep.subr.mxu0 0.0
    %1256 = vmatpush2.msra.mxu0 0.0
    %1257 = vmatprep.subr.mxu0 0.0
    %1258 = vmatpush2.msra.mxu0 0.0
    %1259 = vmatprep.mubr.f32.mxu0 0.0
    %1260 = vmatmul.mubr.f32.gmra.mxu0 %v1150
    %v1261 = vpop.f32.mrf.mxu0
    %v1262 = vadd.f32 %v1188, %v1261
    %v1263 = vpop.f32.mrf.mxu0
    %v1264 = vadd.f32 %v1192, %v1263
    %1265 = vdwg.mxu0
    %v1266 = vxor.u32 %v1262, 2147483648
    %v1267 = vxor.u32 %v1264, 2147483648
    %v1268 = vmul.f32 %v1266, 1.442695
    %v1269 = vpow.pop %v1268
    %v1270 = vmul.f32 %v1267, 1.442695
    %v1271 = vpow.pop %v1270
    %v1272 = vadd.f32 %v1269, 1.0
    %v1273 = vadd.f32 %v1271, 1.0
    %v1274 = vrcp.pop %v1272
    %v1275 = vmul.f32 1.0, %v1274
    %v1276 = vrcp.pop %v1273
    %v1277 = vmul.f32 1.0, %v1276
    %v1278 = vtanh.pop %v1264
    %v1279 = vld [vmem:[%s376] sm:$0x3]
    %v1280 = vmul.f32 %v1279, %v1275
    %v1281 = vmul.f32 %v1278, %v1275
    %1283 = vrot.lane.b32.xlu0 %v1281, 64
    %v1284 = vpop.permute.xlu0 %1283
    %v1286 = vadd.f32 %v1280, %v1284
    %v1287 = vtanh.pop %v1286
    %v1288 = vmul.f32 %v1287, %v1277
    %1289 = vst.msk [vmem:[%s238] sm:$0x3] %vm82, %v1288
    %1290 = vst.msk [vmem:[%s376] sm:$0x3] %vm82, %v1286
    %s1291 = scalar_lea.vmem [#allocation14], 6
    %1292 = vst.msk [vmem:[%s1291] sm:$0x3] %vm82, %v1288
    %v1293 = vadd.f32 %v992, %v994
    %s1294 = scalar_lea.vmem [#allocation5], 8
    %v1295 = vld [vmem:[%s1294] sm:$0x3]
    %1296 = vst.msk [vmem:[#allocation4] sm:$0x3] %vm82, %v1295
    %v1297 = vld [vmem:[#allocation2] sm:$0x3]
    %1299 = vrot.lane.b32.xlu0 %v1297, 64
    %v1300 = vpop.permute.xlu0 %1299
    %1302 = vst.msk [vmem:[#allocation4] sm:$0x3] %vm94, %v1300
    %v1303 = vld [vmem:[#allocation4] sm:$0x3]
    %v1304 = vld [vmem:[#allocation8] sm:$0xff]
    %v1305 = vld [vmem:[#allocation8 + $0x8] sm:$0xff]
    %v1306 = vld [vmem:[#allocation8 + $0x10] sm:$0xff]
    %v1307 = vld [vmem:[#allocation8 + $0x18] sm:$0xff]
    %v1308 = vld [vmem:[#allocation8 + $0x20] sm:$0xff]
    %v1309 = vld [vmem:[#allocation8 + $0x28] sm:$0xff]
    %v1310 = vld [vmem:[#allocation8 + $0x30] sm:$0xff]
    %v1311 = vld [vmem:[#allocation8 + $0x38] sm:$0xff]
    %v1312 = vld [vmem:[#allocation8 + $0x40] sm:$0xff]
    %v1313 = vld [vmem:[#allocation8 + $0x48] sm:$0xff]
    %v1314 = vld [vmem:[#allocation8 + $0x50] sm:$0xff]
    %v1315 = vld [vmem:[#allocation8 + $0x58] sm:$0xff]
    %v1316 = vld [vmem:[#allocation8 + $0x60] sm:$0xff]
    %v1317 = vld [vmem:[#allocation8 + $0x68] sm:$0xff]
    %v1318 = vld [vmem:[#allocation8 + $0x70] sm:$0xff]
    %v1319 = vld [vmem:[#allocation8 + $0x78] sm:$0xff]
    %v1320 = vld [vmem:[#allocation8 + $0x80] sm:$0xff]
    %v1321 = vld [vmem:[#allocation8 + $0x88] sm:$0xff]
    %v1322 = vld [vmem:[#allocation8 + $0x90] sm:$0xff]
    %v1323 = vld [vmem:[#allocation8 + $0x98] sm:$0xff]
    %v1324 = vld [vmem:[#allocation8 + $0xa0] sm:$0xff]
    %v1325 = vld [vmem:[#allocation8 + $0xa8] sm:$0xff]
    %v1326 = vld [vmem:[#allocation8 + $0xb0] sm:$0xff]
    %v1327 = vld [vmem:[#allocation8 + $0xb8] sm:$0xff]
    %v1328 = vld [vmem:[#allocation8 + $0xc0] sm:$0xff]
    %v1329 = vld [vmem:[#allocation8 + $0xc8] sm:$0xff]
    %v1330 = vld [vmem:[#allocation8 + $0xd0] sm:$0xff]
    %v1331 = vld [vmem:[#allocation8 + $0xd8] sm:$0xff]
    %v1332 = vld [vmem:[#allocation8 + $0xe0] sm:$0xff]
    %v1333 = vld [vmem:[#allocation8 + $0xe8] sm:$0xff]
    %v1334 = vld [vmem:[#allocation8 + $0xf0] sm:$0xff]
    %v1335 = vld [vmem:[#allocation8 + $0xf8] sm:$0xff]
    %v1336 = vld [vmem:[#allocation10] sm:$0x3]
    %v1338 = vlaneseq
    %v1339 = vshrl.u32 %v1338, 7
    %v1340 = vsub.s32 0, %v1339
    %v1341 = vrot.slane %v1336, %v1340
    %v1342 = vlaneseq
    %v1343 = vshrl.u32 %v1342, 7
    %v1344 = vsub.s32 1, %v1343
    %v1345 = vrot.slane %v1336, %v1344
    %1348 = vmatprep.subr.mxu0 %v1335
    %1349 = vmatpush1.msra.mxu0 %v1334
    %1350 = vmatprep.subr.mxu0 %v1333
    %1351 = vmatpush1.msra.mxu0 %v1332
    %1352 = vmatprep.subr.mxu0 %v1331
    %1353 = vmatpush1.msra.mxu0 %v1330
    %1354 = vmatprep.subr.mxu0 %v1329
    %1355 = vmatpush1.msra.mxu0 %v1328
    %1356 = vmatprep.subr.mxu0 %v1327
    %1357 = vmatpush1.msra.mxu0 %v1326
    %1358 = vmatprep.subr.mxu0 %v1325
    %1359 = vmatpush1.msra.mxu0 %v1324
    %1360 = vmatprep.subr.mxu0 %v1323
    %1361 = vmatpush1.msra.mxu0 %v1322
    %1362 = vmatprep.subr.mxu0 %v1321
    %1363 = vmatpush1.msra.mxu0 %v1320
    %1364 = vmatprep.subr.mxu0 %v1319
    %1365 = vmatpush1.msra.mxu0 %v1318
    %1366 = vmatprep.subr.mxu0 %v1317
    %1367 = vmatpush1.msra.mxu0 %v1316
    %1368 = vmatprep.subr.mxu0 %v1315
    %1369 = vmatpush1.msra.mxu0 %v1314
    %1370 = vmatprep.subr.mxu0 %v1313
    %1371 = vmatpush1.msra.mxu0 %v1312
    %1372 = vmatprep.subr.mxu0 %v1311
    %1373 = vmatpush1.msra.mxu0 %v1310
    %1374 = vmatprep.subr.mxu0 %v1309
    %1375 = vmatpush1.msra.mxu0 %v1308
    %1376 = vmatprep.subr.mxu0 %v1307
    %1377 = vmatpush1.msra.mxu0 %v1306
    %1378 = vmatprep.subr.mxu0 %v1305
    %1379 = vmatpush1.msra.mxu0 %v1304
    %1380 = vmatprep.subr.mxu0 0.0
    %1381 = vmatpush2.msra.mxu0 0.0
    %1382 = vmatprep.subr.mxu0 0.0
    %1383 = vmatpush2.msra.mxu0 0.0
    %1384 = vmatprep.subr.mxu0 0.0
    %1385 = vmatpush2.msra.mxu0 0.0
    %1386 = vmatprep.subr.mxu0 0.0
    %1387 = vmatpush2.msra.mxu0 0.0
    %1388 = vmatprep.subr.mxu0 0.0
    %1389 = vmatpush2.msra.mxu0 0.0
    %1390 = vmatprep.subr.mxu0 0.0
    %1391 = vmatpush2.msra.mxu0 0.0
    %1392 = vmatprep.subr.mxu0 0.0
    %1393 = vmatpush2.msra.mxu0 0.0
    %1394 = vmatprep.subr.mxu0 0.0
    %1395 = vmatpush2.msra.mxu0 0.0
    %1396 = vmatprep.subr.mxu0 0.0
    %1397 = vmatpush2.msra.mxu0 0.0
    %1398 = vmatprep.subr.mxu0 0.0
    %1399 = vmatpush2.msra.mxu0 0.0
    %1400 = vmatprep.subr.mxu0 0.0
    %1401 = vmatpush2.msra.mxu0 0.0
    %1402 = vmatprep.subr.mxu0 0.0
    %1403 = vmatpush2.msra.mxu0 0.0
    %1404 = vmatprep.subr.mxu0 0.0
    %1405 = vmatpush2.msra.mxu0 0.0
    %1406 = vmatprep.subr.mxu0 0.0
    %1407 = vmatpush2.msra.mxu0 0.0
    %1408 = vmatprep.subr.mxu0 0.0
    %1409 = vmatpush2.msra.mxu0 0.0
    %1410 = vmatprep.subr.mxu0 0.0
    %1411 = vmatpush2.msra.mxu0 0.0
    %1412 = vmatprep.mubr.f32.mxu0 0.0
    %1413 = vmatmul.mubr.f32.gmra.mxu0 %v1303
    %v1414 = vpop.f32.mrf.mxu0
    %v1415 = vadd.f32 %v1341, %v1414
    %v1416 = vpop.f32.mrf.mxu0
    %v1417 = vadd.f32 %v1345, %v1416
    %1418 = vdwg.mxu0
    %v1419 = vxor.u32 %v1415, 2147483648
    %v1420 = vxor.u32 %v1417, 2147483648
    %v1421 = vmul.f32 %v1419, 1.442695
    %v1422 = vpow.pop %v1421
    %v1423 = vmul.f32 %v1420, 1.442695
    %v1424 = vpow.pop %v1423
    %v1425 = vadd.f32 %v1422, 1.0
    %v1426 = vadd.f32 %v1424, 1.0
    %v1427 = vrcp.pop %v1425
    %v1428 = vmul.f32 1.0, %v1427
    %v1429 = vrcp.pop %v1426
    %v1430 = vmul.f32 1.0, %v1429
    %v1431 = vtanh.pop %v1417
    %v1432 = vld [vmem:[#allocation3] sm:$0x3]
    %v1433 = vmul.f32 %v1432, %v1428
    %v1434 = vmul.f32 %v1431, %v1428
    %1436 = vrot.lane.b32.xlu0 %v1434, 64
    %v1437 = vpop.permute.xlu0 %1436
    %v1439 = vadd.f32 %v1433, %v1437
    %v1440 = vtanh.pop %v1439
    %v1441 = vmul.f32 %v1440, %v1430
    %1442 = vst.msk [vmem:[#allocation2] sm:$0x3] %vm82, %v1441
    %1443 = vst.msk [vmem:[#allocation3] sm:$0x3] %vm82, %v1439
    %1444 = vst.msk [vmem:[#allocation4] sm:$0x3] %vm82, %v1441
    %v1445 = vld [vmem:[%s238] sm:$0x3]
    %1447 = vrot.lane.b32.xlu0 %v1445, 64
    %v1448 = vpop.permute.xlu0 %1447
    %1450 = vst.msk [vmem:[#allocation4] sm:$0x3] %vm94, %v1448
    %v1451 = vld [vmem:[#allocation4] sm:$0x3]
    %v1452 = vld [vmem:[%s246] sm:$0xff]
    %v1453 = vld [vmem:[%s246 + $0x8] sm:$0xff]
    %v1454 = vld [vmem:[%s246 + $0x10] sm:$0xff]
    %v1455 = vld [vmem:[%s246 + $0x18] sm:$0xff]
    %v1456 = vld [vmem:[%s246 + $0x20] sm:$0xff]
    %v1457 = vld [vmem:[%s246 + $0x28] sm:$0xff]
    %v1458 = vld [vmem:[%s246 + $0x30] sm:$0xff]
    %v1459 = vld [vmem:[%s246 + $0x38] sm:$0xff]
    %v1460 = vld [vmem:[%s246 + $0x40] sm:$0xff]
    %v1461 = vld [vmem:[%s246 + $0x48] sm:$0xff]
    %v1462 = vld [vmem:[%s246 + $0x50] sm:$0xff]
    %v1463 = vld [vmem:[%s246 + $0x58] sm:$0xff]
    %v1464 = vld [vmem:[%s246 + $0x60] sm:$0xff]
    %v1465 = vld [vmem:[%s246 + $0x68] sm:$0xff]
    %v1466 = vld [vmem:[%s246 + $0x70] sm:$0xff]
    %v1467 = vld [vmem:[%s246 + $0x78] sm:$0xff]
    %v1468 = vld [vmem:[%s246 + $0x80] sm:$0xff]
    %v1469 = vld [vmem:[%s246 + $0x88] sm:$0xff]
    %v1470 = vld [vmem:[%s246 + $0x90] sm:$0xff]
    %v1471 = vld [vmem:[%s246 + $0x98] sm:$0xff]
    %v1472 = vld [vmem:[%s246 + $0xa0] sm:$0xff]
    %v1473 = vld [vmem:[%s246 + $0xa8] sm:$0xff]
    %v1474 = vld [vmem:[%s246 + $0xb0] sm:$0xff]
    %v1475 = vld [vmem:[%s246 + $0xb8] sm:$0xff]
    %v1476 = vld [vmem:[%s246 + $0xc0] sm:$0xff]
    %v1477 = vld [vmem:[%s246 + $0xc8] sm:$0xff]
    %v1478 = vld [vmem:[%s246 + $0xd0] sm:$0xff]
    %v1479 = vld [vmem:[%s246 + $0xd8] sm:$0xff]
    %v1480 = vld [vmem:[%s246 + $0xe0] sm:$0xff]
    %v1481 = vld [vmem:[%s246 + $0xe8] sm:$0xff]
    %v1482 = vld [vmem:[%s246 + $0xf0] sm:$0xff]
    %v1483 = vld [vmem:[%s246 + $0xf8] sm:$0xff]
    %v1484 = vld [vmem:[%s279] sm:$0x3]
    %v1486 = vlaneseq
    %v1487 = vshrl.u32 %v1486, 7
    %v1488 = vsub.s32 0, %v1487
    %v1489 = vrot.slane %v1484, %v1488
    %v1490 = vlaneseq
    %v1491 = vshrl.u32 %v1490, 7
    %v1492 = vsub.s32 1, %v1491
    %v1493 = vrot.slane %v1484, %v1492
    %1496 = vmatprep.subr.mxu0 %v1483
    %1497 = vmatpush1.msra.mxu0 %v1482
    %1498 = vmatprep.subr.mxu0 %v1481
    %1499 = vmatpush1.msra.mxu0 %v1480
    %1500 = vmatprep.subr.mxu0 %v1479
    %1501 = vmatpush1.msra.mxu0 %v1478
    %1502 = vmatprep.subr.mxu0 %v1477
    %1503 = vmatpush1.msra.mxu0 %v1476
    %1504 = vmatprep.subr.mxu0 %v1475
    %1505 = vmatpush1.msra.mxu0 %v1474
    %1506 = vmatprep.subr.mxu0 %v1473
    %1507 = vmatpush1.msra.mxu0 %v1472
    %1508 = vmatprep.subr.mxu0 %v1471
    %1509 = vmatpush1.msra.mxu0 %v1470
    %1510 = vmatprep.subr.mxu0 %v1469
    %1511 = vmatpush1.msra.mxu0 %v1468
    %1512 = vmatprep.subr.mxu0 %v1467
    %1513 = vmatpush1.msra.mxu0 %v1466
    %1514 = vmatprep.subr.mxu0 %v1465
    %1515 = vmatpush1.msra.mxu0 %v1464
    %1516 = vmatprep.subr.mxu0 %v1463
    %1517 = vmatpush1.msra.mxu0 %v1462
    %1518 = vmatprep.subr.mxu0 %v1461
    %1519 = vmatpush1.msra.mxu0 %v1460
    %1520 = vmatprep.subr.mxu0 %v1459
    %1521 = vmatpush1.msra.mxu0 %v1458
    %1522 = vmatprep.subr.mxu0 %v1457
    %1523 = vmatpush1.msra.mxu0 %v1456
    %1524 = vmatprep.subr.mxu0 %v1455
    %1525 = vmatpush1.msra.mxu0 %v1454
    %1526 = vmatprep.subr.mxu0 %v1453
    %1527 = vmatpush1.msra.mxu0 %v1452
    %1528 = vmatprep.subr.mxu0 0.0
    %1529 = vmatpush2.msra.mxu0 0.0
    %1530 = vmatprep.subr.mxu0 0.0
    %1531 = vmatpush2.msra.mxu0 0.0
    %1532 = vmatprep.subr.mxu0 0.0
    %1533 = vmatpush2.msra.mxu0 0.0
    %1534 = vmatprep.subr.mxu0 0.0
    %1535 = vmatpush2.msra.mxu0 0.0
    %1536 = vmatprep.subr.mxu0 0.0
    %1537 = vmatpush2.msra.mxu0 0.0
    %1538 = vmatprep.subr.mxu0 0.0
    %1539 = vmatpush2.msra.mxu0 0.0
    %1540 = vmatprep.subr.mxu0 0.0
    %1541 = vmatpush2.msra.mxu0 0.0
    %1542 = vmatprep.subr.mxu0 0.0
    %1543 = vmatpush2.msra.mxu0 0.0
    %1544 = vmatprep.subr.mxu0 0.0
    %1545 = vmatpush2.msra.mxu0 0.0
    %1546 = vmatprep.subr.mxu0 0.0
    %1547 = vmatpush2.msra.mxu0 0.0
    %1548 = vmatprep.subr.mxu0 0.0
    %1549 = vmatpush2.msra.mxu0 0.0
    %1550 = vmatprep.subr.mxu0 0.0
    %1551 = vmatpush2.msra.mxu0 0.0
    %1552 = vmatprep.subr.mxu0 0.0
    %1553 = vmatpush2.msra.mxu0 0.0
    %1554 = vmatprep.subr.mxu0 0.0
    %1555 = vmatpush2.msra.mxu0 0.0
    %1556 = vmatprep.subr.mxu0 0.0
    %1557 = vmatpush2.msra.mxu0 0.0
    %1558 = vmatprep.subr.mxu0 0.0
    %1559 = vmatpush2.msra.mxu0 0.0
    %1560 = vmatprep.mubr.f32.mxu0 0.0
    %1561 = vmatmul.mubr.f32.gmra.mxu0 %v1451
    %v1562 = vpop.f32.mrf.mxu0
    %v1563 = vadd.f32 %v1489, %v1562
    %v1564 = vpop.f32.mrf.mxu0
    %v1565 = vadd.f32 %v1493, %v1564
    %1566 = vdwg.mxu0
    %v1567 = vxor.u32 %v1563, 2147483648
    %v1568 = vxor.u32 %v1565, 2147483648
    %v1569 = vmul.f32 %v1567, 1.442695
    %v1570 = vpow.pop %v1569
    %v1571 = vmul.f32 %v1568, 1.442695
    %v1572 = vpow.pop %v1571
    %v1573 = vadd.f32 %v1570, 1.0
    %v1574 = vadd.f32 %v1572, 1.0
    %v1575 = vrcp.pop %v1573
    %v1576 = vmul.f32 1.0, %v1575
    %v1577 = vrcp.pop %v1574
    %v1578 = vmul.f32 1.0, %v1577
    %v1579 = vtanh.pop %v1565
    %v1580 = vld [vmem:[%s376] sm:$0x3]
    %v1581 = vmul.f32 %v1580, %v1576
    %v1582 = vmul.f32 %v1579, %v1576
    %1584 = vrot.lane.b32.xlu0 %v1582, 64
    %v1585 = vpop.permute.xlu0 %1584
    %v1587 = vadd.f32 %v1581, %v1585
    %v1588 = vtanh.pop %v1587
    %v1589 = vmul.f32 %v1588, %v1578
    %1590 = vst.msk [vmem:[%s238] sm:$0x3] %vm82, %v1589
    %1591 = vst.msk [vmem:[%s376] sm:$0x3] %vm82, %v1587
    %s1592 = scalar_lea.vmem [#allocation14], 8
    %1593 = vst.msk [vmem:[%s1592] sm:$0x3] %vm82, %v1589
    %v1594 = vadd.f32 %v1293, %v1295
    %s1595 = scalar_lea.vmem [#allocation5], 10
    %v1596 = vld [vmem:[%s1595] sm:$0x3]
    %1597 = vst.msk [vmem:[#allocation4] sm:$0x3] %vm82, %v1596
    %v1598 = vld [vmem:[#allocation2] sm:$0x3]
    %1600 = vrot.lane.b32.xlu0 %v1598, 64
    %v1601 = vpop.permute.xlu0 %1600
    %1603 = vst.msk [vmem:[#allocation4] sm:$0x3] %vm94, %v1601
    %v1604 = vld [vmem:[#allocation4] sm:$0x3]
    %v1605 = vld [vmem:[#allocation8] sm:$0xff]
    %v1606 = vld [vmem:[#allocation8 + $0x8] sm:$0xff]
    %v1607 = vld [vmem:[#allocation8 + $0x10] sm:$0xff]
    %v1608 = vld [vmem:[#allocation8 + $0x18] sm:$0xff]
    %v1609 = vld [vmem:[#allocation8 + $0x20] sm:$0xff]
    %v1610 = vld [vmem:[#allocation8 + $0x28] sm:$0xff]
    %v1611 = vld [vmem:[#allocation8 + $0x30] sm:$0xff]
    %v1612 = vld [vmem:[#allocation8 + $0x38] sm:$0xff]
    %v1613 = vld [vmem:[#allocation8 + $0x40] sm:$0xff]
    %v1614 = vld [vmem:[#allocation8 + $0x48] sm:$0xff]
    %v1615 = vld [vmem:[#allocation8 + $0x50] sm:$0xff]
    %v1616 = vld [vmem:[#allocation8 + $0x58] sm:$0xff]
    %v1617 = vld [vmem:[#allocation8 + $0x60] sm:$0xff]
    %v1618 = vld [vmem:[#allocation8 + $0x68] sm:$0xff]
    %v1619 = vld [vmem:[#allocation8 + $0x70] sm:$0xff]
    %v1620 = vld [vmem:[#allocation8 + $0x78] sm:$0xff]
    %v1621 = vld [vmem:[#allocation8 + $0x80] sm:$0xff]
    %v1622 = vld [vmem:[#allocation8 + $0x88] sm:$0xff]
    %v1623 = vld [vmem:[#allocation8 + $0x90] sm:$0xff]
    %v1624 = vld [vmem:[#allocation8 + $0x98] sm:$0xff]
    %v1625 = vld [vmem:[#allocation8 + $0xa0] sm:$0xff]
    %v1626 = vld [vmem:[#allocation8 + $0xa8] sm:$0xff]
    %v1627 = vld [vmem:[#allocation8 + $0xb0] sm:$0xff]
    %v1628 = vld [vmem:[#allocation8 + $0xb8] sm:$0xff]
    %v1629 = vld [vmem:[#allocation8 + $0xc0] sm:$0xff]
    %v1630 = vld [vmem:[#allocation8 + $0xc8] sm:$0xff]
    %v1631 = vld [vmem:[#allocation8 + $0xd0] sm:$0xff]
    %v1632 = vld [vmem:[#allocation8 + $0xd8] sm:$0xff]
    %v1633 = vld [vmem:[#allocation8 + $0xe0] sm:$0xff]
    %v1634 = vld [vmem:[#allocation8 + $0xe8] sm:$0xff]
    %v1635 = vld [vmem:[#allocation8 + $0xf0] sm:$0xff]
    %v1636 = vld [vmem:[#allocation8 + $0xf8] sm:$0xff]
    %v1637 = vld [vmem:[#allocation10] sm:$0x3]
    %v1639 = vlaneseq
    %v1640 = vshrl.u32 %v1639, 7
    %v1641 = vsub.s32 0, %v1640
    %v1642 = vrot.slane %v1637, %v1641
    %v1643 = vlaneseq
    %v1644 = vshrl.u32 %v1643, 7
    %v1645 = vsub.s32 1, %v1644
    %v1646 = vrot.slane %v1637, %v1645
    %1649 = vmatprep.subr.mxu0 %v1636
    %1650 = vmatpush1.msra.mxu0 %v1635
    %1651 = vmatprep.subr.mxu0 %v1634
    %1652 = vmatpush1.msra.mxu0 %v1633
    %1653 = vmatprep.subr.mxu0 %v1632
    %1654 = vmatpush1.msra.mxu0 %v1631
    %1655 = vmatprep.subr.mxu0 %v1630
    %1656 = vmatpush1.msra.mxu0 %v1629
    %1657 = vmatprep.subr.mxu0 %v1628
    %1658 = vmatpush1.msra.mxu0 %v1627
    %1659 = vmatprep.subr.mxu0 %v1626
    %1660 = vmatpush1.msra.mxu0 %v1625
    %1661 = vmatprep.subr.mxu0 %v1624
    %1662 = vmatpush1.msra.mxu0 %v1623
    %1663 = vmatprep.subr.mxu0 %v1622
    %1664 = vmatpush1.msra.mxu0 %v1621
    %1665 = vmatprep.subr.mxu0 %v1620
    %1666 = vmatpush1.msra.mxu0 %v1619
    %1667 = vmatprep.subr.mxu0 %v1618
    %1668 = vmatpush1.msra.mxu0 %v1617
    %1669 = vmatprep.subr.mxu0 %v1616
    %1670 = vmatpush1.msra.mxu0 %v1615
    %1671 = vmatprep.subr.mxu0 %v1614
    %1672 = vmatpush1.msra.mxu0 %v1613
    %1673 = vmatprep.subr.mxu0 %v1612
    %1674 = vmatpush1.msra.mxu0 %v1611
    %1675 = vmatprep.subr.mxu0 %v1610
    %1676 = vmatpush1.msra.mxu0 %v1609
    %1677 = vmatprep.subr.mxu0 %v1608
    %1678 = vmatpush1.msra.mxu0 %v1607
    %1679 = vmatprep.subr.mxu0 %v1606
    %1680 = vmatpush1.msra.mxu0 %v1605
    %1681 = vmatprep.subr.mxu0 0.0
    %1682 = vmatpush2.msra.mxu0 0.0
    %1683 = vmatprep.subr.mxu0 0.0
    %1684 = vmatpush2.msra.mxu0 0.0
    %1685 = vmatprep.subr.mxu0 0.0
    %1686 = vmatpush2.msra.mxu0 0.0
    %1687 = vmatprep.subr.mxu0 0.0
    %1688 = vmatpush2.msra.mxu0 0.0
    %1689 = vmatprep.subr.mxu0 0.0
    %1690 = vmatpush2.msra.mxu0 0.0
    %1691 = vmatprep.subr.mxu0 0.0
    %1692 = vmatpush2.msra.mxu0 0.0
    %1693 = vmatprep.subr.mxu0 0.0
    %1694 = vmatpush2.msra.mxu0 0.0
    %1695 = vmatprep.subr.mxu0 0.0
    %1696 = vmatpush2.msra.mxu0 0.0
    %1697 = vmatprep.subr.mxu0 0.0
    %1698 = vmatpush2.msra.mxu0 0.0
    %1699 = vmatprep.subr.mxu0 0.0
    %1700 = vmatpush2.msra.mxu0 0.0
    %1701 = vmatprep.subr.mxu0 0.0
    %1702 = vmatpush2.msra.mxu0 0.0
    %1703 = vmatprep.subr.mxu0 0.0
    %1704 = vmatpush2.msra.mxu0 0.0
    %1705 = vmatprep.subr.mxu0 0.0
    %1706 = vmatpush2.msra.mxu0 0.0
    %1707 = vmatprep.subr.mxu0 0.0
    %1708 = vmatpush2.msra.mxu0 0.0
    %1709 = vmatprep.subr.mxu0 0.0
    %1710 = vmatpush2.msra.mxu0 0.0
    %1711 = vmatprep.subr.mxu0 0.0
    %1712 = vmatpush2.msra.mxu0 0.0
    %1713 = vmatprep.mubr.f32.mxu0 0.0
    %1714 = vmatmul.mubr.f32.gmra.mxu0 %v1604
    %v1715 = vpop.f32.mrf.mxu0
    %v1716 = vadd.f32 %v1642, %v1715
    %v1717 = vpop.f32.mrf.mxu0
    %v1718 = vadd.f32 %v1646, %v1717
    %1719 = vdwg.mxu0
    %v1720 = vxor.u32 %v1716, 2147483648
    %v1721 = vxor.u32 %v1718, 2147483648
    %v1722 = vmul.f32 %v1720, 1.442695
    %v1723 = vpow.pop %v1722
    %v1724 = vmul.f32 %v1721, 1.442695
    %v1725 = vpow.pop %v1724
    %v1726 = vadd.f32 %v1723, 1.0
    %v1727 = vadd.f32 %v1725, 1.0
    %v1728 = vrcp.pop %v1726
    %v1729 = vmul.f32 1.0, %v1728
    %v1730 = vrcp.pop %v1727
    %v1731 = vmul.f32 1.0, %v1730
    %v1732 = vtanh.pop %v1718
    %v1733 = vld [vmem:[#allocation3] sm:$0x3]
    %v1734 = vmul.f32 %v1733, %v1729
    %v1735 = vmul.f32 %v1732, %v1729
    %1737 = vrot.lane.b32.xlu0 %v1735, 64
    %v1738 = vpop.permute.xlu0 %1737
    %v1740 = vadd.f32 %v1734, %v1738
    %v1741 = vtanh.pop %v1740
    %v1742 = vmul.f32 %v1741, %v1731
    %1743 = vst.msk [vmem:[#allocation2] sm:$0x3] %vm82, %v1742
    %1744 = vst.msk [vmem:[#allocation3] sm:$0x3] %vm82, %v1740
    %1745 = vst.msk [vmem:[#allocation4] sm:$0x3] %vm82, %v1742
    %v1746 = vld [vmem:[%s238] sm:$0x3]
    %1748 = vrot.lane.b32.xlu0 %v1746, 64
    %v1749 = vpop.permute.xlu0 %1748
    %1751 = vst.msk [vmem:[#allocation4] sm:$0x3] %vm94, %v1749
    %v1752 = vld [vmem:[#allocation4] sm:$0x3]
    %v1753 = vld [vmem:[%s246] sm:$0xff]
    %v1754 = vld [vmem:[%s246 + $0x8] sm:$0xff]
    %v1755 = vld [vmem:[%s246 + $0x10] sm:$0xff]
    %v1756 = vld [vmem:[%s246 + $0x18] sm:$0xff]
    %v1757 = vld [vmem:[%s246 + $0x20] sm:$0xff]
    %v1758 = vld [vmem:[%s246 + $0x28] sm:$0xff]
    %v1759 = vld [vmem:[%s246 + $0x30] sm:$0xff]
    %v1760 = vld [vmem:[%s246 + $0x38] sm:$0xff]
    %v1761 = vld [vmem:[%s246 + $0x40] sm:$0xff]
    %v1762 = vld [vmem:[%s246 + $0x48] sm:$0xff]
    %v1763 = vld [vmem:[%s246 + $0x50] sm:$0xff]
    %v1764 = vld [vmem:[%s246 + $0x58] sm:$0xff]
    %v1765 = vld [vmem:[%s246 + $0x60] sm:$0xff]
    %v1766 = vld [vmem:[%s246 + $0x68] sm:$0xff]
    %v1767 = vld [vmem:[%s246 + $0x70] sm:$0xff]
    %v1768 = vld [vmem:[%s246 + $0x78] sm:$0xff]
    %v1769 = vld [vmem:[%s246 + $0x80] sm:$0xff]
    %v1770 = vld [vmem:[%s246 + $0x88] sm:$0xff]
    %v1771 = vld [vmem:[%s246 + $0x90] sm:$0xff]
    %v1772 = vld [vmem:[%s246 + $0x98] sm:$0xff]
    %v1773 = vld [vmem:[%s246 + $0xa0] sm:$0xff]
    %v1774 = vld [vmem:[%s246 + $0xa8] sm:$0xff]
    %v1775 = vld [vmem:[%s246 + $0xb0] sm:$0xff]
    %v1776 = vld [vmem:[%s246 + $0xb8] sm:$0xff]
    %v1777 = vld [vmem:[%s246 + $0xc0] sm:$0xff]
    %v1778 = vld [vmem:[%s246 + $0xc8] sm:$0xff]
    %v1779 = vld [vmem:[%s246 + $0xd0] sm:$0xff]
    %v1780 = vld [vmem:[%s246 + $0xd8] sm:$0xff]
    %v1781 = vld [vmem:[%s246 + $0xe0] sm:$0xff]
    %v1782 = vld [vmem:[%s246 + $0xe8] sm:$0xff]
    %v1783 = vld [vmem:[%s246 + $0xf0] sm:$0xff]
    %v1784 = vld [vmem:[%s246 + $0xf8] sm:$0xff]
    %v1785 = vld [vmem:[%s279] sm:$0x3]
    %v1787 = vlaneseq
    %v1788 = vshrl.u32 %v1787, 7
    %v1789 = vsub.s32 0, %v1788
    %v1790 = vrot.slane %v1785, %v1789
    %v1791 = vlaneseq
    %v1792 = vshrl.u32 %v1791, 7
    %v1793 = vsub.s32 1, %v1792
    %v1794 = vrot.slane %v1785, %v1793
    %1797 = vmatprep.subr.mxu0 %v1784
    %1798 = vmatpush1.msra.mxu0 %v1783
    %1799 = vmatprep.subr.mxu0 %v1782
    %1800 = vmatpush1.msra.mxu0 %v1781
    %1801 = vmatprep.subr.mxu0 %v1780
    %1802 = vmatpush1.msra.mxu0 %v1779
    %1803 = vmatprep.subr.mxu0 %v1778
    %1804 = vmatpush1.msra.mxu0 %v1777
    %1805 = vmatprep.subr.mxu0 %v1776
    %1806 = vmatpush1.msra.mxu0 %v1775
    %1807 = vmatprep.subr.mxu0 %v1774
    %1808 = vmatpush1.msra.mxu0 %v1773
    %1809 = vmatprep.subr.mxu0 %v1772
    %1810 = vmatpush1.msra.mxu0 %v1771
    %1811 = vmatprep.subr.mxu0 %v1770
    %1812 = vmatpush1.msra.mxu0 %v1769
    %1813 = vmatprep.subr.mxu0 %v1768
    %1814 = vmatpush1.msra.mxu0 %v1767
    %1815 = vmatprep.subr.mxu0 %v1766
    %1816 = vmatpush1.msra.mxu0 %v1765
    %1817 = vmatprep.subr.mxu0 %v1764
    %1818 = vmatpush1.msra.mxu0 %v1763
    %1819 = vmatprep.subr.mxu0 %v1762
    %1820 = vmatpush1.msra.mxu0 %v1761
    %1821 = vmatprep.subr.mxu0 %v1760
    %1822 = vmatpush1.msra.mxu0 %v1759
    %1823 = vmatprep.subr.mxu0 %v1758
    %1824 = vmatpush1.msra.mxu0 %v1757
    %1825 = vmatprep.subr.mxu0 %v1756
    %1826 = vmatpush1.msra.mxu0 %v1755
    %1827 = vmatprep.subr.mxu0 %v1754
    %1828 = vmatpush1.msra.mxu0 %v1753
    %1829 = vmatprep.subr.mxu0 0.0
    %1830 = vmatpush2.msra.mxu0 0.0
    %1831 = vmatprep.subr.mxu0 0.0
    %1832 = vmatpush2.msra.mxu0 0.0
    %1833 = vmatprep.subr.mxu0 0.0
    %1834 = vmatpush2.msra.mxu0 0.0
    %1835 = vmatprep.subr.mxu0 0.0
    %1836 = vmatpush2.msra.mxu0 0.0
    %1837 = vmatprep.subr.mxu0 0.0
    %1838 = vmatpush2.msra.mxu0 0.0
    %1839 = vmatprep.subr.mxu0 0.0
    %1840 = vmatpush2.msra.mxu0 0.0
    %1841 = vmatprep.subr.mxu0 0.0
    %1842 = vmatpush2.msra.mxu0 0.0
    %1843 = vmatprep.subr.mxu0 0.0
    %1844 = vmatpush2.msra.mxu0 0.0
    %1845 = vmatprep.subr.mxu0 0.0
    %1846 = vmatpush2.msra.mxu0 0.0
    %1847 = vmatprep.subr.mxu0 0.0
    %1848 = vmatpush2.msra.mxu0 0.0
    %1849 = vmatprep.subr.mxu0 0.0
    %1850 = vmatpush2.msra.mxu0 0.0
    %1851 = vmatprep.subr.mxu0 0.0
    %1852 = vmatpush2.msra.mxu0 0.0
    %1853 = vmatprep.subr.mxu0 0.0
    %1854 = vmatpush2.msra.mxu0 0.0
    %1855 = vmatprep.subr.mxu0 0.0
    %1856 = vmatpush2.msra.mxu0 0.0
    %1857 = vmatprep.subr.mxu0 0.0
    %1858 = vmatpush2.msra.mxu0 0.0
    %1859 = vmatprep.subr.mxu0 0.0
    %1860 = vmatpush2.msra.mxu0 0.0
    %1861 = vmatprep.mubr.f32.mxu0 0.0
    %1862 = vmatmul.mubr.f32.gmra.mxu0 %v1752
    %v1863 = vpop.f32.mrf.mxu0
    %v1864 = vadd.f32 %v1790, %v1863
    %v1865 = vpop.f32.mrf.mxu0
    %v1866 = vadd.f32 %v1794, %v1865
    %1867 = vdwg.mxu0
    %v1868 = vxor.u32 %v1864, 2147483648
    %v1869 = vxor.u32 %v1866, 2147483648
    %v1870 = vmul.f32 %v1868, 1.442695
    %v1871 = vpow.pop %v1870
    %v1872 = vmul.f32 %v1869, 1.442695
    %v1873 = vpow.pop %v1872
    %v1874 = vadd.f32 %v1871, 1.0
    %v1875 = vadd.f32 %v1873, 1.0
    %v1876 = vrcp.pop %v1874
    %v1877 = vmul.f32 1.0, %v1876
    %v1878 = vrcp.pop %v1875
    %v1879 = vmul.f32 1.0, %v1878
    %v1880 = vtanh.pop %v1866
    %v1881 = vld [vmem:[%s376] sm:$0x3]
    %v1882 = vmul.f32 %v1881, %v1877
    %v1883 = vmul.f32 %v1880, %v1877
    %1885 = vrot.lane.b32.xlu0 %v1883, 64
    %v1886 = vpop.permute.xlu0 %1885
    %v1888 = vadd.f32 %v1882, %v1886
    %v1889 = vtanh.pop %v1888
    %v1890 = vmul.f32 %v1889, %v1879
    %1891 = vst.msk [vmem:[%s238] sm:$0x3] %vm82, %v1890
    %1892 = vst.msk [vmem:[%s376] sm:$0x3] %vm82, %v1888
    %s1893 = scalar_lea.vmem [#allocation14], 10
    %1894 = vst.msk [vmem:[%s1893] sm:$0x3] %vm82, %v1890
    %v1895 = vadd.f32 %v1594, %v1596
    %s1896 = scalar_lea.vmem [#allocation5], 12
    %v1897 = vld [vmem:[%s1896] sm:$0x3]
    %1898 = vst.msk [vmem:[#allocation4] sm:$0x3] %vm82, %v1897
    %v1899 = vld [vmem:[#allocation2] sm:$0x3]
    %1901 = vrot.lane.b32.xlu0 %v1899, 64
    %v1902 = vpop.permute.xlu0 %1901
    %1904 = vst.msk [vmem:[#allocation4] sm:$0x3] %vm94, %v1902
    %v1905 = vld [vmem:[#allocation4] sm:$0x3]
    %v1906 = vld [vmem:[#allocation8] sm:$0xff]
    %v1907 = vld [vmem:[#allocation8 + $0x8] sm:$0xff]
    %v1908 = vld [vmem:[#allocation8 + $0x10] sm:$0xff]
    %v1909 = vld [vmem:[#allocation8 + $0x18] sm:$0xff]
    %v1910 = vld [vmem:[#allocation8 + $0x20] sm:$0xff]
    %v1911 = vld [vmem:[#allocation8 + $0x28] sm:$0xff]
    %v1912 = vld [vmem:[#allocation8 + $0x30] sm:$0xff]
    %v1913 = vld [vmem:[#allocation8 + $0x38] sm:$0xff]
    %v1914 = vld [vmem:[#allocation8 + $0x40] sm:$0xff]
    %v1915 = vld [vmem:[#allocation8 + $0x48] sm:$0xff]
    %v1916 = vld [vmem:[#allocation8 + $0x50] sm:$0xff]
    %v1917 = vld [vmem:[#allocation8 + $0x58] sm:$0xff]
    %v1918 = vld [vmem:[#allocation8 + $0x60] sm:$0xff]
    %v1919 = vld [vmem:[#allocation8 + $0x68] sm:$0xff]
    %v1920 = vld [vmem:[#allocation8 + $0x70] sm:$0xff]
    %v1921 = vld [vmem:[#allocation8 + $0x78] sm:$0xff]
    %v1922 = vld [vmem:[#allocation8 + $0x80] sm:$0xff]
    %v1923 = vld [vmem:[#allocation8 + $0x88] sm:$0xff]
    %v1924 = vld [vmem:[#allocation8 + $0x90] sm:$0xff]
    %v1925 = vld [vmem:[#allocation8 + $0x98] sm:$0xff]
    %v1926 = vld [vmem:[#allocation8 + $0xa0] sm:$0xff]
    %v1927 = vld [vmem:[#allocation8 + $0xa8] sm:$0xff]
    %v1928 = vld [vmem:[#allocation8 + $0xb0] sm:$0xff]
    %v1929 = vld [vmem:[#allocation8 + $0xb8] sm:$0xff]
    %v1930 = vld [vmem:[#allocation8 + $0xc0] sm:$0xff]
    %v1931 = vld [vmem:[#allocation8 + $0xc8] sm:$0xff]
    %v1932 = vld [vmem:[#allocation8 + $0xd0] sm:$0xff]
    %v1933 = vld [vmem:[#allocation8 + $0xd8] sm:$0xff]
    %v1934 = vld [vmem:[#allocation8 + $0xe0] sm:$0xff]
    %v1935 = vld [vmem:[#allocation8 + $0xe8] sm:$0xff]
    %v1936 = vld [vmem:[#allocation8 + $0xf0] sm:$0xff]
    %v1937 = vld [vmem:[#allocation8 + $0xf8] sm:$0xff]
    %v1938 = vld [vmem:[#allocation10] sm:$0x3]
    %v1940 = vlaneseq
    %v1941 = vshrl.u32 %v1940, 7
    %v1942 = vsub.s32 0, %v1941
    %v1943 = vrot.slane %v1938, %v1942
    %v1944 = vlaneseq
    %v1945 = vshrl.u32 %v1944, 7
    %v1946 = vsub.s32 1, %v1945
    %v1947 = vrot.slane %v1938, %v1946
    %1950 = vmatprep.subr.mxu0 %v1937
    %1951 = vmatpush1.msra.mxu0 %v1936
    %1952 = vmatprep.subr.mxu0 %v1935
    %1953 = vmatpush1.msra.mxu0 %v1934
    %1954 = vmatprep.subr.mxu0 %v1933
    %1955 = vmatpush1.msra.mxu0 %v1932
    %1956 = vmatprep.subr.mxu0 %v1931
    %1957 = vmatpush1.msra.mxu0 %v1930
    %1958 = vmatprep.subr.mxu0 %v1929
    %1959 = vmatpush1.msra.mxu0 %v1928
    %1960 = vmatprep.subr.mxu0 %v1927
    %1961 = vmatpush1.msra.mxu0 %v1926
    %1962 = vmatprep.subr.mxu0 %v1925
    %1963 = vmatpush1.msra.mxu0 %v1924
    %1964 = vmatprep.subr.mxu0 %v1923
    %1965 = vmatpush1.msra.mxu0 %v1922
    %1966 = vmatprep.subr.mxu0 %v1921
    %1967 = vmatpush1.msra.mxu0 %v1920
    %1968 = vmatprep.subr.mxu0 %v1919
    %1969 = vmatpush1.msra.mxu0 %v1918
    %1970 = vmatprep.subr.mxu0 %v1917
    %1971 = vmatpush1.msra.mxu0 %v1916
    %1972 = vmatprep.subr.mxu0 %v1915
    %1973 = vmatpush1.msra.mxu0 %v1914
    %1974 = vmatprep.subr.mxu0 %v1913
    %1975 = vmatpush1.msra.mxu0 %v1912
    %1976 = vmatprep.subr.mxu0 %v1911
    %1977 = vmatpush1.msra.mxu0 %v1910
    %1978 = vmatprep.subr.mxu0 %v1909
    %1979 = vmatpush1.msra.mxu0 %v1908
    %1980 = vmatprep.subr.mxu0 %v1907
    %1981 = vmatpush1.msra.mxu0 %v1906
    %1982 = vmatprep.subr.mxu0 0.0
    %1983 = vmatpush2.msra.mxu0 0.0
    %1984 = vmatprep.subr.mxu0 0.0
    %1985 = vmatpush2.msra.mxu0 0.0
    %1986 = vmatprep.subr.mxu0 0.0
    %1987 = vmatpush2.msra.mxu0 0.0
    %1988 = vmatprep.subr.mxu0 0.0
    %1989 = vmatpush2.msra.mxu0 0.0
    %1990 = vmatprep.subr.mxu0 0.0
    %1991 = vmatpush2.msra.mxu0 0.0
    %1992 = vmatprep.subr.mxu0 0.0
    %1993 = vmatpush2.msra.mxu0 0.0
    %1994 = vmatprep.subr.mxu0 0.0
    %1995 = vmatpush2.msra.mxu0 0.0
    %1996 = vmatprep.subr.mxu0 0.0
    %1997 = vmatpush2.msra.mxu0 0.0
    %1998 = vmatprep.subr.mxu0 0.0
    %1999 = vmatpush2.msra.mxu0 0.0
    %2000 = vmatprep.subr.mxu0 0.0
    %2001 = vmatpush2.msra.mxu0 0.0
    %2002 = vmatprep.subr.mxu0 0.0
    %2003 = vmatpush2.msra.mxu0 0.0
    %2004 = vmatprep.subr.mxu0 0.0
    %2005 = vmatpush2.msra.mxu0 0.0
    %2006 = vmatprep.subr.mxu0 0.0
    %2007 = vmatpush2.msra.mxu0 0.0
    %2008 = vmatprep.subr.mxu0 0.0
    %2009 = vmatpush2.msra.mxu0 0.0
    %2010 = vmatprep.subr.mxu0 0.0
    %2011 = vmatpush2.msra.mxu0 0.0
    %2012 = vmatprep.subr.mxu0 0.0
    %2013 = vmatpush2.msra.mxu0 0.0
    %2014 = vmatprep.mubr.f32.mxu0 0.0
    %2015 = vmatmul.mubr.f32.gmra.mxu0 %v1905
    %v2016 = vpop.f32.mrf.mxu0
    %v2017 = vadd.f32 %v1943, %v2016
    %v2018 = vpop.f32.mrf.mxu0
    %v2019 = vadd.f32 %v1947, %v2018
    %2020 = vdwg.mxu0
    %v2021 = vxor.u32 %v2017, 2147483648
    %v2022 = vxor.u32 %v2019, 2147483648
    %v2023 = vmul.f32 %v2021, 1.442695
    %v2024 = vpow.pop %v2023
    %v2025 = vmul.f32 %v2022, 1.442695
    %v2026 = vpow.pop %v2025
    %v2027 = vadd.f32 %v2024, 1.0
    %v2028 = vadd.f32 %v2026, 1.0
    %v2029 = vrcp.pop %v2027
    %v2030 = vmul.f32 1.0, %v2029
    %v2031 = vrcp.pop %v2028
    %v2032 = vmul.f32 1.0, %v2031
    %v2033 = vtanh.pop %v2019
    %v2034 = vld [vmem:[#allocation3] sm:$0x3]
    %v2035 = vmul.f32 %v2034, %v2030
    %v2036 = vmul.f32 %v2033, %v2030
    %2038 = vrot.lane.b32.xlu0 %v2036, 64
    %v2039 = vpop.permute.xlu0 %2038
    %v2041 = vadd.f32 %v2035, %v2039
    %v2042 = vtanh.pop %v2041
    %v2043 = vmul.f32 %v2042, %v2032
    %2044 = vst.msk [vmem:[#allocation2] sm:$0x3] %vm82, %v2043
    %2045 = vst.msk [vmem:[#allocation3] sm:$0x3] %vm82, %v2041
    %2046 = vst.msk [vmem:[#allocation4] sm:$0x3] %vm82, %v2043
    %v2047 = vld [vmem:[%s238] sm:$0x3]
    %2049 = vrot.lane.b32.xlu0 %v2047, 64
    %v2050 = vpop.permute.xlu0 %2049
    %2052 = vst.msk [vmem:[#allocation4] sm:$0x3] %vm94, %v2050
    %v2053 = vld [vmem:[#allocation4] sm:$0x3]
    %v2054 = vld [vmem:[%s246] sm:$0xff]
    %v2055 = vld [vmem:[%s246 + $0x8] sm:$0xff]
    %v2056 = vld [vmem:[%s246 + $0x10] sm:$0xff]
    %v2057 = vld [vmem:[%s246 + $0x18] sm:$0xff]
    %v2058 = vld [vmem:[%s246 + $0x20] sm:$0xff]
    %v2059 = vld [vmem:[%s246 + $0x28] sm:$0xff]
    %v2060 = vld [vmem:[%s246 + $0x30] sm:$0xff]
    %v2061 = vld [vmem:[%s246 + $0x38] sm:$0xff]
    %v2062 = vld [vmem:[%s246 + $0x40] sm:$0xff]
    %v2063 = vld [vmem:[%s246 + $0x48] sm:$0xff]
    %v2064 = vld [vmem:[%s246 + $0x50] sm:$0xff]
    %v2065 = vld [vmem:[%s246 + $0x58] sm:$0xff]
    %v2066 = vld [vmem:[%s246 + $0x60] sm:$0xff]
    %v2067 = vld [vmem:[%s246 + $0x68] sm:$0xff]
    %v2068 = vld [vmem:[%s246 + $0x70] sm:$0xff]
    %v2069 = vld [vmem:[%s246 + $0x78] sm:$0xff]
    %v2070 = vld [vmem:[%s246 + $0x80] sm:$0xff]
    %v2071 = vld [vmem:[%s246 + $0x88] sm:$0xff]
    %v2072 = vld [vmem:[%s246 + $0x90] sm:$0xff]
    %v2073 = vld [vmem:[%s246 + $0x98] sm:$0xff]
    %v2074 = vld [vmem:[%s246 + $0xa0] sm:$0xff]
    %v2075 = vld [vmem:[%s246 + $0xa8] sm:$0xff]
    %v2076 = vld [vmem:[%s246 + $0xb0] sm:$0xff]
    %v2077 = vld [vmem:[%s246 + $0xb8] sm:$0xff]
    %v2078 = vld [vmem:[%s246 + $0xc0] sm:$0xff]
    %v2079 = vld [vmem:[%s246 + $0xc8] sm:$0xff]
    %v2080 = vld [vmem:[%s246 + $0xd0] sm:$0xff]
    %v2081 = vld [vmem:[%s246 + $0xd8] sm:$0xff]
    %v2082 = vld [vmem:[%s246 + $0xe0] sm:$0xff]
    %v2083 = vld [vmem:[%s246 + $0xe8] sm:$0xff]
    %v2084 = vld [vmem:[%s246 + $0xf0] sm:$0xff]
    %v2085 = vld [vmem:[%s246 + $0xf8] sm:$0xff]
    %v2086 = vld [vmem:[%s279] sm:$0x3]
    %v2088 = vlaneseq
    %v2089 = vshrl.u32 %v2088, 7
    %v2090 = vsub.s32 0, %v2089
    %v2091 = vrot.slane %v2086, %v2090
    %v2092 = vlaneseq
    %v2093 = vshrl.u32 %v2092, 7
    %v2094 = vsub.s32 1, %v2093
    %v2095 = vrot.slane %v2086, %v2094
    %2098 = vmatprep.subr.mxu0 %v2085
    %2099 = vmatpush1.msra.mxu0 %v2084
    %2100 = vmatprep.subr.mxu0 %v2083
    %2101 = vmatpush1.msra.mxu0 %v2082
    %2102 = vmatprep.subr.mxu0 %v2081
    %2103 = vmatpush1.msra.mxu0 %v2080
    %2104 = vmatprep.subr.mxu0 %v2079
    %2105 = vmatpush1.msra.mxu0 %v2078
    %2106 = vmatprep.subr.mxu0 %v2077
    %2107 = vmatpush1.msra.mxu0 %v2076
    %2108 = vmatprep.subr.mxu0 %v2075
    %2109 = vmatpush1.msra.mxu0 %v2074
    %2110 = vmatprep.subr.mxu0 %v2073
    %2111 = vmatpush1.msra.mxu0 %v2072
    %2112 = vmatprep.subr.mxu0 %v2071
    %2113 = vmatpush1.msra.mxu0 %v2070
    %2114 = vmatprep.subr.mxu0 %v2069
    %2115 = vmatpush1.msra.mxu0 %v2068
    %2116 = vmatprep.subr.mxu0 %v2067
    %2117 = vmatpush1.msra.mxu0 %v2066
    %2118 = vmatprep.subr.mxu0 %v2065
    %2119 = vmatpush1.msra.mxu0 %v2064
    %2120 = vmatprep.subr.mxu0 %v2063
    %2121 = vmatpush1.msra.mxu0 %v2062
    %2122 = vmatprep.subr.mxu0 %v2061
    %2123 = vmatpush1.msra.mxu0 %v2060
    %2124 = vmatprep.subr.mxu0 %v2059
    %2125 = vmatpush1.msra.mxu0 %v2058
    %2126 = vmatprep.subr.mxu0 %v2057
    %2127 = vmatpush1.msra.mxu0 %v2056
    %2128 = vmatprep.subr.mxu0 %v2055
    %2129 = vmatpush1.msra.mxu0 %v2054
    %2130 = vmatprep.subr.mxu0 0.0
    %2131 = vmatpush2.msra.mxu0 0.0
    %2132 = vmatprep.subr.mxu0 0.0
    %2133 = vmatpush2.msra.mxu0 0.0
    %2134 = vmatprep.subr.mxu0 0.0
    %2135 = vmatpush2.msra.mxu0 0.0
    %2136 = vmatprep.subr.mxu0 0.0
    %2137 = vmatpush2.msra.mxu0 0.0
    %2138 = vmatprep.subr.mxu0 0.0
    %2139 = vmatpush2.msra.mxu0 0.0
    %2140 = vmatprep.subr.mxu0 0.0
    %2141 = vmatpush2.msra.mxu0 0.0
    %2142 = vmatprep.subr.mxu0 0.0
    %2143 = vmatpush2.msra.mxu0 0.0
    %2144 = vmatprep.subr.mxu0 0.0
    %2145 = vmatpush2.msra.mxu0 0.0
    %2146 = vmatprep.subr.mxu0 0.0
    %2147 = vmatpush2.msra.mxu0 0.0
    %2148 = vmatprep.subr.mxu0 0.0
    %2149 = vmatpush2.msra.mxu0 0.0
    %2150 = vmatprep.subr.mxu0 0.0
    %2151 = vmatpush2.msra.mxu0 0.0
    %2152 = vmatprep.subr.mxu0 0.0
    %2153 = vmatpush2.msra.mxu0 0.0
    %2154 = vmatprep.subr.mxu0 0.0
    %2155 = vmatpush2.msra.mxu0 0.0
    %2156 = vmatprep.subr.mxu0 0.0
    %2157 = vmatpush2.msra.mxu0 0.0
    %2158 = vmatprep.subr.mxu0 0.0
    %2159 = vmatpush2.msra.mxu0 0.0
    %2160 = vmatprep.subr.mxu0 0.0
    %2161 = vmatpush2.msra.mxu0 0.0
    %2162 = vmatprep.mubr.f32.mxu0 0.0
    %2163 = vmatmul.mubr.f32.gmra.mxu0 %v2053
    %v2164 = vpop.f32.mrf.mxu0
    %v2165 = vadd.f32 %v2091, %v2164
    %v2166 = vpop.f32.mrf.mxu0
    %v2167 = vadd.f32 %v2095, %v2166
    %2168 = vdwg.mxu0
    %v2169 = vxor.u32 %v2165, 2147483648
    %v2170 = vxor.u32 %v2167, 2147483648
    %v2171 = vmul.f32 %v2169, 1.442695
    %v2172 = vpow.pop %v2171
    %v2173 = vmul.f32 %v2170, 1.442695
    %v2174 = vpow.pop %v2173
    %v2175 = vadd.f32 %v2172, 1.0
    %v2176 = vadd.f32 %v2174, 1.0
    %v2177 = vrcp.pop %v2175
    %v2178 = vmul.f32 1.0, %v2177
    %v2179 = vrcp.pop %v2176
    %v2180 = vmul.f32 1.0, %v2179
    %v2181 = vtanh.pop %v2167
    %v2182 = vld [vmem:[%s376] sm:$0x3]
    %v2183 = vmul.f32 %v2182, %v2178
    %v2184 = vmul.f32 %v2181, %v2178
    %2186 = vrot.lane.b32.xlu0 %v2184, 64
    %v2187 = vpop.permute.xlu0 %2186
    %v2189 = vadd.f32 %v2183, %v2187
    %v2190 = vtanh.pop %v2189
    %v2191 = vmul.f32 %v2190, %v2180
    %2192 = vst.msk [vmem:[%s238] sm:$0x3] %vm82, %v2191
    %2193 = vst.msk [vmem:[%s376] sm:$0x3] %vm82, %v2189
    %s2194 = scalar_lea.vmem [#allocation14], 12
    %2195 = vst.msk [vmem:[%s2194] sm:$0x3] %vm82, %v2191
    %v2196 = vadd.f32 %v1895, %v1897
    %s2197 = scalar_lea.vmem [#allocation5], 14
    %v2198 = vld [vmem:[%s2197] sm:$0x3]
    %2199 = vst.msk [vmem:[#allocation4] sm:$0x3] %vm82, %v2198
    %v2200 = vld [vmem:[#allocation2] sm:$0x3]
    %2202 = vrot.lane.b32.xlu0 %v2200, 64
    %v2203 = vpop.permute.xlu0 %2202
    %2205 = vst.msk [vmem:[#allocation4] sm:$0x3] %vm94, %v2203
    %v2206 = vld [vmem:[#allocation4] sm:$0x3]
    %v2207 = vld [vmem:[#allocation8] sm:$0xff]
    %v2208 = vld [vmem:[#allocation8 + $0x8] sm:$0xff]
    %v2209 = vld [vmem:[#allocation8 + $0x10] sm:$0xff]
    %v2210 = vld [vmem:[#allocation8 + $0x18] sm:$0xff]
    %v2211 = vld [vmem:[#allocation8 + $0x20] sm:$0xff]
    %v2212 = vld [vmem:[#allocation8 + $0x28] sm:$0xff]
    %v2213 = vld [vmem:[#allocation8 + $0x30] sm:$0xff]
    %v2214 = vld [vmem:[#allocation8 + $0x38] sm:$0xff]
    %v2215 = vld [vmem:[#allocation8 + $0x40] sm:$0xff]
    %v2216 = vld [vmem:[#allocation8 + $0x48] sm:$0xff]
    %v2217 = vld [vmem:[#allocation8 + $0x50] sm:$0xff]
    %v2218 = vld [vmem:[#allocation8 + $0x58] sm:$0xff]
    %v2219 = vld [vmem:[#allocation8 + $0x60] sm:$0xff]
    %v2220 = vld [vmem:[#allocation8 + $0x68] sm:$0xff]
    %v2221 = vld [vmem:[#allocation8 + $0x70] sm:$0xff]
    %v2222 = vld [vmem:[#allocation8 + $0x78] sm:$0xff]
    %v2223 = vld [vmem:[#allocation8 + $0x80] sm:$0xff]
    %v2224 = vld [vmem:[#allocation8 + $0x88] sm:$0xff]
    %v2225 = vld [vmem:[#allocation8 + $0x90] sm:$0xff]
    %v2226 = vld [vmem:[#allocation8 + $0x98] sm:$0xff]
    %v2227 = vld [vmem:[#allocation8 + $0xa0] sm:$0xff]
    %v2228 = vld [vmem:[#allocation8 + $0xa8] sm:$0xff]
    %v2229 = vld [vmem:[#allocation8 + $0xb0] sm:$0xff]
    %v2230 = vld [vmem:[#allocation8 + $0xb8] sm:$0xff]
    %v2231 = vld [vmem:[#allocation8 + $0xc0] sm:$0xff]
    %v2232 = vld [vmem:[#allocation8 + $0xc8] sm:$0xff]
    %v2233 = vld [vmem:[#allocation8 + $0xd0] sm:$0xff]
    %v2234 = vld [vmem:[#allocation8 + $0xd8] sm:$0xff]
    %v2235 = vld [vmem:[#allocation8 + $0xe0] sm:$0xff]
    %v2236 = vld [vmem:[#allocation8 + $0xe8] sm:$0xff]
    %v2237 = vld [vmem:[#allocation8 + $0xf0] sm:$0xff]
    %v2238 = vld [vmem:[#allocation8 + $0xf8] sm:$0xff]
    %v2239 = vld [vmem:[#allocation10] sm:$0x3]
    %v2241 = vlaneseq
    %v2242 = vshrl.u32 %v2241, 7
    %v2243 = vsub.s32 0, %v2242
    %v2244 = vrot.slane %v2239, %v2243
    %v2245 = vlaneseq
    %v2246 = vshrl.u32 %v2245, 7
    %v2247 = vsub.s32 1, %v2246
    %v2248 = vrot.slane %v2239, %v2247
    %2251 = vmatprep.subr.mxu0 %v2238
    %2252 = vmatpush1.msra.mxu0 %v2237
    %2253 = vmatprep.subr.mxu0 %v2236
    %2254 = vmatpush1.msra.mxu0 %v2235
    %2255 = vmatprep.subr.mxu0 %v2234
    %2256 = vmatpush1.msra.mxu0 %v2233
    %2257 = vmatprep.subr.mxu0 %v2232
    %2258 = vmatpush1.msra.mxu0 %v2231
    %2259 = vmatprep.subr.mxu0 %v2230
    %2260 = vmatpush1.msra.mxu0 %v2229
    %2261 = vmatprep.subr.mxu0 %v2228
    %2262 = vmatpush1.msra.mxu0 %v2227
    %2263 = vmatprep.subr.mxu0 %v2226
    %2264 = vmatpush1.msra.mxu0 %v2225
    %2265 = vmatprep.subr.mxu0 %v2224
    %2266 = vmatpush1.msra.mxu0 %v2223
    %2267 = vmatprep.subr.mxu0 %v2222
    %2268 = vmatpush1.msra.mxu0 %v2221
    %2269 = vmatprep.subr.mxu0 %v2220
    %2270 = vmatpush1.msra.mxu0 %v2219
    %2271 = vmatprep.subr.mxu0 %v2218
    %2272 = vmatpush1.msra.mxu0 %v2217
    %2273 = vmatprep.subr.mxu0 %v2216
    %2274 = vmatpush1.msra.mxu0 %v2215
    %2275 = vmatprep.subr.mxu0 %v2214
    %2276 = vmatpush1.msra.mxu0 %v2213
    %2277 = vmatprep.subr.mxu0 %v2212
    %2278 = vmatpush1.msra.mxu0 %v2211
    %2279 = vmatprep.subr.mxu0 %v2210
    %2280 = vmatpush1.msra.mxu0 %v2209
    %2281 = vmatprep.subr.mxu0 %v2208
    %2282 = vmatpush1.msra.mxu0 %v2207
    %2283 = vmatprep.subr.mxu0 0.0
    %2284 = vmatpush2.msra.mxu0 0.0
    %2285 = vmatprep.subr.mxu0 0.0
    %2286 = vmatpush2.msra.mxu0 0.0
    %2287 = vmatprep.subr.mxu0 0.0
    %2288 = vmatpush2.msra.mxu0 0.0
    %2289 = vmatprep.subr.mxu0 0.0
    %2290 = vmatpush2.msra.mxu0 0.0
    %2291 = vmatprep.subr.mxu0 0.0
    %2292 = vmatpush2.msra.mxu0 0.0
    %2293 = vmatprep.subr.mxu0 0.0
    %2294 = vmatpush2.msra.mxu0 0.0
    %2295 = vmatprep.subr.mxu0 0.0
    %2296 = vmatpush2.msra.mxu0 0.0
    %2297 = vmatprep.subr.mxu0 0.0
    %2298 = vmatpush2.msra.mxu0 0.0
    %2299 = vmatprep.subr.mxu0 0.0
    %2300 = vmatpush2.msra.mxu0 0.0
    %2301 = vmatprep.subr.mxu0 0.0
    %2302 = vmatpush2.msra.mxu0 0.0
    %2303 = vmatprep.subr.mxu0 0.0
    %2304 = vmatpush2.msra.mxu0 0.0
    %2305 = vmatprep.subr.mxu0 0.0
    %2306 = vmatpush2.msra.mxu0 0.0
    %2307 = vmatprep.subr.mxu0 0.0
    %2308 = vmatpush2.msra.mxu0 0.0
    %2309 = vmatprep.subr.mxu0 0.0
    %2310 = vmatpush2.msra.mxu0 0.0
    %2311 = vmatprep.subr.mxu0 0.0
    %2312 = vmatpush2.msra.mxu0 0.0
    %2313 = vmatprep.subr.mxu0 0.0
    %2314 = vmatpush2.msra.mxu0 0.0
    %2315 = vmatprep.mubr.f32.mxu0 0.0
    %2316 = vmatmul.mubr.f32.gmra.mxu0 %v2206
    %v2317 = vpop.f32.mrf.mxu0
    %v2318 = vadd.f32 %v2244, %v2317
    %v2319 = vpop.f32.mrf.mxu0
    %v2320 = vadd.f32 %v2248, %v2319
    %2321 = vdwg.mxu0
    %v2322 = vxor.u32 %v2318, 2147483648
    %v2323 = vxor.u32 %v2320, 2147483648
    %v2324 = vmul.f32 %v2322, 1.442695
    %v2325 = vpow.pop %v2324
    %v2326 = vmul.f32 %v2323, 1.442695
    %v2327 = vpow.pop %v2326
    %v2328 = vadd.f32 %v2325, 1.0
    %v2329 = vadd.f32 %v2327, 1.0
    %v2330 = vrcp.pop %v2328
    %v2331 = vmul.f32 1.0, %v2330
    %v2332 = vrcp.pop %v2329
    %v2333 = vmul.f32 1.0, %v2332
    %v2334 = vtanh.pop %v2320
    %v2335 = vld [vmem:[#allocation3] sm:$0x3]
    %v2336 = vmul.f32 %v2335, %v2331
    %v2337 = vmul.f32 %v2334, %v2331
    %2339 = vrot.lane.b32.xlu0 %v2337, 64
    %v2340 = vpop.permute.xlu0 %2339
    %v2342 = vadd.f32 %v2336, %v2340
    %v2343 = vtanh.pop %v2342
    %v2344 = vmul.f32 %v2343, %v2333
    %2345 = vst.msk [vmem:[#allocation2] sm:$0x3] %vm82, %v2344
    %2346 = vst.msk [vmem:[#allocation3] sm:$0x3] %vm82, %v2342
    %2347 = vst.msk [vmem:[#allocation4] sm:$0x3] %vm82, %v2344
    %v2348 = vld [vmem:[%s238] sm:$0x3]
    %2350 = vrot.lane.b32.xlu0 %v2348, 64
    %v2351 = vpop.permute.xlu0 %2350
    %2353 = vst.msk [vmem:[#allocation4] sm:$0x3] %vm94, %v2351
    %v2354 = vld [vmem:[#allocation4] sm:$0x3]
    %v2355 = vld [vmem:[%s246] sm:$0xff]
    %v2356 = vld [vmem:[%s246 + $0x8] sm:$0xff]
    %v2357 = vld [vmem:[%s246 + $0x10] sm:$0xff]
    %v2358 = vld [vmem:[%s246 + $0x18] sm:$0xff]
    %v2359 = vld [vmem:[%s246 + $0x20] sm:$0xff]
    %v2360 = vld [vmem:[%s246 + $0x28] sm:$0xff]
    %v2361 = vld [vmem:[%s246 + $0x30] sm:$0xff]
    %v2362 = vld [vmem:[%s246 + $0x38] sm:$0xff]
    %v2363 = vld [vmem:[%s246 + $0x40] sm:$0xff]
    %v2364 = vld [vmem:[%s246 + $0x48] sm:$0xff]
    %v2365 = vld [vmem:[%s246 + $0x50] sm:$0xff]
    %v2366 = vld [vmem:[%s246 + $0x58] sm:$0xff]
    %v2367 = vld [vmem:[%s246 + $0x60] sm:$0xff]
    %v2368 = vld [vmem:[%s246 + $0x68] sm:$0xff]
    %v2369 = vld [vmem:[%s246 + $0x70] sm:$0xff]
    %v2370 = vld [vmem:[%s246 + $0x78] sm:$0xff]
    %v2371 = vld [vmem:[%s246 + $0x80] sm:$0xff]
    %v2372 = vld [vmem:[%s246 + $0x88] sm:$0xff]
    %v2373 = vld [vmem:[%s246 + $0x90] sm:$0xff]
    %v2374 = vld [vmem:[%s246 + $0x98] sm:$0xff]
    %v2375 = vld [vmem:[%s246 + $0xa0] sm:$0xff]
    %v2376 = vld [vmem:[%s246 + $0xa8] sm:$0xff]
    %v2377 = vld [vmem:[%s246 + $0xb0] sm:$0xff]
    %v2378 = vld [vmem:[%s246 + $0xb8] sm:$0xff]
    %v2379 = vld [vmem:[%s246 + $0xc0] sm:$0xff]
    %v2380 = vld [vmem:[%s246 + $0xc8] sm:$0xff]
    %v2381 = vld [vmem:[%s246 + $0xd0] sm:$0xff]
    %v2382 = vld [vmem:[%s246 + $0xd8] sm:$0xff]
    %v2383 = vld [vmem:[%s246 + $0xe0] sm:$0xff]
    %v2384 = vld [vmem:[%s246 + $0xe8] sm:$0xff]
    %v2385 = vld [vmem:[%s246 + $0xf0] sm:$0xff]
    %v2386 = vld [vmem:[%s246 + $0xf8] sm:$0xff]
    %v2387 = vld [vmem:[%s279] sm:$0x3]
    %v2389 = vlaneseq
    %v2390 = vshrl.u32 %v2389, 7
    %v2391 = vsub.s32 0, %v2390
    %v2392 = vrot.slane %v2387, %v2391
    %v2393 = vlaneseq
    %v2394 = vshrl.u32 %v2393, 7
    %v2395 = vsub.s32 1, %v2394
    %v2396 = vrot.slane %v2387, %v2395
    %2399 = vmatprep.subr.mxu0 %v2386
    %2400 = vmatpush1.msra.mxu0 %v2385
    %2401 = vmatprep.subr.mxu0 %v2384
    %2402 = vmatpush1.msra.mxu0 %v2383
    %2403 = vmatprep.subr.mxu0 %v2382
    %2404 = vmatpush1.msra.mxu0 %v2381
    %2405 = vmatprep.subr.mxu0 %v2380
    %2406 = vmatpush1.msra.mxu0 %v2379
    %2407 = vmatprep.subr.mxu0 %v2378
    %2408 = vmatpush1.msra.mxu0 %v2377
    %2409 = vmatprep.subr.mxu0 %v2376
    %2410 = vmatpush1.msra.mxu0 %v2375
    %2411 = vmatprep.subr.mxu0 %v2374
    %2412 = vmatpush1.msra.mxu0 %v2373
    %2413 = vmatprep.subr.mxu0 %v2372
    %2414 = vmatpush1.msra.mxu0 %v2371
    %2415 = vmatprep.subr.mxu0 %v2370
    %2416 = vmatpush1.msra.mxu0 %v2369
    %2417 = vmatprep.subr.mxu0 %v2368
    %2418 = vmatpush1.msra.mxu0 %v2367
    %2419 = vmatprep.subr.mxu0 %v2366
    %2420 = vmatpush1.msra.mxu0 %v2365
    %2421 = vmatprep.subr.mxu0 %v2364
    %2422 = vmatpush1.msra.mxu0 %v2363
    %2423 = vmatprep.subr.mxu0 %v2362
    %2424 = vmatpush1.msra.mxu0 %v2361
    %2425 = vmatprep.subr.mxu0 %v2360
    %2426 = vmatpush1.msra.mxu0 %v2359
    %2427 = vmatprep.subr.mxu0 %v2358
    %2428 = vmatpush1.msra.mxu0 %v2357
    %2429 = vmatprep.subr.mxu0 %v2356
    %2430 = vmatpush1.msra.mxu0 %v2355
    %2431 = vmatprep.subr.mxu0 0.0
    %2432 = vmatpush2.msra.mxu0 0.0
    %2433 = vmatprep.subr.mxu0 0.0
    %2434 = vmatpush2.msra.mxu0 0.0
    %2435 = vmatprep.subr.mxu0 0.0
    %2436 = vmatpush2.msra.mxu0 0.0
    %2437 = vmatprep.subr.mxu0 0.0
    %2438 = vmatpush2.msra.mxu0 0.0
    %2439 = vmatprep.subr.mxu0 0.0
    %2440 = vmatpush2.msra.mxu0 0.0
    %2441 = vmatprep.subr.mxu0 0.0
    %2442 = vmatpush2.msra.mxu0 0.0
    %2443 = vmatprep.subr.mxu0 0.0
    %2444 = vmatpush2.msra.mxu0 0.0
    %2445 = vmatprep.subr.mxu0 0.0
    %2446 = vmatpush2.msra.mxu0 0.0
    %2447 = vmatprep.subr.mxu0 0.0
    %2448 = vmatpush2.msra.mxu0 0.0
    %2449 = vmatprep.subr.mxu0 0.0
    %2450 = vmatpush2.msra.mxu0 0.0
    %2451 = vmatprep.subr.mxu0 0.0
    %2452 = vmatpush2.msra.mxu0 0.0
    %2453 = vmatprep.subr.mxu0 0.0
    %2454 = vmatpush2.msra.mxu0 0.0
    %2455 = vmatprep.subr.mxu0 0.0
    %2456 = vmatpush2.msra.mxu0 0.0
    %2457 = vmatprep.subr.mxu0 0.0
    %2458 = vmatpush2.msra.mxu0 0.0
    %2459 = vmatprep.subr.mxu0 0.0
    %2460 = vmatpush2.msra.mxu0 0.0
    %2461 = vmatprep.subr.mxu0 0.0
    %2462 = vmatpush2.msra.mxu0 0.0
    %2463 = vmatprep.mubr.f32.mxu0 0.0
    %2464 = vmatmul.mubr.f32.gmra.mxu0 %v2354
    %v2465 = vpop.f32.mrf.mxu0
    %v2466 = vadd.f32 %v2392, %v2465
    %v2467 = vpop.f32.mrf.mxu0
    %v2468 = vadd.f32 %v2396, %v2467
    %2469 = vdwg.mxu0
    %v2470 = vxor.u32 %v2466, 2147483648
    %v2471 = vxor.u32 %v2468, 2147483648
    %v2472 = vmul.f32 %v2470, 1.442695
    %v2473 = vpow.pop %v2472
    %v2474 = vmul.f32 %v2471, 1.442695
    %v2475 = vpow.pop %v2474
    %v2476 = vadd.f32 %v2473, 1.0
    %v2477 = vadd.f32 %v2475, 1.0
    %v2478 = vrcp.pop %v2476
    %v2479 = vmul.f32 1.0, %v2478
    %v2480 = vrcp.pop %v2477
    %v2481 = vmul.f32 1.0, %v2480
    %v2482 = vtanh.pop %v2468
    %v2483 = vld [vmem:[%s376] sm:$0x3]
    %v2484 = vmul.f32 %v2483, %v2479
    %v2485 = vmul.f32 %v2482, %v2479
    %2487 = vrot.lane.b32.xlu0 %v2485, 64
    %v2488 = vpop.permute.xlu0 %2487
    %v2490 = vadd.f32 %v2484, %v2488
    %v2491 = vtanh.pop %v2490
    %v2492 = vmul.f32 %v2491, %v2481
    %2493 = vst.msk [vmem:[%s238] sm:$0x3] %vm82, %v2492
    %2494 = vst.msk [vmem:[%s376] sm:$0x3] %vm82, %v2490
    %s2495 = scalar_lea.vmem [#allocation14], 14
    %2496 = vst.msk [vmem:[%s2495] sm:$0x3] %vm82, %v2492
    %v2497 = vadd.f32 %v2196, %v2198
    %v2498 = vld [vmem:[#allocation2] sm:$0x3]
    %v2499 = vld [vmem:[#allocation2 + $0x2] sm:$0x3]
    %2500 = vst.msk [vmem:[#allocation16] sm:$0x3] %vm82, %v2498
    %2501 = vst.msk [vmem:[#allocation16 + $0x2] sm:$0x3] %vm82, %v2499
    %v2502 = vld [vmem:[#allocation3] sm:$0x3]
    %v2503 = vld [vmem:[#allocation3 + $0x2] sm:$0x3]
    %2504 = vst.msk [vmem:[#allocation17] sm:$0x3] %vm82, %v2502
    %2505 = vst.msk [vmem:[#allocation17 + $0x2] sm:$0x3] %vm82, %v2503
    %v2506 = vmul.f32 %v2497, 0.125
    %v2507 = vld [vmem:[#allocation11] sm:$0xff]
    %v2508 = vld [vmem:[#allocation11 + $0x8] sm:$0xff]
    %v2509 = vld [vmem:[#allocation11 + $0x10] sm:$0xff]
    %v2510 = vld [vmem:[#allocation11 + $0x18] sm:$0xff]
    %v2511 = vld [vmem:[#allocation11 + $0x20] sm:$0xff]
    %v2512 = vld [vmem:[#allocation11 + $0x28] sm:$0xff]
    %v2513 = vld [vmem:[#allocation11 + $0x30] sm:$0xff]
    %v2514 = vld [vmem:[#allocation11 + $0x38] sm:$0xff]
    %v2515 = vld [vmem:[%s4] sm:$0x1]
    %v2517 = vlaneseq
    %v2518 = vshrl.u32 %v2517, 7
    %v2519 = vsub.s32 0, %v2518
    %v2520 = vrot.slane %v2515, %v2519
    %vm2522 = vcmask 523264
    %v2524 = vsel %vm2522, %v2506, 0
    %2526 = vmatprep.subr.mxu0 0.0
    %2527 = vmatpush1.msra.mxu0 0.0
    %2528 = vmatprep.subr.mxu0 0.0
    %2529 = vmatpush1.msra.mxu0 0.0
    %2530 = vmatprep.subr.mxu0 0.0
    %2531 = vmatpush1.msra.mxu0 0.0
    %2532 = vmatprep.subr.mxu0 0.0
    %2533 = vmatpush1.msra.mxu0 0.0
    %2534 = vmatprep.subr.mxu0 0.0
    %2535 = vmatpush1.msra.mxu0 0.0
    %2536 = vmatprep.subr.mxu0 0.0
    %2537 = vmatpush1.msra.mxu0 0.0
    %2538 = vmatprep.subr.mxu0 0.0
    %2539 = vmatpush1.msra.mxu0 0.0
    %2540 = vmatprep.subr.mxu0 0.0
    %2541 = vmatpush1.msra.mxu0 0.0
    %2542 = vmatprep.subr.mxu0 0.0
    %2543 = vmatpush1.msra.mxu0 %v2514
    %2544 = vmatprep.subr.mxu0 0.0
    %2545 = vmatpush1.msra.mxu0 %v2513
    %2546 = vmatprep.subr.mxu0 0.0
    %2547 = vmatpush1.msra.mxu0 %v2512
    %2548 = vmatprep.subr.mxu0 0.0
    %2549 = vmatpush1.msra.mxu0 %v2511
    %2550 = vmatprep.subr.mxu0 0.0
    %2551 = vmatpush1.msra.mxu0 %v2510
    %2552 = vmatprep.subr.mxu0 0.0
    %2553 = vmatpush1.msra.mxu0 %v2509
    %2554 = vmatprep.subr.mxu0 0.0
    %2555 = vmatpush1.msra.mxu0 %v2508
    %2556 = vmatprep.subr.mxu0 0.0
    %2557 = vmatpush1.msra.mxu0 %v2507
    %2558 = vmatprep.subr.mxu0 0.0
    %2559 = vmatpush2.msra.mxu0 0.0
    %2560 = vmatprep.subr.mxu0 0.0
    %2561 = vmatpush2.msra.mxu0 0.0
    %2562 = vmatprep.subr.mxu0 0.0
    %2563 = vmatpush2.msra.mxu0 0.0
    %2564 = vmatprep.subr.mxu0 0.0
    %2565 = vmatpush2.msra.mxu0 0.0
    %2566 = vmatprep.subr.mxu0 0.0
    %2567 = vmatpush2.msra.mxu0 0.0
    %2568 = vmatprep.subr.mxu0 0.0
    %2569 = vmatpush2.msra.mxu0 0.0
    %2570 = vmatprep.subr.mxu0 0.0
    %2571 = vmatpush2.msra.mxu0 0.0
    %2572 = vmatprep.subr.mxu0 0.0
    %2573 = vmatpush2.msra.mxu0 0.0
    %2574 = vmatprep.subr.mxu0 0.0
    %2575 = vmatpush2.msra.mxu0 0.0
    %2576 = vmatprep.subr.mxu0 0.0
    %2577 = vmatpush2.msra.mxu0 0.0
    %2578 = vmatprep.subr.mxu0 0.0
    %2579 = vmatpush2.msra.mxu0 0.0
    %2580 = vmatprep.subr.mxu0 0.0
    %2581 = vmatpush2.msra.mxu0 0.0
    %2582 = vmatprep.subr.mxu0 0.0
    %2583 = vmatpush2.msra.mxu0 0.0
    %2584 = vmatprep.subr.mxu0 0.0
    %2585 = vmatpush2.msra.mxu0 0.0
    %2586 = vmatprep.subr.mxu0 0.0
    %2587 = vmatpush2.msra.mxu0 0.0
    %2588 = vmatprep.subr.mxu0 0.0
    %2589 = vmatpush2.msra.mxu0 0.0
    %2590 = vmatprep.mubr.f32.mxu0 0.0
    %2591 = vmatmul.mubr.f32.gmra.mxu0 %v2524
    %v2592 = vpop.f32.mrf.mxu0
    %v2593 = vadd.f32 %v2520, %v2592
    %v2594 = vpop.f32.mrf.mxu0
    %2595 = vdwg.mxu0
    %2596 = vst [vmem:[#allocation13] sm:$0x3] %v2593
    // Predicated region
    $region38: #{tpu_custom_call.1} parent=1 // pred_check
      _
    $region39: #{tpu_custom_call.1} parent=1 // pred_check_branch
      %2598 = sbr.rel (0) target = $region41
    $region40: #{tpu_custom_call.1} parent=1 // pred_region
      %s2600 = ssub.s32 32, 32
      %2601 = vsyncadd [#allocation7], %s2600
      %s2603 = sshll.u32 [#allocation13], 4
      %s2604 = int_to_ptr.vmem [resolvable:$true] %s2603
      %2606 = dma.vmem_to_hbm [thread:$0]  %s2604, 32, %s5, [#allocation7]
    $region41: #{tpu_custom_call.1} parent=1 // pred_fallthru
      _
    // Predicated region
    $region42: #{tpu_custom_call.1} parent=1 // pred_check
      _
    $region43: #{tpu_custom_call.1} parent=1 // pred_check_branch
      %2608 = sbr.rel (0) target = $region45
    $region44: #{tpu_custom_call.1} parent=1 // pred_region
      %s2610 = ssub.s32 256, 256
      %2611 = vsyncadd [#allocation15], %s2610
      %s2612 = sshll.u32 [#allocation14], 4
      %s2613 = int_to_ptr.vmem [resolvable:$true] %s2612
      %2618 = dma.vmem_to_hbm [thread:$0]  %s2613, 256, %s6, [#allocation15], 32, 32, 2
    $region45: #{tpu_custom_call.1} parent=1 // pred_fallthru
      _
    // Predicated region
    $region46: #{tpu_custom_call.1} parent=1 // pred_check
      _
    $region47: #{tpu_custom_call.1} parent=1 // pred_check_branch
      %2620 = sbr.rel (0) target = $region49
    $region48: #{tpu_custom_call.1} parent=1 // pred_region
      %s2622 = ssub.s32 64, 64
      %2623 = vsyncadd [#allocation15], %s2622
      %s2624 = sshll.u32 [#allocation16], 4
      %s2625 = int_to_ptr.vmem [resolvable:$true] %s2624
      %2630 = dma.vmem_to_hbm [thread:$0]  %s2625, 64, %s7, [#allocation15], 32, 32, 2
    $region49: #{tpu_custom_call.1} parent=1 // pred_fallthru
      _
    // Predicated region
    $region50: #{tpu_custom_call.1} parent=1 // pred_check
      _
    $region51: #{tpu_custom_call.1} parent=1 // pred_check_branch
      %2632 = sbr.rel (0) target = $region53
    $region52: #{tpu_custom_call.1} parent=1 // pred_region
      %s2634 = ssub.s32 64, 64
      %2635 = vsyncadd [#allocation18], %s2634
      %s2636 = sshll.u32 [#allocation17], 4
      %s2637 = int_to_ptr.vmem [resolvable:$true] %s2636
      %2642 = dma.vmem_to_hbm [thread:$0]  %s2637, 64, %s8, [#allocation18], 32, 32, 2
    $region53: #{tpu_custom_call.1} parent=1 // pred_fallthru
      _
    // Predicated region
    $region54: #{tpu_custom_call.1} parent=1 // pred_check
      _
    $region55: #{tpu_custom_call.1} parent=1 // pred_check_branch
      %2644 = sbr.rel (0) target = $region57
    $region56: #{tpu_custom_call.1} parent=1 // pred_region
      %2645 = dma.done [#allocation7], 32
    $region57: #{tpu_custom_call.1} parent=1 // pred_fallthru
      _
    // Predicated region
    $region58: #{tpu_custom_call.1} parent=1 // pred_check
      _
    $region59: #{tpu_custom_call.1} parent=1 // pred_check_branch
      %2647 = sbr.rel (0) target = $region61
    $region60: #{tpu_custom_call.1} parent=1 // pred_region
      %2648 = dma.done [#allocation15], 256
    $region61: #{tpu_custom_call.1} parent=1 // pred_fallthru
      _
    // Predicated region
    $region62: #{tpu_custom_call.1} parent=1 // pred_check
      _
    $region63: #{tpu_custom_call.1} parent=1 // pred_check_branch
      %2650 = sbr.rel (0) target = $region65
    $region64: #{tpu_custom_call.1} parent=1 // pred_region
      %2651 = dma.done [#allocation15], 64
    $region65: #{tpu_custom_call.1} parent=1 // pred_fallthru
      _
    // Predicated region
    $region66: #{tpu_custom_call.1} parent=1 // pred_check
      _
    $region67: #{tpu_custom_call.1} parent=1 // pred_check_branch
      %2653 = sbr.rel (0) target = $region69
    $region68: #{tpu_custom_call.1} parent=1 // pred_region
      %2654 = dma.done [#allocation18], 64
    $region69: #{tpu_custom_call.1} parent=1 // pred_fallthru
      _
    %2655 = vsyncpa [#allocation6], 1
    %2656 = vsyncpa [#allocation9], 1
    %2657 = vsyncpa [#allocation12], 1
    %2658 = vsyncpa [#allocation7], 1
    %2659 = vsyncpa [#allocation15], 1
    %2660 = vsyncpa [#allocation18], 1

</llo_original>
